<compile_context>
chip_gen: v5e
topology: v5e:2x2
jax: 0.10.0
libtpu: 0.0.40
codegen_flags: <defaults>
</compile_context>

<pallas_src>
import functools
import math

import jax
import jax.numpy as jnp
from jax.experimental import pallas as pl
from jax.experimental.pallas import tpu as pltpu


# ----------------------------- in-kernel helpers -----------------------------


def _layernorm(x, gamma, beta, eps=1e-5):
    # PyTorch nn.LayerNorm: biased variance, eps inside sqrt.
    mu = jnp.mean(x, axis=-1, keepdims=True)
    var = jnp.mean((x - mu) ** 2, axis=-1, keepdims=True)
    return (x - mu) * jax.lax.rsqrt(var + eps) * gamma + beta


def _block_diag_bias(n, group):
    """(n, n) additive mask: 0 inside contiguous diagonal blocks of size
    `group`, -1e30 elsewhere.  Built from iota comparisons only (VPU ops,
    no vector integer division)."""
    r = jax.lax.broadcasted_iota(jnp.int32, (n, n), 0)
    c = jax.lax.broadcasted_iota(jnp.int32, (n, n), 1)
    same = None
    for b in range(n // group):
        lo, hi = b * group, (b + 1) * group
        blk = (r >= lo) & (r < hi) & (c >= lo) & (c < hi)
        same = blk if same is None else (same | blk)
    return jnp.where(same, 0.0, -1e30).astype(jnp.float32)


def _attention(x, aw, b_qkv, bo, nhead, cd, bias):
    """Multi-head self-attention on an (L, D) f32 slab.

    aw    : (D, 4D) = [Wq*scale | Wk | Wv | Wo]    (compute dtype)
    b_qkv : (1, 3D) f32 (q part pre-scaled)
    bo    : (1, D)  f32 output-projection bias
    bias  : optional (L, L) f32 additive mask (block-diagonal attention)
    """
    L, D = x.shape
    hd = D // nhead
    w_qkv = aw[:, :3 * D]
    wo = aw[:, 3 * D:]

    # Fused QKV projection (one MXU matmul), f32 accumulation.
    qkv = jnp.dot(x.astype(cd), w_qkv, preferred_element_type=jnp.float32) + b_qkv

    acc = jnp.broadcast_to(bo, (L, D))  # start from output-projection bias
    # nhead is small & static -> unrolled.  Per-head matmuls kept: the kernel
    # is overhead-bound at hd=8 and head-stacking would itself need a relayout.
    for h in range(nhead):
        q_h = qkv[:, h * hd:(h + 1) * hd]              # scale already folded in
        k_h = qkv[:, D + h * hd: D + (h + 1) * hd]
        v_h = qkv[:, 2 * D + h * hd: 2 * D + (h + 1) * hd]

        # scores = q_h @ k_h^T (contract last dims, no explicit transpose)
        s = jax.lax.dot_general(q_h.astype(cd), k_h.astype(cd),
                                (((1,), (1,)), ((), ())),
                                preferred_element_type=jnp.float32)
        if bias is not None:
            s = s + bias
        s = s - jnp.max(s, axis=-1, keepdims=True)
        p = jnp.exp(s)
        p = p / jnp.sum(p, axis=-1, keepdims=True)      # exact normalization

        o_h = jnp.dot(p.astype(cd), v_h.astype(cd),
                      preferred_element_type=jnp.float32)            # (L, hd)
        acc = acc + jnp.dot(o_h.astype(cd), wo[h * hd:(h + 1) * hd, :],
                            preferred_element_type=jnp.float32)      # (L, D)
    return acc


def _ffn_block(t, mix, w1, b1, w2, b2, g2, be2, g3, be3, cd):
    """FFN block: residual + LN + (Linear-ReLU-Linear) + residual + LN."""
    t = t + mix
    t = _layernorm(t, g2, be2)
    h = jnp.maximum(
        jnp.dot(t.astype(cd), w1, preferred_element_type=jnp.float32) + b1, 0.0)
    t2 = jnp.dot(h.astype(cd), w2, preferred_element_type=jnp.float32) + b2
    return _layernorm(t + t2, g3, be3)


# ----------------------------- fused kernel ----------------------------------


def _fused_layer_kernel(nhead, candi, seq_len, cd,
                        x_ref, aw_ref, w1_ref, w2_ref, sm_ref, o_ref):
    """One grid step: global MHA -> FFN1 -> local MHA (masked) -> FFN2 on a
    (rows, D) slab where rows = batch_per_block * num_track * candi."""
    n, d = x_ref.shape
    dff = w1_ref.shape[2]

    x = x_ref[...].astype(jnp.float32)     # activation slab, resident all layer
    sm = sm_ref[...]                       # (16, W) f32 small-parameter slab

    # In-kernel masks (no HBM mask input).
    g_bias = _block_diag_bias(n, seq_len) if n > seq_len else None   # per batch
    l_bias = _block_diag_bias(n, candi)                              # per track

    # small-slab rows:
    #  0: global b_qkv   1: local b_qkv   2: ffn1 b1     3: ffn2 b1
    #  4: global bo      5: local bo
    #  6-10 : ffn1 b2, g2, be2, g3, be3     11-15: ffn2 b2, g2, be2, g3, be3
    def row(i, w):
        return sm[i:i + 1, :w]

    # ---- global stage ----
    mix = _attention(x, aw_ref[0], row(0, 3 * d), row(4, d), nhead, cd, g_bias)
    x = _ffn_block(x, mix, w1_ref[0], row(2, dff), w2_ref[0], row(6, d),
                   row(7, d), row(8, d), row(9, d), row(10, d), cd)

    # ---- local stage (attention restricted to each track's candidates) ----
    mix = _attention(x, aw_ref[1], row(1, 3 * d), row(5, d), nhead, cd, l_bias)
    x = _ffn_block(x, mix, w1_ref[1], row(3, dff), w2_ref[1], row(11, d),
                   row(12, d), row(13, d), row(14, d), row(15, d), cd)

    o_ref[...] = x.astype(o_ref.dtype)


# ----------------------------- wrapper ----------------------------------------


def transformer_encoder_layer_global_local(src, params, nhead, *,
                                           compute_dtype=jnp.float32,
                                           num_blocks=None):
    """src: (bs, num_track, candi, d_model) -> same shape."""
    bs, num_track, candi, d = src.shape
    L = num_track * candi

    # Each grid step folds bs // num_blocks batch elements into the matmul M
    # dimension.  Default: 2 "parallel" steps when bs is even (keeps both v7x
    # TensorCores busy; ~one extra 0.35us step on single-core v5e/v6e), else 1
    # fully fused step.
    if num_blocks is None:
        num_blocks = 2 if (bs % 2 == 0 and bs >= 2) else 1
    assert bs % num_blocks == 0
    rows = (bs // num_blocks) * L

    x = src.reshape(bs * L, d)

    scale = 1.0 / math.sqrt(d // nhead)

    def attn_w_slab(p):
        wq, wk, wv, bq, bk, bv, wo, bo = p
        # [Wq*scale | Wk | Wv | Wo] : attention scale folded into Wq.
        return jnp.concatenate([wq * scale, wk, wv, wo], axis=1)      # (d, 4d)

    def attn_b_row(p):
        wq, wk, wv, bq, bk, bv, wo, bo = p
        return jnp.concatenate([bq * scale, bk, bv], axis=1).reshape(-1)  # (3d,)

    gp, lp = params["global_attn"], params["local_attn"]
    f1, f2 = params["ffn1"], params["ffn2"]
    dff = f1[0].shape[1]

    # ---- parameter packing: 24 arrays -> 4 lane-dense slabs ----
    attn_w = jnp.stack([attn_w_slab(gp), attn_w_slab(lp)]).astype(compute_dtype)
    ffn_w1 = jnp.stack([f1[0], f2[0]]).astype(compute_dtype)          # (2, d, dff)
    ffn_w2 = jnp.stack([f1[2], f2[2]]).astype(compute_dtype)          # (2, dff, d)

    W = max(3 * d, dff)

    def pad_row(v):
        v = jnp.reshape(v, (-1,)).astype(jnp.float32)
        return jnp.pad(v, (0, W - v.shape[0]))

    small = jnp.stack([pad_row(r) for r in (
        attn_b_row(gp), attn_b_row(lp),                 # 0, 1  : qkv biases
        f1[1], f2[1],                                   # 2, 3  : linear1 biases
        gp[7], lp[7],                                   # 4, 5  : out-proj biases
        f1[3], f1[4], f1[5], f1[6], f1[7],              # 6-10  : ffn1 b2,g2,be2,g3,be3
        f2[3], f2[4], f2[5], f2[6], f2[7],              # 11-15 : ffn2 b2,g2,be2,g3,be3
    )])                                                 # (16, W) f32

    seq_spec = pl.BlockSpec((rows, d), lambda i: (i, 0))

    def const(a):
        return pl.BlockSpec(a.shape, lambda i: (0,) * a.ndim)

    out = pl.pallas_call(
        functools.partial(_fused_layer_kernel, nhead, candi, L, compute_dtype),
        out_shape=jax.ShapeDtypeStruct((bs * L, d), src.dtype),
        grid=(num_blocks,),
        in_specs=[seq_spec, const(attn_w), const(ffn_w1), const(ffn_w2),
                  const(small)],
        out_specs=seq_spec,
        compiler_params=pltpu.CompilerParams(
            dimension_semantics=("parallel",)),
    )(x, attn_w, ffn_w1, ffn_w2, small)

    return out.reshape(bs, num_track, candi, d)


# ----------------------------- reference (pure JAX) ---------------------------


def _mha_ref(x, params, nhead):
    wq, wk, wv, bq, bk, bv, wo, bo = params
    B, L, D = x.shape
    hd = D // nhead
    scale = 1.0 / math.sqrt(hd)
    q = x @ wq + bq
    k = x @ wk + bk
    v = x @ wv + bv
    q = q.reshape(B, L, nhead, hd).transpose(0, 2, 1, 3)
    k = k.reshape(B, L, nhead, hd).transpose(0, 2, 1, 3)
    v = v.reshape(B, L, nhead, hd).transpose(0, 2, 1, 3)
    s = jnp.einsum("bhqd,bhkd->bhqk", q * scale, k)
    p = jax.nn.softmax(s, axis=-1)
    o = jnp.einsum("bhqk,bhkd->bhqd", p, v)
    o = o.transpose(0, 2, 1, 3).reshape(B, L, D)
    return o @ wo + bo


def _ffn_ref(tgt, attn_out, params):
    w1, b1, w2, b2, g2, be2, g3, be3 = params
    t = tgt + attn_out
    t = _layernorm(t, g2, be2)
    t2 = jnp.maximum(t @ w1 + b1, 0.0) @ w2 + b2
    return _layernorm(t + t2, g3, be3)


def _layer_ref(src, params, nhead):
    bs, num_track, candi, d = src.shape
    sg = src.reshape(bs, num_track * candi, d)
    sg = _ffn_ref(sg, _mha_ref(sg, params["global_attn"], nhead), params["ffn1"])
    sl = sg.reshape(bs * num_track, candi, d)
    sl = _ffn_ref(sl, _mha_ref(sl, params["local_attn"], nhead), params["ffn2"])
    return sl.reshape(bs, num_track, candi, d)


# ----------------------------- parameter init ---------------------------------


def init_params(key, d_model, dim_feedforward):
    def mha_params(k):
        ks = jax.random.split(k, 8)
        return (
            0.05 * jax.random.normal(ks[0], (d_model, d_model), jnp.float32),
            0.05 * jax.random.normal(ks[1], (d_model, d_model), jnp.float32),
            0.05 * jax.random.normal(ks[2], (d_model, d_model), jnp.float32),
            0.01 * jax.random.normal(ks[3], (1, d_model), jnp.float32),
            0.01 * jax.random.normal(ks[4], (1, d_model), jnp.float32),
            0.01 * jax.random.normal(ks[5], (1, d_model), jnp.float32),
            0.05 * jax.random.normal(ks[6], (d_model, d_model), jnp.float32),
            0.01 * jax.random.normal(ks[7], (1, d_model), jnp.float32),
        )

    def ffn_params(k):
        ks = jax.random.split(k, 4)
        return (
            0.05 * jax.random.normal(ks[0], (d_model, dim_feedforward), jnp.float32),
            0.01 * jax.random.normal(ks[1], (1, dim_feedforward), jnp.float32),
            0.05 * jax.random.normal(ks[2], (dim_feedforward, d_model), jnp.float32),
            0.01 * jax.random.normal(ks[3], (1, d_model), jnp.float32),
            jnp.ones((1, d_model), jnp.float32),   # norm2 weight
            jnp.zeros((1, d_model), jnp.float32),  # norm2 bias
            jnp.ones((1, d_model), jnp.float32),   # norm3 weight
            jnp.zeros((1, d_model), jnp.float32),  # norm3 bias
        )

    k1, k2, k3, k4 = jax.random.split(key, 4)
    return {
        "global_attn": mha_params(k1),
        "local_attn": mha_params(k2),
        "ffn1": ffn_params(k3),
        "ffn2": ffn_params(k4),
    }


# ----------------------------- main --------------------------------------------


if __name__ == "__main__":
    bs, num_track, candi = 2, 4, 8
    d_model, nhead, dim_feedforward = 32, 4, 64

    key = jax.random.PRNGKey(0)
    k_src, k_par = jax.random.split(key)
    src = jax.random.normal(k_src, (bs, num_track, candi, d_model), jnp.float32)
    params = init_params(k_par, d_model, dim_feedforward)

    ref = _layer_ref(src, params, nhead)

    # 1) f32 path, default blocking (2 "parallel" steps -> both v7x cores;
    #    exercises the batch-block-diagonal global mask is skipped per block).
    fwd = jax.jit(functools.partial(transformer_encoder_layer_global_local,
                                    nhead=nhead))
    out = jax.block_until_ready(fwd(src, params))
    assert out.shape == (bs, num_track, candi, d_model)
    # Exact softmax normalization -> remaining diffs are MXU-vs-XLA f32 matmul
    # pass differences only.
    assert jnp.allclose(out, ref, atol=3e-3, rtol=3e-3), (
        "f32 (2-block) mismatch: max |diff| = "
        f"{float(jnp.max(jnp.abs(out - ref)))}")

    # 2) f32 path, single fully-fused step: whole (bs*L, D) slab in one grid
    #    step with an in-kernel per-batch block-diagonal global mask.
    fwd1 = jax.jit(functools.partial(transformer_encoder_layer_global_local,
                                     nhead=nhead, num_blocks=1))
    out1 = jax.block_until_ready(fwd1(src, params))
    assert jnp.allclose(out1, ref, atol=3e-3, rtol=3e-3), (
        "f32 (1-block) mismatch: max |diff| = "
        f"{float(jnp.max(jnp.abs(out1 - ref)))}")

    # 3) bf16 MXU operands (f32 accumulation, f32 softmax / LayerNorm) - the
    #    recommended deployment dtype; parity vs the f32 reference is looser.
    fwd_bf16 = jax.jit(functools.partial(transformer_encoder_layer_global_local,
                                         nhead=nhead,
                                         compute_dtype=jnp.bfloat16))
    out_b = jax.block_until_ready(fwd_bf16(src, params))
    assert jnp.allclose(out_b, ref, atol=5e-2, rtol=5e-2), (
        "bf16 sanity mismatch: max |diff| = "
        f"{float(jnp.max(jnp.abs(out_b - ref)))}")

    print("KERNEL_OK")
</pallas_src>

<mosaic_0001>
module attributes {stable_mosaic.version = 11 : i64} {
  func.func @_fused_layer_kernel(%arg0: i32, %arg1: memref<32x32xf32, #tpu.memory_space<vmem>>, %arg2: memref<2x32x128xf32, #tpu.memory_space<vmem>>, %arg3: memref<2x32x64xf32, #tpu.memory_space<vmem>>, %arg4: memref<2x64x32xf32, #tpu.memory_space<vmem>>, %arg5: memref<16x96xf32, #tpu.memory_space<vmem>>, %arg6: memref<32x32xf32, #tpu.memory_space<vmem>>) attributes {dimension_semantics = [#tpu.dimension_semantics<parallel>], iteration_bounds = array<i64: 2>, scalar_prefetch = 0 : i64, scratch_operands = 0 : i64, tpu.core_type = #tpu.core_type<tc>, window_params = [{transform_indices = @transform_0, window_bounds = array<i64: 32, 32>}, {pipeline_mode = #tpu.pipeline_mode<synchronous>, transform_indices = @transform_1, window_bounds = array<i64: 2, 32, 128>}, {pipeline_mode = #tpu.pipeline_mode<synchronous>, transform_indices = @transform_2, window_bounds = array<i64: 2, 32, 64>}, {pipeline_mode = #tpu.pipeline_mode<synchronous>, transform_indices = @transform_3, window_bounds = array<i64: 2, 64, 32>}, {pipeline_mode = #tpu.pipeline_mode<synchronous>, transform_indices = @transform_4, window_bounds = array<i64: 16, 96>}, {transform_indices = @transform_5, window_bounds = array<i64: 32, 32>}]} {
    %c0 = arith.constant 0 : index
    %c0_0 = arith.constant 0 : index
    %0 = vector.load %arg1[%c0, %c0_0] : memref<32x32xf32, #tpu.memory_space<vmem>>, vector<32x32xf32>
    %c0_1 = arith.constant 0 : index
    %c0_2 = arith.constant 0 : index
    %1 = vector.load %arg5[%c0_1, %c0_2] : memref<16x96xf32, #tpu.memory_space<vmem>>, vector<16x96xf32>
    %2 = tpu.iota {dimensions = array<i32: 0>} : vector<32x32xi32>
    %3 = tpu.iota {dimensions = array<i32: 1>} : vector<32x32xi32>
    %c0_i32 = arith.constant 0 : i32
    %4 = vector.broadcast %c0_i32 : i32 to vector<32x32xi32>
    %5 = arith.cmpi sge, %2, %4 : vector<32x32xi32>
    %c8_i32 = arith.constant 8 : i32
    %6 = vector.broadcast %c8_i32 : i32 to vector<32x32xi32>
    %7 = arith.cmpi slt, %2, %6 : vector<32x32xi32>
    %8 = arith.andi %5, %7 : vector<32x32xi1>
    %c0_i32_3 = arith.constant 0 : i32
    %9 = vector.broadcast %c0_i32_3 : i32 to vector<32x32xi32>
    %10 = arith.cmpi sge, %3, %9 : vector<32x32xi32>
    %11 = arith.andi %8, %10 : vector<32x32xi1>
    %c8_i32_4 = arith.constant 8 : i32
    %12 = vector.broadcast %c8_i32_4 : i32 to vector<32x32xi32>
    %13 = arith.cmpi slt, %3, %12 : vector<32x32xi32>
    %14 = arith.andi %11, %13 : vector<32x32xi1>
    %c8_i32_5 = arith.constant 8 : i32
    %15 = vector.broadcast %c8_i32_5 : i32 to vector<32x32xi32>
    %16 = arith.cmpi sge, %2, %15 : vector<32x32xi32>
    %c16_i32 = arith.constant 16 : i32
    %17 = vector.broadcast %c16_i32 : i32 to vector<32x32xi32>
    %18 = arith.cmpi slt, %2, %17 : vector<32x32xi32>
    %19 = arith.andi %16, %18 : vector<32x32xi1>
    %c8_i32_6 = arith.constant 8 : i32
    %20 = vector.broadcast %c8_i32_6 : i32 to vector<32x32xi32>
    %21 = arith.cmpi sge, %3, %20 : vector<32x32xi32>
    %22 = arith.andi %19, %21 : vector<32x32xi1>
    %c16_i32_7 = arith.constant 16 : i32
    %23 = vector.broadcast %c16_i32_7 : i32 to vector<32x32xi32>
    %24 = arith.cmpi slt, %3, %23 : vector<32x32xi32>
    %25 = arith.andi %22, %24 : vector<32x32xi1>
    %26 = arith.ori %14, %25 : vector<32x32xi1>
    %c16_i32_8 = arith.constant 16 : i32
    %27 = vector.broadcast %c16_i32_8 : i32 to vector<32x32xi32>
    %28 = arith.cmpi sge, %2, %27 : vector<32x32xi32>
    %c24_i32 = arith.constant 24 : i32
    %29 = vector.broadcast %c24_i32 : i32 to vector<32x32xi32>
    %30 = arith.cmpi slt, %2, %29 : vector<32x32xi32>
    %31 = arith.andi %28, %30 : vector<32x32xi1>
    %c16_i32_9 = arith.constant 16 : i32
    %32 = vector.broadcast %c16_i32_9 : i32 to vector<32x32xi32>
    %33 = arith.cmpi sge, %3, %32 : vector<32x32xi32>
    %34 = arith.andi %31, %33 : vector<32x32xi1>
    %c24_i32_10 = arith.constant 24 : i32
    %35 = vector.broadcast %c24_i32_10 : i32 to vector<32x32xi32>
    %36 = arith.cmpi slt, %3, %35 : vector<32x32xi32>
    %37 = arith.andi %34, %36 : vector<32x32xi1>
    %38 = arith.ori %26, %37 : vector<32x32xi1>
    %c24_i32_11 = arith.constant 24 : i32
    %39 = vector.broadcast %c24_i32_11 : i32 to vector<32x32xi32>
    %40 = arith.cmpi sge, %2, %39 : vector<32x32xi32>
    %c32_i32 = arith.constant 32 : i32
    %41 = vector.broadcast %c32_i32 : i32 to vector<32x32xi32>
    %42 = arith.cmpi slt, %2, %41 : vector<32x32xi32>
    %43 = arith.andi %40, %42 : vector<32x32xi1>
    %c24_i32_12 = arith.constant 24 : i32
    %44 = vector.broadcast %c24_i32_12 : i32 to vector<32x32xi32>
    %45 = arith.cmpi sge, %3, %44 : vector<32x32xi32>
    %46 = arith.andi %43, %45 : vector<32x32xi1>
    %c32_i32_13 = arith.constant 32 : i32
    %47 = vector.broadcast %c32_i32_13 : i32 to vector<32x32xi32>
    %48 = arith.cmpi slt, %3, %47 : vector<32x32xi32>
    %49 = arith.andi %46, %48 : vector<32x32xi1>
    %50 = arith.ori %38, %49 : vector<32x32xi1>
    %cst = arith.constant 0.000000e+00 : f32
    %cst_14 = arith.constant -1.000000e+30 : f32
    %51 = vector.broadcast %cst : f32 to vector<32x32xf32>
    %52 = vector.broadcast %cst_14 : f32 to vector<32x32xf32>
    %53 = arith.select %50, %51, %52 : vector<32x32xi1>, vector<32x32xf32>
    %c0_15 = arith.constant 0 : index
    %c0_16 = arith.constant 0 : index
    %c0_17 = arith.constant 0 : index
    %54 = vector.load %arg2[%c0_15, %c0_16, %c0_17] : memref<2x32x128xf32, #tpu.memory_space<vmem>>, vector<1x32x128xf32>
    %55 = vector.shape_cast %54 : vector<1x32x128xf32> to vector<32x128xf32>
    %56 = vector.extract_strided_slice %1 {offsets = [0, 0], sizes = [1, 96], strides = [1, 1]} : vector<16x96xf32> to vector<1x96xf32>
    %57 = vector.extract_strided_slice %1 {offsets = [4, 0], sizes = [1, 32], strides = [1, 1]} : vector<16x96xf32> to vector<1x32xf32>
    %58 = vector.extract_strided_slice %55 {offsets = [0, 0], sizes = [32, 96], strides = [1, 1]} : vector<32x128xf32> to vector<32x96xf32>
    %59 = vector.extract_strided_slice %55 {offsets = [0, 96], sizes = [32, 32], strides = [1, 1]} : vector<32x128xf32> to vector<32x32xf32>
    %cst_18 = arith.constant dense<0.000000e+00> : vector<32x96xf32>
    %60 = tpu.matmul %0, %58, %cst_18 {dimension_numbers = #tpu.dot_dimension_numbers<[1], [0], [0], [1], [0, 0, 1, 1], [], []>} : vector<32x32xf32>, vector<32x96xf32>, vector<32x96xf32> -> vector<32x96xf32>
    %61 = vector.broadcast %56 : vector<1x96xf32> to vector<32x96xf32>
    %62 = arith.addf %60, %61 : vector<32x96xf32>
    %63 = vector.shape_cast %57 : vector<1x32xf32> to vector<1x32xf32>
    %64 = vector.broadcast %63 : vector<1x32xf32> to vector<32x32xf32>
    %65 = vector.extract_strided_slice %62 {offsets = [0, 0], sizes = [32, 8], strides = [1, 1]} : vector<32x96xf32> to vector<32x8xf32>
    %66 = vector.extract_strided_slice %62 {offsets = [0, 32], sizes = [32, 8], strides = [1, 1]} : vector<32x96xf32> to vector<32x8xf32>
    %67 = vector.extract_strided_slice %62 {offsets = [0, 64], sizes = [32, 8], strides = [1, 1]} : vector<32x96xf32> to vector<32x8xf32>
    %cst_19 = arith.constant dense<0.000000e+00> : vector<32x32xf32>
    %68 = tpu.matmul %65, %66, %cst_19 {dimension_numbers = #tpu.dot_dimension_numbers<[1], [1], [0], [0], [0, 0, 1, 0], [], []>} : vector<32x8xf32>, vector<32x8xf32>, vector<32x32xf32> -> vector<32x32xf32>
    %cst_20 = arith.constant dense<0xFF800000> : vector<32xf32>
    %69 = vector.multi_reduction <maximumf>, %68, %cst_20 [1] : vector<32x32xf32> to vector<32xf32>
    %70 = vector.shape_cast %69 : vector<32xf32> to vector<32x1xf32>
    %71 = vector.broadcast %70 : vector<32x1xf32> to vector<32x32xf32>
    %72 = arith.subf %68, %71 : vector<32x32xf32>
    %73 = math.exp %72 : vector<32x32xf32>
    %cst_21 = arith.constant dense<0.000000e+00> : vector<32xf32>
    %74 = vector.multi_reduction <add>, %73, %cst_21 [1] : vector<32x32xf32> to vector<32xf32>
    %75 = vector.shape_cast %74 : vector<32xf32> to vector<32x1xf32>
    %76 = vector.broadcast %75 : vector<32x1xf32> to vector<32x32xf32>
    %77 = arith.divf %73, %76 : vector<32x32xf32>
    %cst_22 = arith.constant dense<0.000000e+00> : vector<32x8xf32>
    %78 = tpu.matmul %77, %67, %cst_22 {dimension_numbers = #tpu.dot_dimension_numbers<[1], [0], [0], [1], [0, 0, 1, 1], [], []>} : vector<32x32xf32>, vector<32x8xf32>, vector<32x8xf32> -> vector<32x8xf32>
    %79 = vector.extract_strided_slice %59 {offsets = [0, 0], sizes = [8, 32], strides = [1, 1]} : vector<32x32xf32> to vector<8x32xf32>
    %cst_23 = arith.constant dense<0.000000e+00> : vector<32x32xf32>
    %80 = tpu.matmul %78, %79, %cst_23 {dimension_numbers = #tpu.dot_dimension_numbers<[1], [0], [0], [1], [0, 0, 1, 1], [], []>} : vector<32x8xf32>, vector<8x32xf32>, vector<32x32xf32> -> vector<32x32xf32>
    %81 = arith.addf %64, %80 : vector<32x32xf32>
    %82 = vector.extract_strided_slice %62 {offsets = [0, 8], sizes = [32, 8], strides = [1, 1]} : vector<32x96xf32> to vector<32x8xf32>
    %83 = vector.extract_strided_slice %62 {offsets = [0, 40], sizes = [32, 8], strides = [1, 1]} : vector<32x96xf32> to vector<32x8xf32>
    %84 = vector.extract_strided_slice %62 {offsets = [0, 72], sizes = [32, 8], strides = [1, 1]} : vector<32x96xf32> to vector<32x8xf32>
    %cst_24 = arith.constant dense<0.000000e+00> : vector<32x32xf32>
    %85 = tpu.matmul %82, %83, %cst_24 {dimension_numbers = #tpu.dot_dimension_numbers<[1], [1], [0], [0], [0, 0, 1, 0], [], []>} : vector<32x8xf32>, vector<32x8xf32>, vector<32x32xf32> -> vector<32x32xf32>
    %cst_25 = arith.constant dense<0xFF800000> : vector<32xf32>
    %86 = vector.multi_reduction <maximumf>, %85, %cst_25 [1] : vector<32x32xf32> to vector<32xf32>
    %87 = vector.shape_cast %86 : vector<32xf32> to vector<32x1xf32>
    %88 = vector.broadcast %87 : vector<32x1xf32> to vector<32x32xf32>
    %89 = arith.subf %85, %88 : vector<32x32xf32>
    %90 = math.exp %89 : vector<32x32xf32>
    %cst_26 = arith.constant dense<0.000000e+00> : vector<32xf32>
    %91 = vector.multi_reduction <add>, %90, %cst_26 [1] : vector<32x32xf32> to vector<32xf32>
    %92 = vector.shape_cast %91 : vector<32xf32> to vector<32x1xf32>
    %93 = vector.broadcast %92 : vector<32x1xf32> to vector<32x32xf32>
    %94 = arith.divf %90, %93 : vector<32x32xf32>
    %cst_27 = arith.constant dense<0.000000e+00> : vector<32x8xf32>
    %95 = tpu.matmul %94, %84, %cst_27 {dimension_numbers = #tpu.dot_dimension_numbers<[1], [0], [0], [1], [0, 0, 1, 1], [], []>} : vector<32x32xf32>, vector<32x8xf32>, vector<32x8xf32> -> vector<32x8xf32>
    %96 = vector.extract_strided_slice %59 {offsets = [8, 0], sizes = [8, 32], strides = [1, 1]} : vector<32x32xf32> to vector<8x32xf32>
    %cst_28 = arith.constant dense<0.000000e+00> : vector<32x32xf32>
    %97 = tpu.matmul %95, %96, %cst_28 {dimension_numbers = #tpu.dot_dimension_numbers<[1], [0], [0], [1], [0, 0, 1, 1], [], []>} : vector<32x8xf32>, vector<8x32xf32>, vector<32x32xf32> -> vector<32x32xf32>
    %98 = arith.addf %81, %97 : vector<32x32xf32>
    %99 = vector.extract_strided_slice %62 {offsets = [0, 16], sizes = [32, 8], strides = [1, 1]} : vector<32x96xf32> to vector<32x8xf32>
    %100 = vector.extract_strided_slice %62 {offsets = [0, 48], sizes = [32, 8], strides = [1, 1]} : vector<32x96xf32> to vector<32x8xf32>
    %101 = vector.extract_strided_slice %62 {offsets = [0, 80], sizes = [32, 8], strides = [1, 1]} : vector<32x96xf32> to vector<32x8xf32>
    %cst_29 = arith.constant dense<0.000000e+00> : vector<32x32xf32>
    %102 = tpu.matmul %99, %100, %cst_29 {dimension_numbers = #tpu.dot_dimension_numbers<[1], [1], [0], [0], [0, 0, 1, 0], [], []>} : vector<32x8xf32>, vector<32x8xf32>, vector<32x32xf32> -> vector<32x32xf32>
    %cst_30 = arith.constant dense<0xFF800000> : vector<32xf32>
    %103 = vector.multi_reduction <maximumf>, %102, %cst_30 [1] : vector<32x32xf32> to vector<32xf32>
    %104 = vector.shape_cast %103 : vector<32xf32> to vector<32x1xf32>
    %105 = vector.broadcast %104 : vector<32x1xf32> to vector<32x32xf32>
    %106 = arith.subf %102, %105 : vector<32x32xf32>
    %107 = math.exp %106 : vector<32x32xf32>
    %cst_31 = arith.constant dense<0.000000e+00> : vector<32xf32>
    %108 = vector.multi_reduction <add>, %107, %cst_31 [1] : vector<32x32xf32> to vector<32xf32>
    %109 = vector.shape_cast %108 : vector<32xf32> to vector<32x1xf32>
    %110 = vector.broadcast %109 : vector<32x1xf32> to vector<32x32xf32>
    %111 = arith.divf %107, %110 : vector<32x32xf32>
    %cst_32 = arith.constant dense<0.000000e+00> : vector<32x8xf32>
    %112 = tpu.matmul %111, %101, %cst_32 {dimension_numbers = #tpu.dot_dimension_numbers<[1], [0], [0], [1], [0, 0, 1, 1], [], []>} : vector<32x32xf32>, vector<32x8xf32>, vector<32x8xf32> -> vector<32x8xf32>
    %113 = vector.extract_strided_slice %59 {offsets = [16, 0], sizes = [8, 32], strides = [1, 1]} : vector<32x32xf32> to vector<8x32xf32>
    %cst_33 = arith.constant dense<0.000000e+00> : vector<32x32xf32>
    %114 = tpu.matmul %112, %113, %cst_33 {dimension_numbers = #tpu.dot_dimension_numbers<[1], [0], [0], [1], [0, 0, 1, 1], [], []>} : vector<32x8xf32>, vector<8x32xf32>, vector<32x32xf32> -> vector<32x32xf32>
    %115 = arith.addf %98, %114 : vector<32x32xf32>
    %116 = vector.extract_strided_slice %62 {offsets = [0, 24], sizes = [32, 8], strides = [1, 1]} : vector<32x96xf32> to vector<32x8xf32>
    %117 = vector.extract_strided_slice %62 {offsets = [0, 56], sizes = [32, 8], strides = [1, 1]} : vector<32x96xf32> to vector<32x8xf32>
    %118 = vector.extract_strided_slice %62 {offsets = [0, 88], sizes = [32, 8], strides = [1, 1]} : vector<32x96xf32> to vector<32x8xf32>
    %cst_34 = arith.constant dense<0.000000e+00> : vector<32x32xf32>
    %119 = tpu.matmul %116, %117, %cst_34 {dimension_numbers = #tpu.dot_dimension_numbers<[1], [1], [0], [0], [0, 0, 1, 0], [], []>} : vector<32x8xf32>, vector<32x8xf32>, vector<32x32xf32> -> vector<32x32xf32>
    %cst_35 = arith.constant dense<0xFF800000> : vector<32xf32>
    %120 = vector.multi_reduction <maximumf>, %119, %cst_35 [1] : vector<32x32xf32> to vector<32xf32>
    %121 = vector.shape_cast %120 : vector<32xf32> to vector<32x1xf32>
    %122 = vector.broadcast %121 : vector<32x1xf32> to vector<32x32xf32>
    %123 = arith.subf %119, %122 : vector<32x32xf32>
    %124 = math.exp %123 : vector<32x32xf32>
    %cst_36 = arith.constant dense<0.000000e+00> : vector<32xf32>
    %125 = vector.multi_reduction <add>, %124, %cst_36 [1] : vector<32x32xf32> to vector<32xf32>
    %126 = vector.shape_cast %125 : vector<32xf32> to vector<32x1xf32>
    %127 = vector.broadcast %126 : vector<32x1xf32> to vector<32x32xf32>
    %128 = arith.divf %124, %127 : vector<32x32xf32>
    %cst_37 = arith.constant dense<0.000000e+00> : vector<32x8xf32>
    %129 = tpu.matmul %128, %118, %cst_37 {dimension_numbers = #tpu.dot_dimension_numbers<[1], [0], [0], [1], [0, 0, 1, 1], [], []>} : vector<32x32xf32>, vector<32x8xf32>, vector<32x8xf32> -> vector<32x8xf32>
    %130 = vector.extract_strided_slice %59 {offsets = [24, 0], sizes = [8, 32], strides = [1, 1]} : vector<32x32xf32> to vector<8x32xf32>
    %cst_38 = arith.constant dense<0.000000e+00> : vector<32x32xf32>
    %131 = tpu.matmul %129, %130, %cst_38 {dimension_numbers = #tpu.dot_dimension_numbers<[1], [0], [0], [1], [0, 0, 1, 1], [], []>} : vector<32x8xf32>, vector<8x32xf32>, vector<32x32xf32> -> vector<32x32xf32>
    %132 = arith.addf %115, %131 : vector<32x32xf32>
    %c0_39 = arith.constant 0 : index
    %c0_40 = arith.constant 0 : index
    %c0_41 = arith.constant 0 : index
    %133 = vector.load %arg3[%c0_39, %c0_40, %c0_41] : memref<2x32x64xf32, #tpu.memory_space<vmem>>, vector<1x32x64xf32>
    %134 = vector.shape_cast %133 : vector<1x32x64xf32> to vector<32x64xf32>
    %135 = vector.extract_strided_slice %1 {offsets = [2, 0], sizes = [1, 64], strides = [1, 1]} : vector<16x96xf32> to vector<1x64xf32>
    %c0_42 = arith.constant 0 : index
    %c0_43 = arith.constant 0 : index
    %c0_44 = arith.constant 0 : index
    %136 = vector.load %arg4[%c0_42, %c0_43, %c0_44] : memref<2x64x32xf32, #tpu.memory_space<vmem>>, vector<1x64x32xf32>
    %137 = vector.shape_cast %136 : vector<1x64x32xf32> to vector<64x32xf32>
    %138 = vector.extract_strided_slice %1 {offsets = [6, 0], sizes = [1, 32], strides = [1, 1]} : vector<16x96xf32> to vector<1x32xf32>
    %139 = vector.extract_strided_slice %1 {offsets = [7, 0], sizes = [1, 32], strides = [1, 1]} : vector<16x96xf32> to vector<1x32xf32>
    %140 = vector.extract_strided_slice %1 {offsets = [8, 0], sizes = [1, 32], strides = [1, 1]} : vector<16x96xf32> to vector<1x32xf32>
    %141 = vector.extract_strided_slice %1 {offsets = [9, 0], sizes = [1, 32], strides = [1, 1]} : vector<16x96xf32> to vector<1x32xf32>
    %142 = vector.extract_strided_slice %1 {offsets = [10, 0], sizes = [1, 32], strides = [1, 1]} : vector<16x96xf32> to vector<1x32xf32>
    %143 = arith.addf %0, %132 : vector<32x32xf32>
    %cst_45 = arith.constant dense<0.000000e+00> : vector<32xf32>
    %144 = vector.multi_reduction <add>, %143, %cst_45 [1] : vector<32x32xf32> to vector<32xf32>
    %145 = vector.shape_cast %144 : vector<32xf32> to vector<32x1xf32>
    %cst_46 = arith.constant 3.200000e+01 : f32
    %146 = vector.broadcast %cst_46 : f32 to vector<32x1xf32>
    %147 = arith.divf %145, %146 : vector<32x1xf32>
    %148 = vector.broadcast %147 : vector<32x1xf32> to vector<32x32xf32>
    %149 = arith.subf %143, %148 : vector<32x32xf32>
    %150 = arith.mulf %149, %149 : vector<32x32xf32>
    %cst_47 = arith.constant dense<0.000000e+00> : vector<32xf32>
    %151 = vector.multi_reduction <add>, %150, %cst_47 [1] : vector<32x32xf32> to vector<32xf32>
    %152 = vector.shape_cast %151 : vector<32xf32> to vector<32x1xf32>
    %cst_48 = arith.constant 3.200000e+01 : f32
    %153 = vector.broadcast %cst_48 : f32 to vector<32x1xf32>
    %154 = arith.divf %152, %153 : vector<32x1xf32>
    %155 = vector.broadcast %147 : vector<32x1xf32> to vector<32x32xf32>
    %156 = arith.subf %143, %155 : vector<32x32xf32>
    %cst_49 = arith.constant 9.99999974E-6 : f32
    %157 = vector.broadcast %cst_49 : f32 to vector<32x1xf32>
    %158 = arith.addf %154, %157 : vector<32x1xf32>
    %159 = math.rsqrt %158 : vector<32x1xf32>
    %160 = vector.broadcast %159 : vector<32x1xf32> to vector<32x32xf32>
    %161 = arith.mulf %156, %160 : vector<32x32xf32>
    %162 = vector.broadcast %139 : vector<1x32xf32> to vector<32x32xf32>
    %163 = arith.mulf %161, %162 : vector<32x32xf32>
    %164 = vector.broadcast %140 : vector<1x32xf32> to vector<32x32xf32>
    %165 = arith.addf %163, %164 : vector<32x32xf32>
    %cst_50 = arith.constant dense<0.000000e+00> : vector<32x64xf32>
    %166 = tpu.matmul %165, %134, %cst_50 {dimension_numbers = #tpu.dot_dimension_numbers<[1], [0], [0], [1], [0, 0, 1, 1], [], []>} : vector<32x32xf32>, vector<32x64xf32>, vector<32x64xf32> -> vector<32x64xf32>
    %167 = vector.broadcast %135 : vector<1x64xf32> to vector<32x64xf32>
    %168 = arith.addf %166, %167 : vector<32x64xf32>
    %cst_51 = arith.constant 0.000000e+00 : f32
    %169 = vector.broadcast %cst_51 : f32 to vector<32x64xf32>
    %170 = arith.maximumf %168, %169 : vector<32x64xf32>
    %cst_52 = arith.constant dense<0.000000e+00> : vector<32x32xf32>
    %171 = tpu.matmul %170, %137, %cst_52 {dimension_numbers = #tpu.dot_dimension_numbers<[1], [0], [0], [1], [0, 0, 1, 1], [], []>} : vector<32x64xf32>, vector<64x32xf32>, vector<32x32xf32> -> vector<32x32xf32>
    %172 = vector.broadcast %138 : vector<1x32xf32> to vector<32x32xf32>
    %173 = arith.addf %171, %172 : vector<32x32xf32>
    %174 = arith.addf %165, %173 : vector<32x32xf32>
    %cst_53 = arith.constant dense<0.000000e+00> : vector<32xf32>
    %175 = vector.multi_reduction <add>, %174, %cst_53 [1] : vector<32x32xf32> to vector<32xf32>
    %176 = vector.shape_cast %175 : vector<32xf32> to vector<32x1xf32>
    %cst_54 = arith.constant 3.200000e+01 : f32
    %177 = vector.broadcast %cst_54 : f32 to vector<32x1xf32>
    %178 = arith.divf %176, %177 : vector<32x1xf32>
    %179 = vector.broadcast %178 : vector<32x1xf32> to vector<32x32xf32>
    %180 = arith.subf %174, %179 : vector<32x32xf32>
    %181 = arith.mulf %180, %180 : vector<32x32xf32>
    %cst_55 = arith.constant dense<0.000000e+00> : vector<32xf32>
    %182 = vector.multi_reduction <add>, %181, %cst_55 [1] : vector<32x32xf32> to vector<32xf32>
    %183 = vector.shape_cast %182 : vector<32xf32> to vector<32x1xf32>
    %cst_56 = arith.constant 3.200000e+01 : f32
    %184 = vector.broadcast %cst_56 : f32 to vector<32x1xf32>
    %185 = arith.divf %183, %184 : vector<32x1xf32>
    %186 = vector.broadcast %178 : vector<32x1xf32> to vector<32x32xf32>
    %187 = arith.subf %174, %186 : vector<32x32xf32>
    %cst_57 = arith.constant 9.99999974E-6 : f32
    %188 = vector.broadcast %cst_57 : f32 to vector<32x1xf32>
    %189 = arith.addf %185, %188 : vector<32x1xf32>
    %190 = math.rsqrt %189 : vector<32x1xf32>
    %191 = vector.broadcast %190 : vector<32x1xf32> to vector<32x32xf32>
    %192 = arith.mulf %187, %191 : vector<32x32xf32>
    %193 = vector.broadcast %141 : vector<1x32xf32> to vector<32x32xf32>
    %194 = arith.mulf %192, %193 : vector<32x32xf32>
    %195 = vector.broadcast %142 : vector<1x32xf32> to vector<32x32xf32>
    %196 = arith.addf %194, %195 : vector<32x32xf32>
    %c1 = arith.constant 1 : index
    %c0_58 = arith.constant 0 : index
    %c0_59 = arith.constant 0 : index
    %197 = vector.load %arg2[%c1, %c0_58, %c0_59] : memref<2x32x128xf32, #tpu.memory_space<vmem>>, vector<1x32x128xf32>
    %198 = vector.shape_cast %197 : vector<1x32x128xf32> to vector<32x128xf32>
    %199 = vector.extract_strided_slice %1 {offsets = [1, 0], sizes = [1, 96], strides = [1, 1]} : vector<16x96xf32> to vector<1x96xf32>
    %200 = vector.extract_strided_slice %1 {offsets = [5, 0], sizes = [1, 32], strides = [1, 1]} : vector<16x96xf32> to vector<1x32xf32>
    %201 = vector.extract_strided_slice %198 {offsets = [0, 0], sizes = [32, 96], strides = [1, 1]} : vector<32x128xf32> to vector<32x96xf32>
    %202 = vector.extract_strided_slice %198 {offsets = [0, 96], sizes = [32, 32], strides = [1, 1]} : vector<32x128xf32> to vector<32x32xf32>
    %cst_60 = arith.constant dense<0.000000e+00> : vector<32x96xf32>
    %203 = tpu.matmul %196, %201, %cst_60 {dimension_numbers = #tpu.dot_dimension_numbers<[1], [0], [0], [1], [0, 0, 1, 1], [], []>} : vector<32x32xf32>, vector<32x96xf32>, vector<32x96xf32> -> vector<32x96xf32>
    %204 = vector.broadcast %199 : vector<1x96xf32> to vector<32x96xf32>
    %205 = arith.addf %203, %204 : vector<32x96xf32>
    %206 = vector.shape_cast %200 : vector<1x32xf32> to vector<1x32xf32>
    %207 = vector.broadcast %206 : vector<1x32xf32> to vector<32x32xf32>
    %208 = vector.extract_strided_slice %205 {offsets = [0, 0], sizes = [32, 8], strides = [1, 1]} : vector<32x96xf32> to vector<32x8xf32>
    %209 = vector.extract_strided_slice %205 {offsets = [0, 32], sizes = [32, 8], strides = [1, 1]} : vector<32x96xf32> to vector<32x8xf32>
    %210 = vector.extract_strided_slice %205 {offsets = [0, 64], sizes = [32, 8], strides = [1, 1]} : vector<32x96xf32> to vector<32x8xf32>
    %cst_61 = arith.constant dense<0.000000e+00> : vector<32x32xf32>
    %211 = tpu.matmul %208, %209, %cst_61 {dimension_numbers = #tpu.dot_dimension_numbers<[1], [1], [0], [0], [0, 0, 1, 0], [], []>} : vector<32x8xf32>, vector<32x8xf32>, vector<32x32xf32> -> vector<32x32xf32>
    %212 = arith.addf %211, %53 : vector<32x32xf32>
    %cst_62 = arith.constant dense<0xFF800000> : vector<32xf32>
    %213 = vector.multi_reduction <maximumf>, %212, %cst_62 [1] : vector<32x32xf32> to vector<32xf32>
    %214 = vector.shape_cast %213 : vector<32xf32> to vector<32x1xf32>
    %215 = vector.broadcast %214 : vector<32x1xf32> to vector<32x32xf32>
    %216 = arith.subf %212, %215 : vector<32x32xf32>
    %217 = math.exp %216 : vector<32x32xf32>
    %cst_63 = arith.constant dense<0.000000e+00> : vector<32xf32>
    %218 = vector.multi_reduction <add>, %217, %cst_63 [1] : vector<32x32xf32> to vector<32xf32>
    %219 = vector.shape_cast %218 : vector<32xf32> to vector<32x1xf32>
    %220 = vector.broadcast %219 : vector<32x1xf32> to vector<32x32xf32>
    %221 = arith.divf %217, %220 : vector<32x32xf32>
    %cst_64 = arith.constant dense<0.000000e+00> : vector<32x8xf32>
    %222 = tpu.matmul %221, %210, %cst_64 {dimension_numbers = #tpu.dot_dimension_numbers<[1], [0], [0], [1], [0, 0, 1, 1], [], []>} : vector<32x32xf32>, vector<32x8xf32>, vector<32x8xf32> -> vector<32x8xf32>
    %223 = vector.extract_strided_slice %202 {offsets = [0, 0], sizes = [8, 32], strides = [1, 1]} : vector<32x32xf32> to vector<8x32xf32>
    %cst_65 = arith.constant dense<0.000000e+00> : vector<32x32xf32>
    %224 = tpu.matmul %222, %223, %cst_65 {dimension_numbers = #tpu.dot_dimension_numbers<[1], [0], [0], [1], [0, 0, 1, 1], [], []>} : vector<32x8xf32>, vector<8x32xf32>, vector<32x32xf32> -> vector<32x32xf32>
    %225 = arith.addf %207, %224 : vector<32x32xf32>
    %226 = vector.extract_strided_slice %205 {offsets = [0, 8], sizes = [32, 8], strides = [1, 1]} : vector<32x96xf32> to vector<32x8xf32>
    %227 = vector.extract_strided_slice %205 {offsets = [0, 40], sizes = [32, 8], strides = [1, 1]} : vector<32x96xf32> to vector<32x8xf32>
    %228 = vector.extract_strided_slice %205 {offsets = [0, 72], sizes = [32, 8], strides = [1, 1]} : vector<32x96xf32> to vector<32x8xf32>
    %cst_66 = arith.constant dense<0.000000e+00> : vector<32x32xf32>
    %229 = tpu.matmul %226, %227, %cst_66 {dimension_numbers = #tpu.dot_dimension_numbers<[1], [1], [0], [0], [0, 0, 1, 0], [], []>} : vector<32x8xf32>, vector<32x8xf32>, vector<32x32xf32> -> vector<32x32xf32>
    %230 = arith.addf %229, %53 : vector<32x32xf32>
    %cst_67 = arith.constant dense<0xFF800000> : vector<32xf32>
    %231 = vector.multi_reduction <maximumf>, %230, %cst_67 [1] : vector<32x32xf32> to vector<32xf32>
    %232 = vector.shape_cast %231 : vector<32xf32> to vector<32x1xf32>
    %233 = vector.broadcast %232 : vector<32x1xf32> to vector<32x32xf32>
    %234 = arith.subf %230, %233 : vector<32x32xf32>
    %235 = math.exp %234 : vector<32x32xf32>
    %cst_68 = arith.constant dense<0.000000e+00> : vector<32xf32>
    %236 = vector.multi_reduction <add>, %235, %cst_68 [1] : vector<32x32xf32> to vector<32xf32>
    %237 = vector.shape_cast %236 : vector<32xf32> to vector<32x1xf32>
    %238 = vector.broadcast %237 : vector<32x1xf32> to vector<32x32xf32>
    %239 = arith.divf %235, %238 : vector<32x32xf32>
    %cst_69 = arith.constant dense<0.000000e+00> : vector<32x8xf32>
    %240 = tpu.matmul %239, %228, %cst_69 {dimension_numbers = #tpu.dot_dimension_numbers<[1], [0], [0], [1], [0, 0, 1, 1], [], []>} : vector<32x32xf32>, vector<32x8xf32>, vector<32x8xf32> -> vector<32x8xf32>
    %241 = vector.extract_strided_slice %202 {offsets = [8, 0], sizes = [8, 32], strides = [1, 1]} : vector<32x32xf32> to vector<8x32xf32>
    %cst_70 = arith.constant dense<0.000000e+00> : vector<32x32xf32>
    %242 = tpu.matmul %240, %241, %cst_70 {dimension_numbers = #tpu.dot_dimension_numbers<[1], [0], [0], [1], [0, 0, 1, 1], [], []>} : vector<32x8xf32>, vector<8x32xf32>, vector<32x32xf32> -> vector<32x32xf32>
    %243 = arith.addf %225, %242 : vector<32x32xf32>
    %244 = vector.extract_strided_slice %205 {offsets = [0, 16], sizes = [32, 8], strides = [1, 1]} : vector<32x96xf32> to vector<32x8xf32>
    %245 = vector.extract_strided_slice %205 {offsets = [0, 48], sizes = [32, 8], strides = [1, 1]} : vector<32x96xf32> to vector<32x8xf32>
    %246 = vector.extract_strided_slice %205 {offsets = [0, 80], sizes = [32, 8], strides = [1, 1]} : vector<32x96xf32> to vector<32x8xf32>
    %cst_71 = arith.constant dense<0.000000e+00> : vector<32x32xf32>
    %247 = tpu.matmul %244, %245, %cst_71 {dimension_numbers = #tpu.dot_dimension_numbers<[1], [1], [0], [0], [0, 0, 1, 0], [], []>} : vector<32x8xf32>, vector<32x8xf32>, vector<32x32xf32> -> vector<32x32xf32>
    %248 = arith.addf %247, %53 : vector<32x32xf32>
    %cst_72 = arith.constant dense<0xFF800000> : vector<32xf32>
    %249 = vector.multi_reduction <maximumf>, %248, %cst_72 [1] : vector<32x32xf32> to vector<32xf32>
    %250 = vector.shape_cast %249 : vector<32xf32> to vector<32x1xf32>
    %251 = vector.broadcast %250 : vector<32x1xf32> to vector<32x32xf32>
    %252 = arith.subf %248, %251 : vector<32x32xf32>
    %253 = math.exp %252 : vector<32x32xf32>
    %cst_73 = arith.constant dense<0.000000e+00> : vector<32xf32>
    %254 = vector.multi_reduction <add>, %253, %cst_73 [1] : vector<32x32xf32> to vector<32xf32>
    %255 = vector.shape_cast %254 : vector<32xf32> to vector<32x1xf32>
    %256 = vector.broadcast %255 : vector<32x1xf32> to vector<32x32xf32>
    %257 = arith.divf %253, %256 : vector<32x32xf32>
    %cst_74 = arith.constant dense<0.000000e+00> : vector<32x8xf32>
    %258 = tpu.matmul %257, %246, %cst_74 {dimension_numbers = #tpu.dot_dimension_numbers<[1], [0], [0], [1], [0, 0, 1, 1], [], []>} : vector<32x32xf32>, vector<32x8xf32>, vector<32x8xf32> -> vector<32x8xf32>
    %259 = vector.extract_strided_slice %202 {offsets = [16, 0], sizes = [8, 32], strides = [1, 1]} : vector<32x32xf32> to vector<8x32xf32>
    %cst_75 = arith.constant dense<0.000000e+00> : vector<32x32xf32>
    %260 = tpu.matmul %258, %259, %cst_75 {dimension_numbers = #tpu.dot_dimension_numbers<[1], [0], [0], [1], [0, 0, 1, 1], [], []>} : vector<32x8xf32>, vector<8x32xf32>, vector<32x32xf32> -> vector<32x32xf32>
    %261 = arith.addf %243, %260 : vector<32x32xf32>
    %262 = vector.extract_strided_slice %205 {offsets = [0, 24], sizes = [32, 8], strides = [1, 1]} : vector<32x96xf32> to vector<32x8xf32>
    %263 = vector.extract_strided_slice %205 {offsets = [0, 56], sizes = [32, 8], strides = [1, 1]} : vector<32x96xf32> to vector<32x8xf32>
    %264 = vector.extract_strided_slice %205 {offsets = [0, 88], sizes = [32, 8], strides = [1, 1]} : vector<32x96xf32> to vector<32x8xf32>
    %cst_76 = arith.constant dense<0.000000e+00> : vector<32x32xf32>
    %265 = tpu.matmul %262, %263, %cst_76 {dimension_numbers = #tpu.dot_dimension_numbers<[1], [1], [0], [0], [0, 0, 1, 0], [], []>} : vector<32x8xf32>, vector<32x8xf32>, vector<32x32xf32> -> vector<32x32xf32>
    %266 = arith.addf %265, %53 : vector<32x32xf32>
    %cst_77 = arith.constant dense<0xFF800000> : vector<32xf32>
    %267 = vector.multi_reduction <maximumf>, %266, %cst_77 [1] : vector<32x32xf32> to vector<32xf32>
    %268 = vector.shape_cast %267 : vector<32xf32> to vector<32x1xf32>
    %269 = vector.broadcast %268 : vector<32x1xf32> to vector<32x32xf32>
    %270 = arith.subf %266, %269 : vector<32x32xf32>
    %271 = math.exp %270 : vector<32x32xf32>
    %cst_78 = arith.constant dense<0.000000e+00> : vector<32xf32>
    %272 = vector.multi_reduction <add>, %271, %cst_78 [1] : vector<32x32xf32> to vector<32xf32>
    %273 = vector.shape_cast %272 : vector<32xf32> to vector<32x1xf32>
    %274 = vector.broadcast %273 : vector<32x1xf32> to vector<32x32xf32>
    %275 = arith.divf %271, %274 : vector<32x32xf32>
    %cst_79 = arith.constant dense<0.000000e+00> : vector<32x8xf32>
    %276 = tpu.matmul %275, %264, %cst_79 {dimension_numbers = #tpu.dot_dimension_numbers<[1], [0], [0], [1], [0, 0, 1, 1], [], []>} : vector<32x32xf32>, vector<32x8xf32>, vector<32x8xf32> -> vector<32x8xf32>
    %277 = vector.extract_strided_slice %202 {offsets = [24, 0], sizes = [8, 32], strides = [1, 1]} : vector<32x32xf32> to vector<8x32xf32>
    %cst_80 = arith.constant dense<0.000000e+00> : vector<32x32xf32>
    %278 = tpu.matmul %276, %277, %cst_80 {dimension_numbers = #tpu.dot_dimension_numbers<[1], [0], [0], [1], [0, 0, 1, 1], [], []>} : vector<32x8xf32>, vector<8x32xf32>, vector<32x32xf32> -> vector<32x32xf32>
    %279 = arith.addf %261, %278 : vector<32x32xf32>
    %c1_81 = arith.constant 1 : index
    %c0_82 = arith.constant 0 : index
    %c0_83 = arith.constant 0 : index
    %280 = vector.load %arg3[%c1_81, %c0_82, %c0_83] : memref<2x32x64xf32, #tpu.memory_space<vmem>>, vector<1x32x64xf32>
    %281 = vector.shape_cast %280 : vector<1x32x64xf32> to vector<32x64xf32>
    %282 = vector.extract_strided_slice %1 {offsets = [3, 0], sizes = [1, 64], strides = [1, 1]} : vector<16x96xf32> to vector<1x64xf32>
    %c1_84 = arith.constant 1 : index
    %c0_85 = arith.constant 0 : index
    %c0_86 = arith.constant 0 : index
    %283 = vector.load %arg4[%c1_84, %c0_85, %c0_86] : memref<2x64x32xf32, #tpu.memory_space<vmem>>, vector<1x64x32xf32>
    %284 = vector.shape_cast %283 : vector<1x64x32xf32> to vector<64x32xf32>
    %285 = vector.extract_strided_slice %1 {offsets = [11, 0], sizes = [1, 32], strides = [1, 1]} : vector<16x96xf32> to vector<1x32xf32>
    %286 = vector.extract_strided_slice %1 {offsets = [12, 0], sizes = [1, 32], strides = [1, 1]} : vector<16x96xf32> to vector<1x32xf32>
    %287 = vector.extract_strided_slice %1 {offsets = [13, 0], sizes = [1, 32], strides = [1, 1]} : vector<16x96xf32> to vector<1x32xf32>
    %288 = vector.extract_strided_slice %1 {offsets = [14, 0], sizes = [1, 32], strides = [1, 1]} : vector<16x96xf32> to vector<1x32xf32>
    %289 = vector.extract_strided_slice %1 {offsets = [15, 0], sizes = [1, 32], strides = [1, 1]} : vector<16x96xf32> to vector<1x32xf32>
    %290 = arith.addf %196, %279 : vector<32x32xf32>
    %cst_87 = arith.constant dense<0.000000e+00> : vector<32xf32>
    %291 = vector.multi_reduction <add>, %290, %cst_87 [1] : vector<32x32xf32> to vector<32xf32>
    %292 = vector.shape_cast %291 : vector<32xf32> to vector<32x1xf32>
    %cst_88 = arith.constant 3.200000e+01 : f32
    %293 = vector.broadcast %cst_88 : f32 to vector<32x1xf32>
    %294 = arith.divf %292, %293 : vector<32x1xf32>
    %295 = vector.broadcast %294 : vector<32x1xf32> to vector<32x32xf32>
    %296 = arith.subf %290, %295 : vector<32x32xf32>
    %297 = arith.mulf %296, %296 : vector<32x32xf32>
    %cst_89 = arith.constant dense<0.000000e+00> : vector<32xf32>
    %298 = vector.multi_reduction <add>, %297, %cst_89 [1] : vector<32x32xf32> to vector<32xf32>
    %299 = vector.shape_cast %298 : vector<32xf32> to vector<32x1xf32>
    %cst_90 = arith.constant 3.200000e+01 : f32
    %300 = vector.broadcast %cst_90 : f32 to vector<32x1xf32>
    %301 = arith.divf %299, %300 : vector<32x1xf32>
    %302 = vector.broadcast %294 : vector<32x1xf32> to vector<32x32xf32>
    %303 = arith.subf %290, %302 : vector<32x32xf32>
    %cst_91 = arith.constant 9.99999974E-6 : f32
    %304 = vector.broadcast %cst_91 : f32 to vector<32x1xf32>
    %305 = arith.addf %301, %304 : vector<32x1xf32>
    %306 = math.rsqrt %305 : vector<32x1xf32>
    %307 = vector.broadcast %306 : vector<32x1xf32> to vector<32x32xf32>
    %308 = arith.mulf %303, %307 : vector<32x32xf32>
    %309 = vector.broadcast %286 : vector<1x32xf32> to vector<32x32xf32>
    %310 = arith.mulf %308, %309 : vector<32x32xf32>
    %311 = vector.broadcast %287 : vector<1x32xf32> to vector<32x32xf32>
    %312 = arith.addf %310, %311 : vector<32x32xf32>
    %cst_92 = arith.constant dense<0.000000e+00> : vector<32x64xf32>
    %313 = tpu.matmul %312, %281, %cst_92 {dimension_numbers = #tpu.dot_dimension_numbers<[1], [0], [0], [1], [0, 0, 1, 1], [], []>} : vector<32x32xf32>, vector<32x64xf32>, vector<32x64xf32> -> vector<32x64xf32>
    %314 = vector.broadcast %282 : vector<1x64xf32> to vector<32x64xf32>
    %315 = arith.addf %313, %314 : vector<32x64xf32>
    %cst_93 = arith.constant 0.000000e+00 : f32
    %316 = vector.broadcast %cst_93 : f32 to vector<32x64xf32>
    %317 = arith.maximumf %315, %316 : vector<32x64xf32>
    %cst_94 = arith.constant dense<0.000000e+00> : vector<32x32xf32>
    %318 = tpu.matmul %317, %284, %cst_94 {dimension_numbers = #tpu.dot_dimension_numbers<[1], [0], [0], [1], [0, 0, 1, 1], [], []>} : vector<32x64xf32>, vector<64x32xf32>, vector<32x32xf32> -> vector<32x32xf32>
    %319 = vector.broadcast %285 : vector<1x32xf32> to vector<32x32xf32>
    %320 = arith.addf %318, %319 : vector<32x32xf32>
    %321 = arith.addf %312, %320 : vector<32x32xf32>
    %cst_95 = arith.constant dense<0.000000e+00> : vector<32xf32>
    %322 = vector.multi_reduction <add>, %321, %cst_95 [1] : vector<32x32xf32> to vector<32xf32>
    %323 = vector.shape_cast %322 : vector<32xf32> to vector<32x1xf32>
    %cst_96 = arith.constant 3.200000e+01 : f32
    %324 = vector.broadcast %cst_96 : f32 to vector<32x1xf32>
    %325 = arith.divf %323, %324 : vector<32x1xf32>
    %326 = vector.broadcast %325 : vector<32x1xf32> to vector<32x32xf32>
    %327 = arith.subf %321, %326 : vector<32x32xf32>
    %328 = arith.mulf %327, %327 : vector<32x32xf32>
    %cst_97 = arith.constant dense<0.000000e+00> : vector<32xf32>
    %329 = vector.multi_reduction <add>, %328, %cst_97 [1] : vector<32x32xf32> to vector<32xf32>
    %330 = vector.shape_cast %329 : vector<32xf32> to vector<32x1xf32>
    %cst_98 = arith.constant 3.200000e+01 : f32
    %331 = vector.broadcast %cst_98 : f32 to vector<32x1xf32>
    %332 = arith.divf %330, %331 : vector<32x1xf32>
    %333 = vector.broadcast %325 : vector<32x1xf32> to vector<32x32xf32>
    %334 = arith.subf %321, %333 : vector<32x32xf32>
    %cst_99 = arith.constant 9.99999974E-6 : f32
    %335 = vector.broadcast %cst_99 : f32 to vector<32x1xf32>
    %336 = arith.addf %332, %335 : vector<32x1xf32>
    %337 = math.rsqrt %336 : vector<32x1xf32>
    %338 = vector.broadcast %337 : vector<32x1xf32> to vector<32x32xf32>
    %339 = arith.mulf %334, %338 : vector<32x32xf32>
    %340 = vector.broadcast %288 : vector<1x32xf32> to vector<32x32xf32>
    %341 = arith.mulf %339, %340 : vector<32x32xf32>
    %342 = vector.broadcast %289 : vector<1x32xf32> to vector<32x32xf32>
    %343 = arith.addf %341, %342 : vector<32x32xf32>
    %c0_100 = arith.constant 0 : index
    %c0_101 = arith.constant 0 : index
    %344 = vector.load %arg6[%c0_100, %c0_101] : memref<32x32xf32, #tpu.memory_space<vmem>>, vector<32x32xf32>
    tpu.vector_store %arg6[%c0_100, %c0_101], %343 {strides = array<i32>} : memref<32x32xf32, #tpu.memory_space<vmem>>, vector<32x32xf32>,
    return
  }
  func.func @transform_0(%arg0: i32) -> (i32, i32) {
    %c0_i32 = arith.constant 0 : i32
    %c0_i32_0 = arith.constant 0 : i32
    return %arg0, %c0_i32 : i32, i32
  }
  func.func @transform_1(%arg0: i32) -> (i32, i32, i32) {
    %c0_i32 = arith.constant 0 : i32
    %c0_i32_0 = arith.constant 0 : i32
    %c0_i32_1 = arith.constant 0 : i32
    %c0_i32_2 = arith.constant 0 : i32
    return %c0_i32, %c0_i32_0, %c0_i32_1 : i32, i32, i32
  }
  func.func @transform_2(%arg0: i32) -> (i32, i32, i32) {
    %c0_i32 = arith.constant 0 : i32
    %c0_i32_0 = arith.constant 0 : i32
    %c0_i32_1 = arith.constant 0 : i32
    %c0_i32_2 = arith.constant 0 : i32
    return %c0_i32, %c0_i32_0, %c0_i32_1 : i32, i32, i32
  }
  func.func @transform_3(%arg0: i32) -> (i32, i32, i32) {
    %c0_i32 = arith.constant 0 : i32
    %c0_i32_0 = arith.constant 0 : i32
    %c0_i32_1 = arith.constant 0 : i32
    %c0_i32_2 = arith.constant 0 : i32
    return %c0_i32, %c0_i32_0, %c0_i32_1 : i32, i32, i32
  }
  func.func @transform_4(%arg0: i32) -> (i32, i32) {
    %c0_i32 = arith.constant 0 : i32
    %c0_i32_0 = arith.constant 0 : i32
    %c0_i32_1 = arith.constant 0 : i32
    return %c0_i32, %c0_i32_0 : i32, i32
  }
  func.func @transform_5(%arg0: i32) -> (i32, i32) {
    %c0_i32 = arith.constant 0 : i32
    %c0_i32_0 = arith.constant 0 : i32
    return %arg0, %c0_i32 : i32, i32
  }
}

</mosaic_0001>

<llo_original>
// kernel: transformer_encoder_layer_global_local.1
$region0: #{transformer_encoder_layer_global_local.1}
  #allocation0 [shape = 'u32[]', space=smem, size = 0x4, offset = 0x4, fixed_abs, tag = 'smem constant byte address 0x4 - core index']
  #allocation1 [shape = 'u32[72,128]{1,0:T(1,128)}', space=vmem, size = 0x9000, scoped, tag = 'internal scratch']
  %s0 = inlined_call_operand.vmem [shape: f32[64,32], index: 0, kind: input, shape index: {}]
  %s1 = inlined_call_operand.vmem [shape: f32[2,32,128], index: 1, kind: input, shape index: {}]
  %s2 = inlined_call_operand.vmem [shape: f32[2,32,64], index: 2, kind: input, shape index: {}]
  %s3 = inlined_call_operand.vmem [shape: f32[2,64,32], index: 3, kind: input, shape index: {}]
  %s4 = inlined_call_operand.vmem [shape: f32[16,96], index: 4, kind: input, shape index: {}]
  %s5 = inlined_call_operand.hbm [shape: f32[64,32], index: 5, kind: output, shape index: {}]
  %s6 = sld [smem:[#allocation0]]
  $region53: #{transformer_encoder_layer_global_local.1} parent=0
    _
  %s8 = ssub.s32 1, %s6
  %s9 = scalar_select 0, %s8, %s6
  $region1: #{transformer_encoder_layer_global_local.1} parent=0
    #allocation2 [shape = 'u8[32768]{0}', space=vmem, size = 0x8000, scoped, tag = 'output window, operand 0']
    #allocation3 [shape = 's32[2]{0}', space=sflag, size = 0x8, scoped, tag = 'scoped memory for transformer_encoder_layer_global_local.1']
    %10 = vsyncpa [#allocation3], 0
    %s11 = scalar_lea.sflag [#allocation3], 1
    %12 = vsyncpa %s11, 0
    loop: start=0, step=1, limit=4
    $region2: #{transformer_encoder_layer_global_local.1} parent=1 // loop_pre_header
      _
    $region3: #{transformer_encoder_layer_global_local.1} parent=1 // loop_header
      %s14 = sphi 0, %s18
      %p15 = scmp.ge.s32.totalorder %s14, 4
      %s24 = sphi 0, %s26
      %s27 = sphi 0, %s24
      %s28 = sphi 0, %s27
      %s44 = sphi 0, %s28
      %s48 = sphi 0, %s48
      %s50 = sphi 0, %s48
      %s51 = sphi 0, %s50
      %s65 = sphi 0, %s51
      %s69 = sphi 0, %s69
      %s71 = sphi 0, %s69
      %s72 = sphi 0, %s71
      %s86 = sphi 0, %s72
      %s90 = sphi 0, %s90
      %s92 = sphi 0, %s90
      %s93 = sphi 0, %s92
      %s107 = sphi 0, %s93
      %s111 = sphi 0, %s111
      %s113 = sphi 0, %s111
      %s114 = sphi 0, %s113
      %s128 = sphi 0, %s114
      %s134 = sphi 0, %s136
      %s137 = sphi 0, %s134
      %s138 = sphi 0, %s137
      %s154 = sphi 0, %s138
    $region4: #{transformer_encoder_layer_global_local.1} parent=1 // loop_header_branch
      %17 = sbr.rel (%p15) target = $region8
    $region5: #{transformer_encoder_layer_global_local.1} parent=1 // loop_body
      %s19 = ssub.s32 %s14, 1
      %s20 = ssub.s32 %s14, 2
      %s21 = sadd.s32 %s14, 1
      %s22 = ssub.s32 %s14, %s21
      %p23 = scmp.eq.s32.totalorder %s22, 0
      %s25 = sadd.s32 %s24, 1
      %s26 = scalar_select %p23, %s24, %s25
      %p29 = pneg %p23
      %p30 = scmp.eq.s32.totalorder %s14, 1
      %p31 = por %p29, %p30
      %p32 = scmp.ne.s32.totalorder %s24, %s27
      %p33 = scmp.eq.s32.totalorder %s14, 0
      %p34 = por %p32, %p33
      %p35 = scmp.ne.s32.totalorder %s24, %s27
      %p36 = scmp.eq.s32.totalorder %s19, 1
      %p37 = por %p35, %p36
      %p38 = scmp.ne.s32.totalorder %s27, %s28
      %p39 = scmp.eq.s32.totalorder %s19, 0
      %p40 = por %p38, %p39
      %p41 = scmp.ne.s32.totalorder %s27, %s28
      %p42 = scmp.eq.s32.totalorder %s20, 1
      %p43 = por %p41, %p42
      %p45 = scmp.ne.s32.totalorder %s28, %s44
      %p46 = scmp.eq.s32.totalorder %s20, 0
      %p47 = por %p45, %p46
      %s49 = sadd.s32 %s48, 1
      %p52 = scmp.eq.s32.totalorder %s14, 1
      %p53 = scmp.ne.s32.totalorder %s48, %s50
      %p54 = scmp.eq.s32.totalorder %s14, 0
      %p55 = por %p53, %p54
      %p56 = scmp.ne.s32.totalorder %s48, %s50
      %p57 = scmp.eq.s32.totalorder %s19, 1
      %p58 = por %p56, %p57
      %p59 = scmp.ne.s32.totalorder %s50, %s51
      %p60 = scmp.eq.s32.totalorder %s19, 0
      %p61 = por %p59, %p60
      %p62 = scmp.ne.s32.totalorder %s50, %s51
      %p63 = scmp.eq.s32.totalorder %s20, 1
      %p64 = por %p62, %p63
      %p66 = scmp.ne.s32.totalorder %s51, %s65
      %p67 = scmp.eq.s32.totalorder %s20, 0
      %p68 = por %p66, %p67
      %s70 = sadd.s32 %s69, 1
      %p73 = scmp.eq.s32.totalorder %s14, 1
      %p74 = scmp.ne.s32.totalorder %s69, %s71
      %p75 = scmp.eq.s32.totalorder %s14, 0
      %p76 = por %p74, %p75
      %p77 = scmp.ne.s32.totalorder %s69, %s71
      %p78 = scmp.eq.s32.totalorder %s19, 1
      %p79 = por %p77, %p78
      %p80 = scmp.ne.s32.totalorder %s71, %s72
      %p81 = scmp.eq.s32.totalorder %s19, 0
      %p82 = por %p80, %p81
      %p83 = scmp.ne.s32.totalorder %s71, %s72
      %p84 = scmp.eq.s32.totalorder %s20, 1
      %p85 = por %p83, %p84
      %p87 = scmp.ne.s32.totalorder %s72, %s86
      %p88 = scmp.eq.s32.totalorder %s20, 0
      %p89 = por %p87, %p88
      %s91 = sadd.s32 %s90, 1
      %p94 = scmp.eq.s32.totalorder %s14, 1
      %p95 = scmp.ne.s32.totalorder %s90, %s92
      %p96 = scmp.eq.s32.totalorder %s14, 0
      %p97 = por %p95, %p96
      %p98 = scmp.ne.s32.totalorder %s90, %s92
      %p99 = scmp.eq.s32.totalorder %s19, 1
      %p100 = por %p98, %p99
      %p101 = scmp.ne.s32.totalorder %s92, %s93
      %p102 = scmp.eq.s32.totalorder %s19, 0
      %p103 = por %p101, %p102
      %p104 = scmp.ne.s32.totalorder %s92, %s93
      %p105 = scmp.eq.s32.totalorder %s20, 1
      %p106 = por %p104, %p105
      %p108 = scmp.ne.s32.totalorder %s93, %s107
      %p109 = scmp.eq.s32.totalorder %s20, 0
      %p110 = por %p108, %p109
      %s112 = sadd.s32 %s111, 1
      %p115 = scmp.eq.s32.totalorder %s14, 1
      %p116 = scmp.ne.s32.totalorder %s111, %s113
      %p117 = scmp.eq.s32.totalorder %s14, 0
      %p118 = por %p116, %p117
      %p119 = scmp.ne.s32.totalorder %s111, %s113
      %p120 = scmp.eq.s32.totalorder %s19, 1
      %p121 = por %p119, %p120
      %p122 = scmp.ne.s32.totalorder %s113, %s114
      %p123 = scmp.eq.s32.totalorder %s19, 0
      %p124 = por %p122, %p123
      %p125 = scmp.ne.s32.totalorder %s113, %s114
      %p126 = scmp.eq.s32.totalorder %s20, 1
      %p127 = por %p125, %p126
      %p129 = scmp.ne.s32.totalorder %s114, %s128
      %p130 = scmp.eq.s32.totalorder %s20, 0
      %p131 = por %p129, %p130
      %s132 = ssub.s32 %s14, %s21
      %p133 = scmp.eq.s32.totalorder %s132, 0
      %s135 = sadd.s32 %s134, 1
      %s136 = scalar_select %p133, %s134, %s135
      %p139 = pneg %p133
      %p140 = scmp.eq.s32.totalorder %s14, 1
      %p141 = por %p139, %p140
      %p142 = scmp.ne.s32.totalorder %s134, %s137
      %p143 = scmp.eq.s32.totalorder %s14, 0
      %p144 = por %p142, %p143
      %p145 = scmp.ne.s32.totalorder %s134, %s137
      %p146 = scmp.eq.s32.totalorder %s19, 1
      %p147 = por %p145, %p146
      %p148 = scmp.ne.s32.totalorder %s137, %s138
      %p149 = scmp.eq.s32.totalorder %s19, 0
      %p150 = por %p148, %p149
      %p151 = scmp.ne.s32.totalorder %s137, %s138
      %p152 = scmp.eq.s32.totalorder %s20, 1
      %p153 = por %p151, %p152
      %p155 = scmp.ne.s32.totalorder %s138, %s154
      %p156 = scmp.eq.s32.totalorder %s20, 0
      %p157 = por %p155, %p156
      %p158 = scmp.le.s32.totalorder 1, %s14
      %p159 = scmp.lt.s32.totalorder %s14, 3
      %p160 = pnand %p158, %p159
      %p161 = pneg %p160
      // Predicated region
      $region9: #{transformer_encoder_layer_global_local.1} parent=5 // pred_check
        _
      $region10: #{transformer_encoder_layer_global_local.1} parent=5 // pred_check_branch
        %163 = sbr.rel (%p160) target = $region12
      $region11: #{transformer_encoder_layer_global_local.1} parent=5 // pred_region
        %s164 = ssub.s32 %s14, 1
        // Predicated region
        $region13: #{transformer_encoder_layer_global_local.1} parent=11 // pred_check
          %p165 = pneg %p61
        $region14: #{transformer_encoder_layer_global_local.1} parent=11 // pred_check_branch
          %167 = sbr.rel (%p165) target = $region16
        $region15: #{transformer_encoder_layer_global_local.1} parent=11 // pred_region
          _
        $region16: #{transformer_encoder_layer_global_local.1} parent=11 // pred_fallthru
          _
        // Predicated region
        $region17: #{transformer_encoder_layer_global_local.1} parent=11 // pred_check
          %p168 = pneg %p82
        $region18: #{transformer_encoder_layer_global_local.1} parent=11 // pred_check_branch
          %170 = sbr.rel (%p168) target = $region20
        $region19: #{transformer_encoder_layer_global_local.1} parent=11 // pred_region
          _
        $region20: #{transformer_encoder_layer_global_local.1} parent=11 // pred_fallthru
          _
        // Predicated region
        $region21: #{transformer_encoder_layer_global_local.1} parent=11 // pred_check
          %p171 = pneg %p103
        $region22: #{transformer_encoder_layer_global_local.1} parent=11 // pred_check_branch
          %173 = sbr.rel (%p171) target = $region24
        $region23: #{transformer_encoder_layer_global_local.1} parent=11 // pred_region
          _
        $region24: #{transformer_encoder_layer_global_local.1} parent=11 // pred_fallthru
          _
        // Predicated region
        $region25: #{transformer_encoder_layer_global_local.1} parent=11 // pred_check
          %p174 = pneg %p124
        $region26: #{transformer_encoder_layer_global_local.1} parent=11 // pred_check_branch
          %176 = sbr.rel (%p174) target = $region28
        $region27: #{transformer_encoder_layer_global_local.1} parent=11 // pred_region
          _
        $region28: #{transformer_encoder_layer_global_local.1} parent=11 // pred_fallthru
          _
      $region12: #{transformer_encoder_layer_global_local.1} parent=5 // pred_fallthru
        _
      %p177 = scmp.lt.s32.totalorder %s14, 2
      // Predicated region
      $region29: #{transformer_encoder_layer_global_local.1} parent=5 // pred_check
        %p178 = pneg %p177
      $region30: #{transformer_encoder_layer_global_local.1} parent=5 // pred_check_branch
        %180 = sbr.rel (%p178) target = $region32
      $region31: #{transformer_encoder_layer_global_local.1} parent=5 // pred_region
        // Predicated region
        $region33: #{transformer_encoder_layer_global_local.1} parent=31 // pred_check
          %p181 = pneg %p34
        $region34: #{transformer_encoder_layer_global_local.1} parent=31 // pred_check_branch
          %183 = sbr.rel (%p181) target = $region36
        $region35: #{transformer_encoder_layer_global_local.1} parent=31 // pred_region
          %s184 = smul.u32 4, %s14
          %p185 = scmp.lt.s32.totalorder %s184, 7
          %s186 = scalar_select %p185, %s184, 7
          %s187 = smul.addr %s186, 8
          %s188 = scalar_lea.vmem %s0, %s187
          %s189 = smul.u32 4, %s14
        $region36: #{transformer_encoder_layer_global_local.1} parent=31 // pred_fallthru
          _
      $region32: #{transformer_encoder_layer_global_local.1} parent=5 // pred_fallthru
        _
      %p190 = scmp.le.s32.totalorder 1, %s14
      %p191 = scmp.lt.s32.totalorder %s14, 3
      %p192 = pnand %p190, %p191
      %p193 = pneg %p192
      // Predicated region
      $region37: #{transformer_encoder_layer_global_local.1} parent=5 // pred_check
        _
      $region38: #{transformer_encoder_layer_global_local.1} parent=5 // pred_check_branch
        %195 = sbr.rel (%p192) target = $region40
      $region39: #{transformer_encoder_layer_global_local.1} parent=5 // pred_region
        %s196 = ssub.s32 %s14, 1
        %s197 = smul.u32 4, %s19
        %p198 = scmp.lt.s32.totalorder %s197, 7
        %s199 = scalar_select %p198, %s197, 7
        %s200 = smul.addr %s199, 8
        %s201 = scalar_lea.vmem %s0, %s200
        %p202 = pneg %p40
        %p203 = pneg %p37
        %p204 = pneg %p61
        %p205 = pneg %p58
        %p206 = pneg %p82
        %p207 = pneg %p79
        %p208 = pneg %p103
        %p209 = pneg %p100
        %p210 = pneg %p124
        %p211 = pneg %p121
        %p212 = pneg %p150
        %p213 = pneg %p147
        %s214 = sand.u32 %s137, 1
        %s215 = scalar_lea.sflag [#allocation3], %s214
        %s216 = sand.u32 %s137, 1
        %s217 = smul.addr %s216, 32
        %s218 = scalar_lea.vmem [#allocation2], %s217
        %s219 = smul.u32 4, %s19
        %p220 = scmp.lt.s32.totalorder %s219, 7
        %s221 = scalar_select %p220, %s219, 7
        %s222 = smul.addr %s221, 8
        %s223 = scalar_lea.vmem %s0, %s222
        %s224 = smul.u32 4, %s19
        %s225 = smul.u32 4, %s19
        %v226 = vld [vmem:[%s223] sm:$0xff]
        %v227 = vld [vmem:[%s223 + $0x8] sm:$0xff]
        %v228 = vld [vmem:[%s223 + $0x10] sm:$0xff]
        %v229 = vld [vmem:[%s223 + $0x18] sm:$0xff]
        %v230 = vld [vmem:[%s4] sm:$0xff]
        %v231 = vld [vmem:[%s4 + $0x8] sm:$0xff]
        %v232 = vlaneseq
        %v233 = vshrl.u32 %v232, 7
        %v234 = vadd.s32 %v233, 8
        %v235 = vadd.s32 %v233, 16
        %v236 = vadd.s32 %v233, 24
        %v237 = vlaneseq
        %v238 = vand.u32 %v237, 127
        %vm239 = vcmp.ge.s32.totalorder %v233, 0
        %vm240 = vcmp.ge.s32.totalorder %v234, 0
        %vm241 = vcmp.ge.s32.totalorder %v235, 0
        %vm242 = vcmp.ge.s32.totalorder %v236, 0
        %vm243 = vcmp.lt.s32.totalorder %v233, 8
        %vm244 = vcmp.lt.s32.totalorder %v234, 8
        %vm245 = vcmp.lt.s32.totalorder %v235, 8
        %vm246 = vcmp.lt.s32.totalorder %v236, 8
        %vm247 = vmand %vm239, %vm243
        %vm248 = vmand %vm240, %vm244
        %vm249 = vmand %vm241, %vm245
        %vm250 = vmand %vm242, %vm246
        %vm251 = vcmp.ge.s32.totalorder %v238, 0
        %vm252 = vmand %vm247, %vm251
        %vm253 = vmand %vm248, %vm251
        %vm254 = vmand %vm249, %vm251
        %vm255 = vmand %vm250, %vm251
        %vm256 = vcmp.lt.s32.totalorder %v238, 8
        %vm257 = vmand %vm252, %vm256
        %vm258 = vmand %vm253, %vm256
        %vm259 = vmand %vm254, %vm256
        %vm260 = vmand %vm255, %vm256
        %vm261 = vcmp.ge.s32.totalorder %v233, 8
        %vm262 = vcmp.ge.s32.totalorder %v234, 8
        %vm263 = vcmp.ge.s32.totalorder %v235, 8
        %vm264 = vcmp.ge.s32.totalorder %v236, 8
        %vm265 = vcmp.lt.s32.totalorder %v233, 16
        %vm266 = vcmp.lt.s32.totalorder %v234, 16
        %vm267 = vcmp.lt.s32.totalorder %v235, 16
        %vm268 = vcmp.lt.s32.totalorder %v236, 16
        %vm269 = vmand %vm261, %vm265
        %vm270 = vmand %vm262, %vm266
        %vm271 = vmand %vm263, %vm267
        %vm272 = vmand %vm264, %vm268
        %vm273 = vcmp.ge.s32.totalorder %v238, 8
        %vm274 = vmand %vm269, %vm273
        %vm275 = vmand %vm270, %vm273
        %vm276 = vmand %vm271, %vm273
        %vm277 = vmand %vm272, %vm273
        %vm278 = vcmp.lt.s32.totalorder %v238, 16
        %vm279 = vmand %vm274, %vm278
        %vm280 = vmand %vm275, %vm278
        %vm281 = vmand %vm276, %vm278
        %vm282 = vmand %vm277, %vm278
        %vm283 = vmor %vm257, %vm279
        %vm284 = vmor %vm258, %vm280
        %vm285 = vmor %vm259, %vm281
        %vm286 = vmor %vm260, %vm282
        %vm287 = vcmp.ge.s32.totalorder %v233, 16
        %vm288 = vcmp.ge.s32.totalorder %v234, 16
        %vm289 = vcmp.ge.s32.totalorder %v235, 16
        %vm290 = vcmp.ge.s32.totalorder %v236, 16
        %vm291 = vcmp.lt.s32.totalorder %v233, 24
        %vm292 = vcmp.lt.s32.totalorder %v234, 24
        %vm293 = vcmp.lt.s32.totalorder %v235, 24
        %vm294 = vcmp.lt.s32.totalorder %v236, 24
        %vm295 = vmand %vm287, %vm291
        %vm296 = vmand %vm288, %vm292
        %vm297 = vmand %vm289, %vm293
        %vm298 = vmand %vm290, %vm294
        %vm299 = vcmp.ge.s32.totalorder %v238, 16
        %vm300 = vmand %vm295, %vm299
        %vm301 = vmand %vm296, %vm299
        %vm302 = vmand %vm297, %vm299
        %vm303 = vmand %vm298, %vm299
        %vm304 = vcmp.lt.s32.totalorder %v238, 24
        %vm305 = vmand %vm300, %vm304
        %vm306 = vmand %vm301, %vm304
        %vm307 = vmand %vm302, %vm304
        %vm308 = vmand %vm303, %vm304
        %vm309 = vmor %vm283, %vm305
        %vm310 = vmor %vm284, %vm306
        %vm311 = vmor %vm285, %vm307
        %vm312 = vmor %vm286, %vm308
        %vm313 = vcmp.ge.s32.totalorder %v233, 24
        %vm314 = vcmp.ge.s32.totalorder %v234, 24
        %vm315 = vcmp.ge.s32.totalorder %v235, 24
        %vm316 = vcmp.ge.s32.totalorder %v236, 24
        %vm317 = vcmp.lt.s32.totalorder %v233, 32
        %vm318 = vcmp.lt.s32.totalorder %v234, 32
        %vm319 = vcmp.lt.s32.totalorder %v235, 32
        %vm320 = vcmp.lt.s32.totalorder %v236, 32
        %vm321 = vmand %vm313, %vm317
        %vm322 = vmand %vm314, %vm318
        %vm323 = vmand %vm315, %vm319
        %vm324 = vmand %vm316, %vm320
        %vm325 = vcmp.ge.s32.totalorder %v238, 24
        %vm326 = vmand %vm321, %vm325
        %vm327 = vmand %vm322, %vm325
        %vm328 = vmand %vm323, %vm325
        %vm329 = vmand %vm324, %vm325
        %vm330 = vcmp.lt.s32.totalorder %v238, 32
        %vm331 = vmand %vm326, %vm330
        %vm332 = vmand %vm327, %vm330
        %vm333 = vmand %vm328, %vm330
        %vm334 = vmand %vm329, %vm330
        %vm335 = vmor %vm309, %vm331
        %vm336 = vmor %vm310, %vm332
        %vm337 = vmor %vm311, %vm333
        %vm338 = vmor %vm312, %vm334
        %v339 = vsel %vm335, 0.0, -1e+30
        %v340 = vsel %vm336, 0.0, -1e+30
        %v341 = vsel %vm337, 0.0, -1e+30
        %v342 = vsel %vm338, 0.0, -1e+30
        %v343 = vld [vmem:[%s1] sm:$0xff]
        %v344 = vld [vmem:[%s1 + $0x8] sm:$0xff]
        %v345 = vld [vmem:[%s1 + $0x10] sm:$0xff]
        %v346 = vld [vmem:[%s1 + $0x18] sm:$0xff]
        %v347 = vperm.slane %v230, 0
        %vm348 = vcmask 261120
        %v350 = vsel %vm348, %v226, 0
        %v353 = vsel %vm348, %v227, 0
        %v356 = vsel %vm348, %v228, 0
        %v359 = vsel %vm348, %v229, 0
        %361 = vmatpush.msra.mxu0 0.0
        %362 = vmatpush.msra.mxu0 0.0
        %363 = vmatpush.msra.mxu0 0.0
        %364 = vmatpush.msra.mxu0 0.0
        %365 = vmatpush.msra.mxu0 0.0
        %366 = vmatpush.msra.mxu0 0.0
        %367 = vmatpush.msra.mxu0 0.0
        %368 = vmatpush.msra.mxu0 0.0
        %369 = vmatpush.msra.mxu0 0.0
        %370 = vmatpush.msra.mxu0 0.0
        %371 = vmatpush.msra.mxu0 0.0
        %372 = vmatpush.msra.mxu0 0.0
        %373 = vmatpush.msra.mxu0 %v346
        %374 = vmatpush.msra.mxu0 %v345
        %375 = vmatpush.msra.mxu0 %v344
        %376 = vmatpush.msra.mxu0 %v343
        %377 = vmatmul.f32.gmra.mxu0 %v350
        %v378 = vpop.f32.mrf.mxu0
        %v379 = vadd.f32 %v347, %v378
        %380 = vmatmul.f32.gmra.mxu0 %v353
        %v381 = vpop.f32.mrf.mxu0
        %v382 = vadd.f32 %v347, %v381
        %383 = vmatmul.f32.gmra.mxu0 %v356
        %v384 = vpop.f32.mrf.mxu0
        %v385 = vadd.f32 %v347, %v384
        %386 = vmatmul.f32.gmra.mxu0 %v359
        %v387 = vpop.f32.mrf.mxu0
        %v388 = vadd.f32 %v347, %v387
        %389 = vdwg.mxu0
        %v390 = vperm.slane %v230, 4
        %395 = vrot.lane.b32.xlu0 %v379, 96
        %v396 = vpop.permute.xlu0 %395
        %397 = vrot.lane.b32.xlu0 %v382, 96
        %v398 = vpop.permute.xlu0 %397
        %399 = vrot.lane.b32.xlu0 %v385, 96
        %v400 = vpop.permute.xlu0 %399
        %401 = vrot.lane.b32.xlu0 %v388, 96
        %v402 = vpop.permute.xlu0 %401
        %vm403 = vcmask 64512
        %v404 = vsel %vm403, %v379, 0
        %v406 = vsel %vm403, %v382, 0
        %v408 = vsel %vm403, %v385, 0
        %v410 = vsel %vm403, %v388, 0
        %v412 = vsel %vm403, %v396, 0
        %v414 = vsel %vm403, %v398, 0
        %v416 = vsel %vm403, %v400, 0
        %v418 = vsel %vm403, %v402, 0
        %420 = vmatpush.xpose.msra.mxu0 0.0
        %421 = vmatpush.xpose.msra.mxu0 0.0
        %422 = vmatpush.xpose.msra.mxu0 0.0
        %423 = vmatpush.xpose.msra.mxu0 0.0
        %424 = vmatpush.xpose.msra.mxu0 0.0
        %425 = vmatpush.xpose.msra.mxu0 0.0
        %426 = vmatpush.xpose.msra.mxu0 0.0
        %427 = vmatpush.xpose.msra.mxu0 0.0
        %428 = vmatpush.xpose.msra.mxu0 0.0
        %429 = vmatpush.xpose.msra.mxu0 0.0
        %430 = vmatpush.xpose.msra.mxu0 0.0
        %431 = vmatpush.xpose.msra.mxu0 0.0
        %432 = vmatpush.xpose.msra.mxu0 %v418
        %433 = vmatpush.xpose.msra.mxu0 %v416
        %434 = vmatpush.xpose.msra.mxu0 %v414
        %435 = vmatpush.xpose.msra.mxu0 %v412
        %436 = vmatmul.f32.gmra.mxu0 %v404
        %v437 = vpop.f32.mrf.mxu0
        %v438 = vadd.f32 0.0, %v437
        %439 = vmatmul.f32.gmra.mxu0 %v406
        %v440 = vpop.f32.mrf.mxu0
        %v441 = vadd.f32 0.0, %v440
        %442 = vmatmul.f32.gmra.mxu0 %v408
        %v443 = vpop.f32.mrf.mxu0
        %v444 = vadd.f32 0.0, %v443
        %445 = vmatmul.f32.gmra.mxu0 %v410
        %v446 = vpop.f32.mrf.mxu0
        %v447 = vadd.f32 0.0, %v446
        %448 = vdwg.mxu0
        %v449 = vsel %vm348, %v438, -inf
        %450 = vmax.xlane.f32.xlu0 %v449
        %v451 = vpop.xlane.xlu0 %450
        %v452 = vsel %vm348, %v441, -inf
        %453 = vmax.xlane.f32.xlu0 %v452
        %v454 = vpop.xlane.xlu0 %453
        %v455 = vsel %vm348, %v444, -inf
        %456 = vmax.xlane.f32.xlu0 %v455
        %v457 = vpop.xlane.xlu0 %456
        %v458 = vsel %vm348, %v447, -inf
        %459 = vmax.xlane.f32.xlu0 %v458
        %v460 = vpop.xlane.xlu0 %459
        %v461 = vsub.f32 %v438, %v451
        %v462 = vsub.f32 %v441, %v454
        %v463 = vsub.f32 %v444, %v457
        %v464 = vsub.f32 %v447, %v460
        %v465 = vmul.f32 %v461, 1.442695
        %v466 = vpow.pop %v465
        %v467 = vmul.f32 %v462, 1.442695
        %v468 = vpow.pop %v467
        %v469 = vmul.f32 %v463, 1.442695
        %v470 = vpow.pop %v469
        %v471 = vmul.f32 %v464, 1.442695
        %v472 = vpow.pop %v471
        %v473 = vsel %vm348, %v466, 0.0
        %474 = vadd.xlane.f32.xlu0 %v473
        %v475 = vpop.xlane.xlu0 %474
        %v476 = vsel %vm348, %v468, 0.0
        %477 = vadd.xlane.f32.xlu0 %v476
        %v478 = vpop.xlane.xlu0 %477
        %v479 = vsel %vm348, %v470, 0.0
        %480 = vadd.xlane.f32.xlu0 %v479
        %v481 = vpop.xlane.xlu0 %480
        %v482 = vsel %vm348, %v472, 0.0
        %483 = vadd.xlane.f32.xlu0 %v482
        %v484 = vpop.xlane.xlu0 %483
        %v485 = vrcp.pop %v475
        %v486 = vmul.f32 %v475, %v485
        %v487 = vsub.f32 1.0, %v486
        %v488 = vmul.f32 %v485, %v487
        %v489 = vadd.f32 %v485, %v488
        %vm490 = vweird.f32 %v475
        %vm491 = vweird.f32 %v485
        %vm492 = vmor %vm490, %vm491
        %v493 = vsel %vm492, %v485, %v489
        %v494 = vand.u32 2147483647, %v475
        %vm495 = vcmp.eq.f32.partialorder %v494, 8.507059e+37
        %v496 = vand.u32 %v475, 2147483648
        %v497 = vor.u32 1.1754944e-38, %v496
        %v498 = vsel %vm495, %v497, %v493
        %v499 = vmul.f32 %v466, %v498
        %v500 = vrcp.pop %v478
        %v501 = vmul.f32 %v478, %v500
        %v502 = vsub.f32 1.0, %v501
        %v503 = vmul.f32 %v500, %v502
        %v504 = vadd.f32 %v500, %v503
        %vm505 = vweird.f32 %v478
        %vm506 = vweird.f32 %v500
        %vm507 = vmor %vm505, %vm506
        %v508 = vsel %vm507, %v500, %v504
        %v509 = vand.u32 2147483647, %v478
        %vm510 = vcmp.eq.f32.partialorder %v509, 8.507059e+37
        %v511 = vand.u32 %v478, 2147483648
        %v512 = vor.u32 1.1754944e-38, %v511
        %v513 = vsel %vm510, %v512, %v508
        %v514 = vmul.f32 %v468, %v513
        %v515 = vrcp.pop %v481
        %v516 = vmul.f32 %v481, %v515
        %v517 = vsub.f32 1.0, %v516
        %v518 = vmul.f32 %v515, %v517
        %v519 = vadd.f32 %v515, %v518
        %vm520 = vweird.f32 %v481
        %vm521 = vweird.f32 %v515
        %vm522 = vmor %vm520, %vm521
        %v523 = vsel %vm522, %v515, %v519
        %v524 = vand.u32 2147483647, %v481
        %vm525 = vcmp.eq.f32.partialorder %v524, 8.507059e+37
        %v526 = vand.u32 %v481, 2147483648
        %v527 = vor.u32 1.1754944e-38, %v526
        %v528 = vsel %vm525, %v527, %v523
        %v529 = vmul.f32 %v470, %v528
        %v530 = vrcp.pop %v484
        %v531 = vmul.f32 %v484, %v530
        %v532 = vsub.f32 1.0, %v531
        %v533 = vmul.f32 %v530, %v532
        %v534 = vadd.f32 %v530, %v533
        %vm535 = vweird.f32 %v484
        %vm536 = vweird.f32 %v530
        %vm537 = vmor %vm535, %vm536
        %v538 = vsel %vm537, %v530, %v534
        %v539 = vand.u32 2147483647, %v484
        %vm540 = vcmp.eq.f32.partialorder %v539, 8.507059e+37
        %v541 = vand.u32 %v484, 2147483648
        %v542 = vor.u32 1.1754944e-38, %v541
        %v543 = vsel %vm540, %v542, %v538
        %v544 = vmul.f32 %v472, %v543
        %545 = vrot.lane.b32.xlu0 %v379, 64
        %v546 = vpop.permute.xlu0 %545
        %547 = vrot.lane.b32.xlu0 %v382, 64
        %v548 = vpop.permute.xlu0 %547
        %549 = vrot.lane.b32.xlu0 %v385, 64
        %v550 = vpop.permute.xlu0 %549
        %551 = vrot.lane.b32.xlu0 %v388, 64
        %v552 = vpop.permute.xlu0 %551
        %v558 = vsel %vm348, %v499, 0
        %v561 = vsel %vm348, %v514, 0
        %v564 = vsel %vm348, %v529, 0
        %v567 = vsel %vm348, %v544, 0
        %569 = vmatpush.msra.mxu0 0.0
        %570 = vmatpush.msra.mxu0 0.0
        %571 = vmatpush.msra.mxu0 0.0
        %572 = vmatpush.msra.mxu0 0.0
        %573 = vmatpush.msra.mxu0 0.0
        %574 = vmatpush.msra.mxu0 0.0
        %575 = vmatpush.msra.mxu0 0.0
        %576 = vmatpush.msra.mxu0 0.0
        %577 = vmatpush.msra.mxu0 0.0
        %578 = vmatpush.msra.mxu0 0.0
        %579 = vmatpush.msra.mxu0 0.0
        %580 = vmatpush.msra.mxu0 0.0
        %581 = vmatpush.msra.mxu0 %v552
        %582 = vmatpush.msra.mxu0 %v550
        %583 = vmatpush.msra.mxu0 %v548
        %584 = vmatpush.msra.mxu0 %v546
        %585 = vmatmul.f32.gmra.mxu0 %v558
        %v586 = vpop.f32.mrf.mxu0
        %v587 = vadd.f32 0.0, %v586
        %588 = vmatmul.f32.gmra.mxu0 %v561
        %v589 = vpop.f32.mrf.mxu0
        %v590 = vadd.f32 0.0, %v589
        %591 = vmatmul.f32.gmra.mxu0 %v564
        %v592 = vpop.f32.mrf.mxu0
        %v593 = vadd.f32 0.0, %v592
        %594 = vmatmul.f32.gmra.mxu0 %v567
        %v595 = vpop.f32.mrf.mxu0
        %v596 = vadd.f32 0.0, %v595
        %597 = vdwg.mxu0
        %599 = vrot.lane.b32.xlu0 %v343, 32
        %v600 = vpop.permute.xlu0 %599
        %v603 = vsel %vm403, %v587, 0
        %v606 = vsel %vm403, %v590, 0
        %v609 = vsel %vm403, %v593, 0
        %v612 = vsel %vm403, %v596, 0
        %614 = vmatpush.msra.mxu0 0.0
        %615 = vmatpush.msra.mxu0 0.0
        %616 = vmatpush.msra.mxu0 0.0
        %617 = vmatpush.msra.mxu0 0.0
        %618 = vmatpush.msra.mxu0 0.0
        %619 = vmatpush.msra.mxu0 0.0
        %620 = vmatpush.msra.mxu0 0.0
        %621 = vmatpush.msra.mxu0 0.0
        %622 = vmatpush.msra.mxu0 0.0
        %623 = vmatpush.msra.mxu0 0.0
        %624 = vmatpush.msra.mxu0 0.0
        %625 = vmatpush.msra.mxu0 0.0
        %626 = vmatpush.msra.mxu0 0.0
        %627 = vmatpush.msra.mxu0 0.0
        %628 = vmatpush.msra.mxu0 0.0
        %629 = vmatpush.msra.mxu0 %v600
        %630 = vmatmul.f32.gmra.mxu0 %v603
        %v631 = vpop.f32.mrf.mxu0
        %v632 = vadd.f32 0.0, %v631
        %633 = vmatmul.f32.gmra.mxu0 %v606
        %v634 = vpop.f32.mrf.mxu0
        %v635 = vadd.f32 0.0, %v634
        %636 = vmatmul.f32.gmra.mxu0 %v609
        %v637 = vpop.f32.mrf.mxu0
        %v638 = vadd.f32 0.0, %v637
        %639 = vmatmul.f32.gmra.mxu0 %v612
        %v640 = vpop.f32.mrf.mxu0
        %v641 = vadd.f32 0.0, %v640
        %642 = vdwg.mxu0
        %v643 = vadd.f32 %v390, %v632
        %v644 = vadd.f32 %v390, %v635
        %v645 = vadd.f32 %v390, %v638
        %v646 = vadd.f32 %v390, %v641
        %647 = vrot.lane.b32.xlu0 %v379, 120
        %v648 = vpop.permute.xlu0 %647
        %649 = vrot.lane.b32.xlu0 %v382, 120
        %v650 = vpop.permute.xlu0 %649
        %651 = vrot.lane.b32.xlu0 %v385, 120
        %v652 = vpop.permute.xlu0 %651
        %653 = vrot.lane.b32.xlu0 %v388, 120
        %v654 = vpop.permute.xlu0 %653
        %655 = vrot.lane.b32.xlu0 %v379, 88
        %v656 = vpop.permute.xlu0 %655
        %657 = vrot.lane.b32.xlu0 %v382, 88
        %v658 = vpop.permute.xlu0 %657
        %659 = vrot.lane.b32.xlu0 %v385, 88
        %v660 = vpop.permute.xlu0 %659
        %661 = vrot.lane.b32.xlu0 %v388, 88
        %v662 = vpop.permute.xlu0 %661
        %v663 = vsel %vm403, %v648, 0
        %v665 = vsel %vm403, %v650, 0
        %v667 = vsel %vm403, %v652, 0
        %v669 = vsel %vm403, %v654, 0
        %v671 = vsel %vm403, %v656, 0
        %v673 = vsel %vm403, %v658, 0
        %v675 = vsel %vm403, %v660, 0
        %v677 = vsel %vm403, %v662, 0
        %679 = vmatpush.xpose.msra.mxu0 0.0
        %680 = vmatpush.xpose.msra.mxu0 0.0
        %681 = vmatpush.xpose.msra.mxu0 0.0
        %682 = vmatpush.xpose.msra.mxu0 0.0
        %683 = vmatpush.xpose.msra.mxu0 0.0
        %684 = vmatpush.xpose.msra.mxu0 0.0
        %685 = vmatpush.xpose.msra.mxu0 0.0
        %686 = vmatpush.xpose.msra.mxu0 0.0
        %687 = vmatpush.xpose.msra.mxu0 0.0
        %688 = vmatpush.xpose.msra.mxu0 0.0
        %689 = vmatpush.xpose.msra.mxu0 0.0
        %690 = vmatpush.xpose.msra.mxu0 0.0
        %691 = vmatpush.xpose.msra.mxu0 %v677
        %692 = vmatpush.xpose.msra.mxu0 %v675
        %693 = vmatpush.xpose.msra.mxu0 %v673
        %694 = vmatpush.xpose.msra.mxu0 %v671
        %695 = vmatmul.f32.gmra.mxu0 %v663
        %v696 = vpop.f32.mrf.mxu0
        %v697 = vadd.f32 0.0, %v696
        %698 = vmatmul.f32.gmra.mxu0 %v665
        %v699 = vpop.f32.mrf.mxu0
        %v700 = vadd.f32 0.0, %v699
        %701 = vmatmul.f32.gmra.mxu0 %v667
        %v702 = vpop.f32.mrf.mxu0
        %v703 = vadd.f32 0.0, %v702
        %704 = vmatmul.f32.gmra.mxu0 %v669
        %v705 = vpop.f32.mrf.mxu0
        %v706 = vadd.f32 0.0, %v705
        %707 = vdwg.mxu0
        %v708 = vsel %vm348, %v697, -inf
        %709 = vmax.xlane.f32.xlu0 %v708
        %v710 = vpop.xlane.xlu0 %709
        %v711 = vsel %vm348, %v700, -inf
        %712 = vmax.xlane.f32.xlu0 %v711
        %v713 = vpop.xlane.xlu0 %712
        %v714 = vsel %vm348, %v703, -inf
        %715 = vmax.xlane.f32.xlu0 %v714
        %v716 = vpop.xlane.xlu0 %715
        %v717 = vsel %vm348, %v706, -inf
        %718 = vmax.xlane.f32.xlu0 %v717
        %v719 = vpop.xlane.xlu0 %718
        %v720 = vsub.f32 %v697, %v710
        %v721 = vsub.f32 %v700, %v713
        %v722 = vsub.f32 %v703, %v716
        %v723 = vsub.f32 %v706, %v719
        %v724 = vmul.f32 %v720, 1.442695
        %v725 = vpow.pop %v724
        %v726 = vmul.f32 %v721, 1.442695
        %v727 = vpow.pop %v726
        %v728 = vmul.f32 %v722, 1.442695
        %v729 = vpow.pop %v728
        %v730 = vmul.f32 %v723, 1.442695
        %v731 = vpow.pop %v730
        %v732 = vsel %vm348, %v725, 0.0
        %733 = vadd.xlane.f32.xlu0 %v732
        %v734 = vpop.xlane.xlu0 %733
        %v735 = vsel %vm348, %v727, 0.0
        %736 = vadd.xlane.f32.xlu0 %v735
        %v737 = vpop.xlane.xlu0 %736
        %v738 = vsel %vm348, %v729, 0.0
        %739 = vadd.xlane.f32.xlu0 %v738
        %v740 = vpop.xlane.xlu0 %739
        %v741 = vsel %vm348, %v731, 0.0
        %742 = vadd.xlane.f32.xlu0 %v741
        %v743 = vpop.xlane.xlu0 %742
        %v744 = vrcp.pop %v734
        %v745 = vmul.f32 %v734, %v744
        %v746 = vsub.f32 1.0, %v745
        %v747 = vmul.f32 %v744, %v746
        %v748 = vadd.f32 %v744, %v747
        %vm749 = vweird.f32 %v734
        %vm750 = vweird.f32 %v744
        %vm751 = vmor %vm749, %vm750
        %v752 = vsel %vm751, %v744, %v748
        %v753 = vand.u32 2147483647, %v734
        %vm754 = vcmp.eq.f32.partialorder %v753, 8.507059e+37
        %v755 = vand.u32 %v734, 2147483648
        %v756 = vor.u32 1.1754944e-38, %v755
        %v757 = vsel %vm754, %v756, %v752
        %v758 = vmul.f32 %v725, %v757
        %v759 = vrcp.pop %v737
        %v760 = vmul.f32 %v737, %v759
        %v761 = vsub.f32 1.0, %v760
        %v762 = vmul.f32 %v759, %v761
        %v763 = vadd.f32 %v759, %v762
        %vm764 = vweird.f32 %v737
        %vm765 = vweird.f32 %v759
        %vm766 = vmor %vm764, %vm765
        %v767 = vsel %vm766, %v759, %v763
        %v768 = vand.u32 2147483647, %v737
        %vm769 = vcmp.eq.f32.partialorder %v768, 8.507059e+37
        %v770 = vand.u32 %v737, 2147483648
        %v771 = vor.u32 1.1754944e-38, %v770
        %v772 = vsel %vm769, %v771, %v767
        %v773 = vmul.f32 %v727, %v772
        %v774 = vrcp.pop %v740
        %v775 = vmul.f32 %v740, %v774
        %v776 = vsub.f32 1.0, %v775
        %v777 = vmul.f32 %v774, %v776
        %v778 = vadd.f32 %v774, %v777
        %vm779 = vweird.f32 %v740
        %vm780 = vweird.f32 %v774
        %vm781 = vmor %vm779, %vm780
        %v782 = vsel %vm781, %v774, %v778
        %v783 = vand.u32 2147483647, %v740
        %vm784 = vcmp.eq.f32.partialorder %v783, 8.507059e+37
        %v785 = vand.u32 %v740, 2147483648
        %v786 = vor.u32 1.1754944e-38, %v785
        %v787 = vsel %vm784, %v786, %v782
        %v788 = vmul.f32 %v729, %v787
        %v789 = vrcp.pop %v743
        %v790 = vmul.f32 %v743, %v789
        %v791 = vsub.f32 1.0, %v790
        %v792 = vmul.f32 %v789, %v791
        %v793 = vadd.f32 %v789, %v792
        %vm794 = vweird.f32 %v743
        %vm795 = vweird.f32 %v789
        %vm796 = vmor %vm794, %vm795
        %v797 = vsel %vm796, %v789, %v793
        %v798 = vand.u32 2147483647, %v743
        %vm799 = vcmp.eq.f32.partialorder %v798, 8.507059e+37
        %v800 = vand.u32 %v743, 2147483648
        %v801 = vor.u32 1.1754944e-38, %v800
        %v802 = vsel %vm799, %v801, %v797
        %v803 = vmul.f32 %v731, %v802
        %804 = vrot.lane.b32.xlu0 %v379, 56
        %v805 = vpop.permute.xlu0 %804
        %806 = vrot.lane.b32.xlu0 %v382, 56
        %v807 = vpop.permute.xlu0 %806
        %808 = vrot.lane.b32.xlu0 %v385, 56
        %v809 = vpop.permute.xlu0 %808
        %810 = vrot.lane.b32.xlu0 %v388, 56
        %v811 = vpop.permute.xlu0 %810
        %v817 = vsel %vm348, %v758, 0
        %v820 = vsel %vm348, %v773, 0
        %v823 = vsel %vm348, %v788, 0
        %v826 = vsel %vm348, %v803, 0
        %828 = vmatpush.msra.mxu0 0.0
        %829 = vmatpush.msra.mxu0 0.0
        %830 = vmatpush.msra.mxu0 0.0
        %831 = vmatpush.msra.mxu0 0.0
        %832 = vmatpush.msra.mxu0 0.0
        %833 = vmatpush.msra.mxu0 0.0
        %834 = vmatpush.msra.mxu0 0.0
        %835 = vmatpush.msra.mxu0 0.0
        %836 = vmatpush.msra.mxu0 0.0
        %837 = vmatpush.msra.mxu0 0.0
        %838 = vmatpush.msra.mxu0 0.0
        %839 = vmatpush.msra.mxu0 0.0
        %840 = vmatpush.msra.mxu0 %v811
        %841 = vmatpush.msra.mxu0 %v809
        %842 = vmatpush.msra.mxu0 %v807
        %843 = vmatpush.msra.mxu0 %v805
        %844 = vmatmul.f32.gmra.mxu0 %v817
        %v845 = vpop.f32.mrf.mxu0
        %v846 = vadd.f32 0.0, %v845
        %847 = vmatmul.f32.gmra.mxu0 %v820
        %v848 = vpop.f32.mrf.mxu0
        %v849 = vadd.f32 0.0, %v848
        %850 = vmatmul.f32.gmra.mxu0 %v823
        %v851 = vpop.f32.mrf.mxu0
        %v852 = vadd.f32 0.0, %v851
        %853 = vmatmul.f32.gmra.mxu0 %v826
        %v854 = vpop.f32.mrf.mxu0
        %v855 = vadd.f32 0.0, %v854
        %856 = vdwg.mxu0
        %858 = vrot.lane.b32.xlu0 %v344, 32
        %v859 = vpop.permute.xlu0 %858
        %v862 = vsel %vm403, %v846, 0
        %v865 = vsel %vm403, %v849, 0
        %v868 = vsel %vm403, %v852, 0
        %v871 = vsel %vm403, %v855, 0
        %873 = vmatpush.msra.mxu0 0.0
        %874 = vmatpush.msra.mxu0 0.0
        %875 = vmatpush.msra.mxu0 0.0
        %876 = vmatpush.msra.mxu0 0.0
        %877 = vmatpush.msra.mxu0 0.0
        %878 = vmatpush.msra.mxu0 0.0
        %879 = vmatpush.msra.mxu0 0.0
        %880 = vmatpush.msra.mxu0 0.0
        %881 = vmatpush.msra.mxu0 0.0
        %882 = vmatpush.msra.mxu0 0.0
        %883 = vmatpush.msra.mxu0 0.0
        %884 = vmatpush.msra.mxu0 0.0
        %885 = vmatpush.msra.mxu0 0.0
        %886 = vmatpush.msra.mxu0 0.0
        %887 = vmatpush.msra.mxu0 0.0
        %888 = vmatpush.msra.mxu0 %v859
        %889 = vmatmul.f32.gmra.mxu0 %v862
        %v890 = vpop.f32.mrf.mxu0
        %v891 = vadd.f32 0.0, %v890
        %892 = vmatmul.f32.gmra.mxu0 %v865
        %v893 = vpop.f32.mrf.mxu0
        %v894 = vadd.f32 0.0, %v893
        %895 = vmatmul.f32.gmra.mxu0 %v868
        %v896 = vpop.f32.mrf.mxu0
        %v897 = vadd.f32 0.0, %v896
        %898 = vmatmul.f32.gmra.mxu0 %v871
        %v899 = vpop.f32.mrf.mxu0
        %v900 = vadd.f32 0.0, %v899
        %901 = vdwg.mxu0
        %v902 = vadd.f32 %v643, %v891
        %v903 = vadd.f32 %v644, %v894
        %v904 = vadd.f32 %v645, %v897
        %v905 = vadd.f32 %v646, %v900
        %906 = vrot.lane.b32.xlu0 %v379, 112
        %v907 = vpop.permute.xlu0 %906
        %908 = vrot.lane.b32.xlu0 %v382, 112
        %v909 = vpop.permute.xlu0 %908
        %910 = vrot.lane.b32.xlu0 %v385, 112
        %v911 = vpop.permute.xlu0 %910
        %912 = vrot.lane.b32.xlu0 %v388, 112
        %v913 = vpop.permute.xlu0 %912
        %914 = vrot.lane.b32.xlu0 %v379, 80
        %v915 = vpop.permute.xlu0 %914
        %916 = vrot.lane.b32.xlu0 %v382, 80
        %v917 = vpop.permute.xlu0 %916
        %918 = vrot.lane.b32.xlu0 %v385, 80
        %v919 = vpop.permute.xlu0 %918
        %920 = vrot.lane.b32.xlu0 %v388, 80
        %v921 = vpop.permute.xlu0 %920
        %v922 = vsel %vm403, %v907, 0
        %v924 = vsel %vm403, %v909, 0
        %v926 = vsel %vm403, %v911, 0
        %v928 = vsel %vm403, %v913, 0
        %v930 = vsel %vm403, %v915, 0
        %v932 = vsel %vm403, %v917, 0
        %v934 = vsel %vm403, %v919, 0
        %v936 = vsel %vm403, %v921, 0
        %938 = vmatpush.xpose.msra.mxu0 0.0
        %939 = vmatpush.xpose.msra.mxu0 0.0
        %940 = vmatpush.xpose.msra.mxu0 0.0
        %941 = vmatpush.xpose.msra.mxu0 0.0
        %942 = vmatpush.xpose.msra.mxu0 0.0
        %943 = vmatpush.xpose.msra.mxu0 0.0
        %944 = vmatpush.xpose.msra.mxu0 0.0
        %945 = vmatpush.xpose.msra.mxu0 0.0
        %946 = vmatpush.xpose.msra.mxu0 0.0
        %947 = vmatpush.xpose.msra.mxu0 0.0
        %948 = vmatpush.xpose.msra.mxu0 0.0
        %949 = vmatpush.xpose.msra.mxu0 0.0
        %950 = vmatpush.xpose.msra.mxu0 %v936
        %951 = vmatpush.xpose.msra.mxu0 %v934
        %952 = vmatpush.xpose.msra.mxu0 %v932
        %953 = vmatpush.xpose.msra.mxu0 %v930
        %954 = vmatmul.f32.gmra.mxu0 %v922
        %v955 = vpop.f32.mrf.mxu0
        %v956 = vadd.f32 0.0, %v955
        %957 = vmatmul.f32.gmra.mxu0 %v924
        %v958 = vpop.f32.mrf.mxu0
        %v959 = vadd.f32 0.0, %v958
        %960 = vmatmul.f32.gmra.mxu0 %v926
        %v961 = vpop.f32.mrf.mxu0
        %v962 = vadd.f32 0.0, %v961
        %963 = vmatmul.f32.gmra.mxu0 %v928
        %v964 = vpop.f32.mrf.mxu0
        %v965 = vadd.f32 0.0, %v964
        %966 = vdwg.mxu0
        %v967 = vsel %vm348, %v956, -inf
        %968 = vmax.xlane.f32.xlu0 %v967
        %v969 = vpop.xlane.xlu0 %968
        %v970 = vsel %vm348, %v959, -inf
        %971 = vmax.xlane.f32.xlu0 %v970
        %v972 = vpop.xlane.xlu0 %971
        %v973 = vsel %vm348, %v962, -inf
        %974 = vmax.xlane.f32.xlu0 %v973
        %v975 = vpop.xlane.xlu0 %974
        %v976 = vsel %vm348, %v965, -inf
        %977 = vmax.xlane.f32.xlu0 %v976
        %v978 = vpop.xlane.xlu0 %977
        %v979 = vsub.f32 %v956, %v969
        %v980 = vsub.f32 %v959, %v972
        %v981 = vsub.f32 %v962, %v975
        %v982 = vsub.f32 %v965, %v978
        %v983 = vmul.f32 %v979, 1.442695
        %v984 = vpow.pop %v983
        %v985 = vmul.f32 %v980, 1.442695
        %v986 = vpow.pop %v985
        %v987 = vmul.f32 %v981, 1.442695
        %v988 = vpow.pop %v987
        %v989 = vmul.f32 %v982, 1.442695
        %v990 = vpow.pop %v989
        %v991 = vsel %vm348, %v984, 0.0
        %992 = vadd.xlane.f32.xlu0 %v991
        %v993 = vpop.xlane.xlu0 %992
        %v994 = vsel %vm348, %v986, 0.0
        %995 = vadd.xlane.f32.xlu0 %v994
        %v996 = vpop.xlane.xlu0 %995
        %v997 = vsel %vm348, %v988, 0.0
        %998 = vadd.xlane.f32.xlu0 %v997
        %v999 = vpop.xlane.xlu0 %998
        %v1000 = vsel %vm348, %v990, 0.0
        %1001 = vadd.xlane.f32.xlu0 %v1000
        %v1002 = vpop.xlane.xlu0 %1001
        %v1003 = vrcp.pop %v993
        %v1004 = vmul.f32 %v993, %v1003
        %v1005 = vsub.f32 1.0, %v1004
        %v1006 = vmul.f32 %v1003, %v1005
        %v1007 = vadd.f32 %v1003, %v1006
        %vm1008 = vweird.f32 %v993
        %vm1009 = vweird.f32 %v1003
        %vm1010 = vmor %vm1008, %vm1009
        %v1011 = vsel %vm1010, %v1003, %v1007
        %v1012 = vand.u32 2147483647, %v993
        %vm1013 = vcmp.eq.f32.partialorder %v1012, 8.507059e+37
        %v1014 = vand.u32 %v993, 2147483648
        %v1015 = vor.u32 1.1754944e-38, %v1014
        %v1016 = vsel %vm1013, %v1015, %v1011
        %v1017 = vmul.f32 %v984, %v1016
        %v1018 = vrcp.pop %v996
        %v1019 = vmul.f32 %v996, %v1018
        %v1020 = vsub.f32 1.0, %v1019
        %v1021 = vmul.f32 %v1018, %v1020
        %v1022 = vadd.f32 %v1018, %v1021
        %vm1023 = vweird.f32 %v996
        %vm1024 = vweird.f32 %v1018
        %vm1025 = vmor %vm1023, %vm1024
        %v1026 = vsel %vm1025, %v1018, %v1022
        %v1027 = vand.u32 2147483647, %v996
        %vm1028 = vcmp.eq.f32.partialorder %v1027, 8.507059e+37
        %v1029 = vand.u32 %v996, 2147483648
        %v1030 = vor.u32 1.1754944e-38, %v1029
        %v1031 = vsel %vm1028, %v1030, %v1026
        %v1032 = vmul.f32 %v986, %v1031
        %v1033 = vrcp.pop %v999
        %v1034 = vmul.f32 %v999, %v1033
        %v1035 = vsub.f32 1.0, %v1034
        %v1036 = vmul.f32 %v1033, %v1035
        %v1037 = vadd.f32 %v1033, %v1036
        %vm1038 = vweird.f32 %v999
        %vm1039 = vweird.f32 %v1033
        %vm1040 = vmor %vm1038, %vm1039
        %v1041 = vsel %vm1040, %v1033, %v1037
        %v1042 = vand.u32 2147483647, %v999
        %vm1043 = vcmp.eq.f32.partialorder %v1042, 8.507059e+37
        %v1044 = vand.u32 %v999, 2147483648
        %v1045 = vor.u32 1.1754944e-38, %v1044
        %v1046 = vsel %vm1043, %v1045, %v1041
        %v1047 = vmul.f32 %v988, %v1046
        %v1048 = vrcp.pop %v1002
        %v1049 = vmul.f32 %v1002, %v1048
        %v1050 = vsub.f32 1.0, %v1049
        %v1051 = vmul.f32 %v1048, %v1050
        %v1052 = vadd.f32 %v1048, %v1051
        %vm1053 = vweird.f32 %v1002
        %vm1054 = vweird.f32 %v1048
        %vm1055 = vmor %vm1053, %vm1054
        %v1056 = vsel %vm1055, %v1048, %v1052
        %v1057 = vand.u32 2147483647, %v1002
        %vm1058 = vcmp.eq.f32.partialorder %v1057, 8.507059e+37
        %v1059 = vand.u32 %v1002, 2147483648
        %v1060 = vor.u32 1.1754944e-38, %v1059
        %v1061 = vsel %vm1058, %v1060, %v1056
        %v1062 = vmul.f32 %v990, %v1061
        %1063 = vrot.lane.b32.xlu0 %v379, 48
        %v1064 = vpop.permute.xlu0 %1063
        %1065 = vrot.lane.b32.xlu0 %v382, 48
        %v1066 = vpop.permute.xlu0 %1065
        %1067 = vrot.lane.b32.xlu0 %v385, 48
        %v1068 = vpop.permute.xlu0 %1067
        %1069 = vrot.lane.b32.xlu0 %v388, 48
        %v1070 = vpop.permute.xlu0 %1069
        %v1076 = vsel %vm348, %v1017, 0
        %v1079 = vsel %vm348, %v1032, 0
        %v1082 = vsel %vm348, %v1047, 0
        %v1085 = vsel %vm348, %v1062, 0
        %1087 = vmatpush.msra.mxu0 0.0
        %1088 = vmatpush.msra.mxu0 0.0
        %1089 = vmatpush.msra.mxu0 0.0
        %1090 = vmatpush.msra.mxu0 0.0
        %1091 = vmatpush.msra.mxu0 0.0
        %1092 = vmatpush.msra.mxu0 0.0
        %1093 = vmatpush.msra.mxu0 0.0
        %1094 = vmatpush.msra.mxu0 0.0
        %1095 = vmatpush.msra.mxu0 0.0
        %1096 = vmatpush.msra.mxu0 0.0
        %1097 = vmatpush.msra.mxu0 0.0
        %1098 = vmatpush.msra.mxu0 0.0
        %1099 = vmatpush.msra.mxu0 %v1070
        %1100 = vmatpush.msra.mxu0 %v1068
        %1101 = vmatpush.msra.mxu0 %v1066
        %1102 = vmatpush.msra.mxu0 %v1064
        %1103 = vmatmul.f32.gmra.mxu0 %v1076
        %v1104 = vpop.f32.mrf.mxu0
        %v1105 = vadd.f32 0.0, %v1104
        %1106 = vmatmul.f32.gmra.mxu0 %v1079
        %v1107 = vpop.f32.mrf.mxu0
        %v1108 = vadd.f32 0.0, %v1107
        %1109 = vmatmul.f32.gmra.mxu0 %v1082
        %v1110 = vpop.f32.mrf.mxu0
        %v1111 = vadd.f32 0.0, %v1110
        %1112 = vmatmul.f32.gmra.mxu0 %v1085
        %v1113 = vpop.f32.mrf.mxu0
        %v1114 = vadd.f32 0.0, %v1113
        %1115 = vdwg.mxu0
        %1117 = vrot.lane.b32.xlu0 %v345, 32
        %v1118 = vpop.permute.xlu0 %1117
        %v1121 = vsel %vm403, %v1105, 0
        %v1124 = vsel %vm403, %v1108, 0
        %v1127 = vsel %vm403, %v1111, 0
        %v1130 = vsel %vm403, %v1114, 0
        %1132 = vmatpush.msra.mxu0 0.0
        %1133 = vmatpush.msra.mxu0 0.0
        %1134 = vmatpush.msra.mxu0 0.0
        %1135 = vmatpush.msra.mxu0 0.0
        %1136 = vmatpush.msra.mxu0 0.0
        %1137 = vmatpush.msra.mxu0 0.0
        %1138 = vmatpush.msra.mxu0 0.0
        %1139 = vmatpush.msra.mxu0 0.0
        %1140 = vmatpush.msra.mxu0 0.0
        %1141 = vmatpush.msra.mxu0 0.0
        %1142 = vmatpush.msra.mxu0 0.0
        %1143 = vmatpush.msra.mxu0 0.0
        %1144 = vmatpush.msra.mxu0 0.0
        %1145 = vmatpush.msra.mxu0 0.0
        %1146 = vmatpush.msra.mxu0 0.0
        %1147 = vmatpush.msra.mxu0 %v1118
        %1148 = vmatmul.f32.gmra.mxu0 %v1121
        %v1149 = vpop.f32.mrf.mxu0
        %v1150 = vadd.f32 0.0, %v1149
        %1151 = vmatmul.f32.gmra.mxu0 %v1124
        %v1152 = vpop.f32.mrf.mxu0
        %v1153 = vadd.f32 0.0, %v1152
        %1154 = vmatmul.f32.gmra.mxu0 %v1127
        %v1155 = vpop.f32.mrf.mxu0
        %v1156 = vadd.f32 0.0, %v1155
        %1157 = vmatmul.f32.gmra.mxu0 %v1130
        %v1158 = vpop.f32.mrf.mxu0
        %v1159 = vadd.f32 0.0, %v1158
        %1160 = vdwg.mxu0
        %v1161 = vadd.f32 %v902, %v1150
        %v1162 = vadd.f32 %v903, %v1153
        %v1163 = vadd.f32 %v904, %v1156
        %v1164 = vadd.f32 %v905, %v1159
        %1165 = vrot.lane.b32.xlu0 %v379, 104
        %v1166 = vpop.permute.xlu0 %1165
        %1167 = vrot.lane.b32.xlu0 %v382, 104
        %v1168 = vpop.permute.xlu0 %1167
        %1169 = vrot.lane.b32.xlu0 %v385, 104
        %v1170 = vpop.permute.xlu0 %1169
        %1171 = vrot.lane.b32.xlu0 %v388, 104
        %v1172 = vpop.permute.xlu0 %1171
        %1173 = vrot.lane.b32.xlu0 %v379, 72
        %v1174 = vpop.permute.xlu0 %1173
        %1175 = vrot.lane.b32.xlu0 %v382, 72
        %v1176 = vpop.permute.xlu0 %1175
        %1177 = vrot.lane.b32.xlu0 %v385, 72
        %v1178 = vpop.permute.xlu0 %1177
        %1179 = vrot.lane.b32.xlu0 %v388, 72
        %v1180 = vpop.permute.xlu0 %1179
        %v1181 = vsel %vm403, %v1166, 0
        %v1183 = vsel %vm403, %v1168, 0
        %v1185 = vsel %vm403, %v1170, 0
        %v1187 = vsel %vm403, %v1172, 0
        %v1189 = vsel %vm403, %v1174, 0
        %v1191 = vsel %vm403, %v1176, 0
        %v1193 = vsel %vm403, %v1178, 0
        %v1195 = vsel %vm403, %v1180, 0
        %1197 = vmatpush.xpose.msra.mxu0 0.0
        %1198 = vmatpush.xpose.msra.mxu0 0.0
        %1199 = vmatpush.xpose.msra.mxu0 0.0
        %1200 = vmatpush.xpose.msra.mxu0 0.0
        %1201 = vmatpush.xpose.msra.mxu0 0.0
        %1202 = vmatpush.xpose.msra.mxu0 0.0
        %1203 = vmatpush.xpose.msra.mxu0 0.0
        %1204 = vmatpush.xpose.msra.mxu0 0.0
        %1205 = vmatpush.xpose.msra.mxu0 0.0
        %1206 = vmatpush.xpose.msra.mxu0 0.0
        %1207 = vmatpush.xpose.msra.mxu0 0.0
        %1208 = vmatpush.xpose.msra.mxu0 0.0
        %1209 = vmatpush.xpose.msra.mxu0 %v1195
        %1210 = vmatpush.xpose.msra.mxu0 %v1193
        %1211 = vmatpush.xpose.msra.mxu0 %v1191
        %1212 = vmatpush.xpose.msra.mxu0 %v1189
        %1213 = vmatmul.f32.gmra.mxu0 %v1181
        %v1214 = vpop.f32.mrf.mxu0
        %v1215 = vadd.f32 0.0, %v1214
        %1216 = vmatmul.f32.gmra.mxu0 %v1183
        %v1217 = vpop.f32.mrf.mxu0
        %v1218 = vadd.f32 0.0, %v1217
        %1219 = vmatmul.f32.gmra.mxu0 %v1185
        %v1220 = vpop.f32.mrf.mxu0
        %v1221 = vadd.f32 0.0, %v1220
        %1222 = vmatmul.f32.gmra.mxu0 %v1187
        %v1223 = vpop.f32.mrf.mxu0
        %v1224 = vadd.f32 0.0, %v1223
        %1225 = vdwg.mxu0
        %v1226 = vsel %vm348, %v1215, -inf
        %1227 = vmax.xlane.f32.xlu0 %v1226
        %v1228 = vpop.xlane.xlu0 %1227
        %v1229 = vsel %vm348, %v1218, -inf
        %1230 = vmax.xlane.f32.xlu0 %v1229
        %v1231 = vpop.xlane.xlu0 %1230
        %v1232 = vsel %vm348, %v1221, -inf
        %1233 = vmax.xlane.f32.xlu0 %v1232
        %v1234 = vpop.xlane.xlu0 %1233
        %v1235 = vsel %vm348, %v1224, -inf
        %1236 = vmax.xlane.f32.xlu0 %v1235
        %v1237 = vpop.xlane.xlu0 %1236
        %v1238 = vsub.f32 %v1215, %v1228
        %v1239 = vsub.f32 %v1218, %v1231
        %v1240 = vsub.f32 %v1221, %v1234
        %v1241 = vsub.f32 %v1224, %v1237
        %v1242 = vmul.f32 %v1238, 1.442695
        %v1243 = vpow.pop %v1242
        %v1244 = vmul.f32 %v1239, 1.442695
        %v1245 = vpow.pop %v1244
        %v1246 = vmul.f32 %v1240, 1.442695
        %v1247 = vpow.pop %v1246
        %v1248 = vmul.f32 %v1241, 1.442695
        %v1249 = vpow.pop %v1248
        %v1250 = vsel %vm348, %v1243, 0.0
        %1251 = vadd.xlane.f32.xlu0 %v1250
        %v1252 = vpop.xlane.xlu0 %1251
        %v1253 = vsel %vm348, %v1245, 0.0
        %1254 = vadd.xlane.f32.xlu0 %v1253
        %v1255 = vpop.xlane.xlu0 %1254
        %v1256 = vsel %vm348, %v1247, 0.0
        %1257 = vadd.xlane.f32.xlu0 %v1256
        %v1258 = vpop.xlane.xlu0 %1257
        %v1259 = vsel %vm348, %v1249, 0.0
        %1260 = vadd.xlane.f32.xlu0 %v1259
        %v1261 = vpop.xlane.xlu0 %1260
        %v1262 = vrcp.pop %v1252
        %v1263 = vmul.f32 %v1252, %v1262
        %v1264 = vsub.f32 1.0, %v1263
        %v1265 = vmul.f32 %v1262, %v1264
        %v1266 = vadd.f32 %v1262, %v1265
        %vm1267 = vweird.f32 %v1252
        %vm1268 = vweird.f32 %v1262
        %vm1269 = vmor %vm1267, %vm1268
        %v1270 = vsel %vm1269, %v1262, %v1266
        %v1271 = vand.u32 2147483647, %v1252
        %vm1272 = vcmp.eq.f32.partialorder %v1271, 8.507059e+37
        %v1273 = vand.u32 %v1252, 2147483648
        %v1274 = vor.u32 1.1754944e-38, %v1273
        %v1275 = vsel %vm1272, %v1274, %v1270
        %v1276 = vmul.f32 %v1243, %v1275
        %v1277 = vrcp.pop %v1255
        %v1278 = vmul.f32 %v1255, %v1277
        %v1279 = vsub.f32 1.0, %v1278
        %v1280 = vmul.f32 %v1277, %v1279
        %v1281 = vadd.f32 %v1277, %v1280
        %vm1282 = vweird.f32 %v1255
        %vm1283 = vweird.f32 %v1277
        %vm1284 = vmor %vm1282, %vm1283
        %v1285 = vsel %vm1284, %v1277, %v1281
        %v1286 = vand.u32 2147483647, %v1255
        %vm1287 = vcmp.eq.f32.partialorder %v1286, 8.507059e+37
        %v1288 = vand.u32 %v1255, 2147483648
        %v1289 = vor.u32 1.1754944e-38, %v1288
        %v1290 = vsel %vm1287, %v1289, %v1285
        %v1291 = vmul.f32 %v1245, %v1290
        %v1292 = vrcp.pop %v1258
        %v1293 = vmul.f32 %v1258, %v1292
        %v1294 = vsub.f32 1.0, %v1293
        %v1295 = vmul.f32 %v1292, %v1294
        %v1296 = vadd.f32 %v1292, %v1295
        %vm1297 = vweird.f32 %v1258
        %vm1298 = vweird.f32 %v1292
        %vm1299 = vmor %vm1297, %vm1298
        %v1300 = vsel %vm1299, %v1292, %v1296
        %v1301 = vand.u32 2147483647, %v1258
        %vm1302 = vcmp.eq.f32.partialorder %v1301, 8.507059e+37
        %v1303 = vand.u32 %v1258, 2147483648
        %v1304 = vor.u32 1.1754944e-38, %v1303
        %v1305 = vsel %vm1302, %v1304, %v1300
        %v1306 = vmul.f32 %v1247, %v1305
        %v1307 = vrcp.pop %v1261
        %v1308 = vmul.f32 %v1261, %v1307
        %v1309 = vsub.f32 1.0, %v1308
        %v1310 = vmul.f32 %v1307, %v1309
        %v1311 = vadd.f32 %v1307, %v1310
        %vm1312 = vweird.f32 %v1261
        %vm1313 = vweird.f32 %v1307
        %vm1314 = vmor %vm1312, %vm1313
        %v1315 = vsel %vm1314, %v1307, %v1311
        %v1316 = vand.u32 2147483647, %v1261
        %vm1317 = vcmp.eq.f32.partialorder %v1316, 8.507059e+37
        %v1318 = vand.u32 %v1261, 2147483648
        %v1319 = vor.u32 1.1754944e-38, %v1318
        %v1320 = vsel %vm1317, %v1319, %v1315
        %v1321 = vmul.f32 %v1249, %v1320
        %1322 = vrot.lane.b32.xlu0 %v379, 40
        %v1323 = vpop.permute.xlu0 %1322
        %1324 = vrot.lane.b32.xlu0 %v382, 40
        %v1325 = vpop.permute.xlu0 %1324
        %1326 = vrot.lane.b32.xlu0 %v385, 40
        %v1327 = vpop.permute.xlu0 %1326
        %1328 = vrot.lane.b32.xlu0 %v388, 40
        %v1329 = vpop.permute.xlu0 %1328
        %v1335 = vsel %vm348, %v1276, 0
        %v1338 = vsel %vm348, %v1291, 0
        %v1341 = vsel %vm348, %v1306, 0
        %v1344 = vsel %vm348, %v1321, 0
        %1346 = vmatpush.msra.mxu0 0.0
        %1347 = vmatpush.msra.mxu0 0.0
        %1348 = vmatpush.msra.mxu0 0.0
        %1349 = vmatpush.msra.mxu0 0.0
        %1350 = vmatpush.msra.mxu0 0.0
        %1351 = vmatpush.msra.mxu0 0.0
        %1352 = vmatpush.msra.mxu0 0.0
        %1353 = vmatpush.msra.mxu0 0.0
        %1354 = vmatpush.msra.mxu0 0.0
        %1355 = vmatpush.msra.mxu0 0.0
        %1356 = vmatpush.msra.mxu0 0.0
        %1357 = vmatpush.msra.mxu0 0.0
        %1358 = vmatpush.msra.mxu0 %v1329
        %1359 = vmatpush.msra.mxu0 %v1327
        %1360 = vmatpush.msra.mxu0 %v1325
        %1361 = vmatpush.msra.mxu0 %v1323
        %1362 = vmatmul.f32.gmra.mxu0 %v1335
        %v1363 = vpop.f32.mrf.mxu0
        %v1364 = vadd.f32 0.0, %v1363
        %1365 = vmatmul.f32.gmra.mxu0 %v1338
        %v1366 = vpop.f32.mrf.mxu0
        %v1367 = vadd.f32 0.0, %v1366
        %1368 = vmatmul.f32.gmra.mxu0 %v1341
        %v1369 = vpop.f32.mrf.mxu0
        %v1370 = vadd.f32 0.0, %v1369
        %1371 = vmatmul.f32.gmra.mxu0 %v1344
        %v1372 = vpop.f32.mrf.mxu0
        %v1373 = vadd.f32 0.0, %v1372
        %1374 = vdwg.mxu0
        %1376 = vrot.lane.b32.xlu0 %v346, 32
        %v1377 = vpop.permute.xlu0 %1376
        %v1380 = vsel %vm403, %v1364, 0
        %v1383 = vsel %vm403, %v1367, 0
        %v1386 = vsel %vm403, %v1370, 0
        %v1389 = vsel %vm403, %v1373, 0
        %1391 = vmatpush.msra.mxu0 0.0
        %1392 = vmatpush.msra.mxu0 0.0
        %1393 = vmatpush.msra.mxu0 0.0
        %1394 = vmatpush.msra.mxu0 0.0
        %1395 = vmatpush.msra.mxu0 0.0
        %1396 = vmatpush.msra.mxu0 0.0
        %1397 = vmatpush.msra.mxu0 0.0
        %1398 = vmatpush.msra.mxu0 0.0
        %1399 = vmatpush.msra.mxu0 0.0
        %1400 = vmatpush.msra.mxu0 0.0
        %1401 = vmatpush.msra.mxu0 0.0
        %1402 = vmatpush.msra.mxu0 0.0
        %1403 = vmatpush.msra.mxu0 0.0
        %1404 = vmatpush.msra.mxu0 0.0
        %1405 = vmatpush.msra.mxu0 0.0
        %1406 = vmatpush.msra.mxu0 %v1377
        %1407 = vmatmul.f32.gmra.mxu0 %v1380
        %v1408 = vpop.f32.mrf.mxu0
        %v1409 = vadd.f32 0.0, %v1408
        %1410 = vmatmul.f32.gmra.mxu0 %v1383
        %v1411 = vpop.f32.mrf.mxu0
        %v1412 = vadd.f32 0.0, %v1411
        %1413 = vmatmul.f32.gmra.mxu0 %v1386
        %v1414 = vpop.f32.mrf.mxu0
        %v1415 = vadd.f32 0.0, %v1414
        %1416 = vmatmul.f32.gmra.mxu0 %v1389
        %v1417 = vpop.f32.mrf.mxu0
        %v1418 = vadd.f32 0.0, %v1417
        %1419 = vdwg.mxu0
        %v1420 = vadd.f32 %v1161, %v1409
        %v1421 = vadd.f32 %v1162, %v1412
        %v1422 = vadd.f32 %v1163, %v1415
        %v1423 = vadd.f32 %v1164, %v1418
        %v1424 = vld [vmem:[%s2] sm:$0xff]
        %v1425 = vld [vmem:[%s2 + $0x8] sm:$0xff]
        %v1426 = vld [vmem:[%s2 + $0x10] sm:$0xff]
        %v1427 = vld [vmem:[%s2 + $0x18] sm:$0xff]
        %v1428 = vld [vmem:[%s3] sm:$0xff]
        %v1429 = vld [vmem:[%s3 + $0x8] sm:$0xff]
        %v1430 = vld [vmem:[%s3 + $0x10] sm:$0xff]
        %v1431 = vld [vmem:[%s3 + $0x18] sm:$0xff]
        %v1432 = vld [vmem:[%s3 + $0x20] sm:$0xff]
        %v1433 = vld [vmem:[%s3 + $0x28] sm:$0xff]
        %v1434 = vld [vmem:[%s3 + $0x30] sm:$0xff]
        %v1435 = vld [vmem:[%s3 + $0x38] sm:$0xff]
        %v1436 = vadd.f32 %v226, %v1420
        %v1437 = vadd.f32 %v227, %v1421
        %v1438 = vadd.f32 %v228, %v1422
        %v1439 = vadd.f32 %v229, %v1423
        %v1440 = vsel %vm348, %v1436, 0.0
        %1441 = vadd.xlane.f32.xlu0 %v1440
        %v1442 = vpop.xlane.xlu0 %1441
        %v1443 = vsel %vm348, %v1437, 0.0
        %1444 = vadd.xlane.f32.xlu0 %v1443
        %v1445 = vpop.xlane.xlu0 %1444
        %v1446 = vsel %vm348, %v1438, 0.0
        %1447 = vadd.xlane.f32.xlu0 %v1446
        %v1448 = vpop.xlane.xlu0 %1447
        %v1449 = vsel %vm348, %v1439, 0.0
        %1450 = vadd.xlane.f32.xlu0 %v1449
        %v1451 = vpop.xlane.xlu0 %1450
        %v1452 = vrcp.pop 32.0
        %v1453 = vmul.f32 32.0, %v1452
        %v1454 = vsub.f32 1.0, %v1453
        %v1455 = vmul.f32 %v1452, %v1454
        %v1456 = vadd.f32 %v1452, %v1455
        %vm1457 = vweird.f32 %v1452
        %v1458 = vsel %vm1457, %v1452, %v1456
        %v1459 = vmul.f32 %v1442, %v1458
        %v1460 = vmul.f32 %v1445, %v1458
        %v1461 = vmul.f32 %v1448, %v1458
        %v1462 = vmul.f32 %v1451, %v1458
        %v1463 = vsub.f32 %v1436, %v1459
        %v1464 = vsub.f32 %v1437, %v1460
        %v1465 = vsub.f32 %v1438, %v1461
        %v1466 = vsub.f32 %v1439, %v1462
        %v1467 = vmul.f32 %v1463, %v1463
        %v1468 = vmul.f32 %v1464, %v1464
        %v1469 = vmul.f32 %v1465, %v1465
        %v1470 = vmul.f32 %v1466, %v1466
        %v1471 = vsel %vm348, %v1467, 0.0
        %1472 = vadd.xlane.f32.xlu0 %v1471
        %v1473 = vpop.xlane.xlu0 %1472
        %v1474 = vsel %vm348, %v1468, 0.0
        %1475 = vadd.xlane.f32.xlu0 %v1474
        %v1476 = vpop.xlane.xlu0 %1475
        %v1477 = vsel %vm348, %v1469, 0.0
        %1478 = vadd.xlane.f32.xlu0 %v1477
        %v1479 = vpop.xlane.xlu0 %1478
        %v1480 = vsel %vm348, %v1470, 0.0
        %1481 = vadd.xlane.f32.xlu0 %v1480
        %v1482 = vpop.xlane.xlu0 %1481
        %v1483 = vmul.f32 %v1473, %v1458
        %v1484 = vmul.f32 %v1476, %v1458
        %v1485 = vmul.f32 %v1479, %v1458
        %v1486 = vmul.f32 %v1482, %v1458
        %v1487 = vadd.f32 %v1483, 1e-05
        %v1488 = vadd.f32 %v1484, 1e-05
        %v1489 = vadd.f32 %v1485, 1e-05
        %v1490 = vadd.f32 %v1486, 1e-05
        %v1491 = vrsqrt.pop %v1487
        %v1492 = vmul.f32 %v1491, %v1487
        %v1493 = vmul.f32 %v1492, %v1491
        %v1494 = vmul.f32 0.5, %v1493
        %v1495 = vsub.f32 1.5, %v1494
        %v1496 = vmul.f32 %v1491, %v1495
        %vm1497 = vweird.f32 %v1487
        %vm1498 = vweird.f32 %v1491
        %vm1499 = vmor %vm1497, %vm1498
        %v1500 = vsel %vm1499, %v1491, %v1496
        %v1501 = vrsqrt.pop %v1488
        %v1502 = vmul.f32 %v1501, %v1488
        %v1503 = vmul.f32 %v1502, %v1501
        %v1504 = vmul.f32 0.5, %v1503
        %v1505 = vsub.f32 1.5, %v1504
        %v1506 = vmul.f32 %v1501, %v1505
        %vm1507 = vweird.f32 %v1488
        %vm1508 = vweird.f32 %v1501
        %vm1509 = vmor %vm1507, %vm1508
        %v1510 = vsel %vm1509, %v1501, %v1506
        %v1511 = vrsqrt.pop %v1489
        %v1512 = vmul.f32 %v1511, %v1489
        %v1513 = vmul.f32 %v1512, %v1511
        %v1514 = vmul.f32 0.5, %v1513
        %v1515 = vsub.f32 1.5, %v1514
        %v1516 = vmul.f32 %v1511, %v1515
        %vm1517 = vweird.f32 %v1489
        %vm1518 = vweird.f32 %v1511
        %vm1519 = vmor %vm1517, %vm1518
        %v1520 = vsel %vm1519, %v1511, %v1516
        %v1521 = vrsqrt.pop %v1490
        %v1522 = vmul.f32 %v1521, %v1490
        %v1523 = vmul.f32 %v1522, %v1521
        %v1524 = vmul.f32 0.5, %v1523
        %v1525 = vsub.f32 1.5, %v1524
        %v1526 = vmul.f32 %v1521, %v1525
        %vm1527 = vweird.f32 %v1490
        %vm1528 = vweird.f32 %v1521
        %vm1529 = vmor %vm1527, %vm1528
        %v1530 = vsel %vm1529, %v1521, %v1526
        %v1531 = vmul.f32 %v1463, %v1500
        %v1532 = vmul.f32 %v1464, %v1510
        %v1533 = vmul.f32 %v1465, %v1520
        %v1534 = vmul.f32 %v1466, %v1530
        %v1535 = vperm.slane %v230, 7
        %v1536 = vmul.f32 %v1531, %v1535
        %v1537 = vmul.f32 %v1532, %v1535
        %v1538 = vmul.f32 %v1533, %v1535
        %v1539 = vmul.f32 %v1534, %v1535
        %v1540 = vperm.slane %v231, 0
        %v1541 = vadd.f32 %v1536, %v1540
        %v1542 = vadd.f32 %v1537, %v1540
        %v1543 = vadd.f32 %v1538, %v1540
        %v1544 = vadd.f32 %v1539, %v1540
        %v1545 = vperm.slane %v230, 2
        %v1547 = vsel %vm348, %v1541, 0
        %v1550 = vsel %vm348, %v1542, 0
        %v1553 = vsel %vm348, %v1543, 0
        %v1556 = vsel %vm348, %v1544, 0
        %1558 = vmatpush.msra.mxu0 0.0
        %1559 = vmatpush.msra.mxu0 0.0
        %1560 = vmatpush.msra.mxu0 0.0
        %1561 = vmatpush.msra.mxu0 0.0
        %1562 = vmatpush.msra.mxu0 0.0
        %1563 = vmatpush.msra.mxu0 0.0
        %1564 = vmatpush.msra.mxu0 0.0
        %1565 = vmatpush.msra.mxu0 0.0
        %1566 = vmatpush.msra.mxu0 0.0
        %1567 = vmatpush.msra.mxu0 0.0
        %1568 = vmatpush.msra.mxu0 0.0
        %1569 = vmatpush.msra.mxu0 0.0
        %1570 = vmatpush.msra.mxu0 %v1427
        %1571 = vmatpush.msra.mxu0 %v1426
        %1572 = vmatpush.msra.mxu0 %v1425
        %1573 = vmatpush.msra.mxu0 %v1424
        %1574 = vmatmul.f32.gmra.mxu0 %v1547
        %v1575 = vpop.f32.mrf.mxu0
        %v1576 = vadd.f32 %v1545, %v1575
        %1577 = vmatmul.f32.gmra.mxu0 %v1550
        %v1578 = vpop.f32.mrf.mxu0
        %v1579 = vadd.f32 %v1545, %v1578
        %1580 = vmatmul.f32.gmra.mxu0 %v1553
        %v1581 = vpop.f32.mrf.mxu0
        %v1582 = vadd.f32 %v1545, %v1581
        %1583 = vmatmul.f32.gmra.mxu0 %v1556
        %v1584 = vpop.f32.mrf.mxu0
        %v1585 = vadd.f32 %v1545, %v1584
        %1586 = vdwg.mxu0
        %v1587 = vmax.f32 %v1576, 0.0
        %v1588 = vmax.f32 %v1579, 0.0
        %v1589 = vmax.f32 %v1582, 0.0
        %v1590 = vmax.f32 %v1585, 0.0
        %v1591 = vperm.slane %v230, 6
        %vm1592 = vcmask 523264
        %v1594 = vsel %vm1592, %v1587, 0
        %v1597 = vsel %vm1592, %v1588, 0
        %v1600 = vsel %vm1592, %v1589, 0
        %v1603 = vsel %vm1592, %v1590, 0
        %1605 = vmatpush.msra.mxu0 0.0
        %1606 = vmatpush.msra.mxu0 0.0
        %1607 = vmatpush.msra.mxu0 0.0
        %1608 = vmatpush.msra.mxu0 0.0
        %1609 = vmatpush.msra.mxu0 0.0
        %1610 = vmatpush.msra.mxu0 0.0
        %1611 = vmatpush.msra.mxu0 0.0
        %1612 = vmatpush.msra.mxu0 0.0
        %1613 = vmatpush.msra.mxu0 %v1435
        %1614 = vmatpush.msra.mxu0 %v1434
        %1615 = vmatpush.msra.mxu0 %v1433
        %1616 = vmatpush.msra.mxu0 %v1432
        %1617 = vmatpush.msra.mxu0 %v1431
        %1618 = vmatpush.msra.mxu0 %v1430
        %1619 = vmatpush.msra.mxu0 %v1429
        %1620 = vmatpush.msra.mxu0 %v1428
        %1621 = vmatmul.f32.gmra.mxu0 %v1594
        %v1622 = vpop.f32.mrf.mxu0
        %v1623 = vadd.f32 %v1591, %v1622
        %1624 = vmatmul.f32.gmra.mxu0 %v1597
        %v1625 = vpop.f32.mrf.mxu0
        %v1626 = vadd.f32 %v1591, %v1625
        %1627 = vmatmul.f32.gmra.mxu0 %v1600
        %v1628 = vpop.f32.mrf.mxu0
        %v1629 = vadd.f32 %v1591, %v1628
        %1630 = vmatmul.f32.gmra.mxu0 %v1603
        %v1631 = vpop.f32.mrf.mxu0
        %v1632 = vadd.f32 %v1591, %v1631
        %1633 = vdwg.mxu0
        %v1634 = vadd.f32 %v1541, %v1623
        %v1635 = vadd.f32 %v1542, %v1626
        %v1636 = vadd.f32 %v1543, %v1629
        %v1637 = vadd.f32 %v1544, %v1632
        %v1638 = vsel %vm348, %v1634, 0.0
        %1639 = vadd.xlane.f32.xlu0 %v1638
        %v1640 = vpop.xlane.xlu0 %1639
        %v1641 = vsel %vm348, %v1635, 0.0
        %1642 = vadd.xlane.f32.xlu0 %v1641
        %v1643 = vpop.xlane.xlu0 %1642
        %v1644 = vsel %vm348, %v1636, 0.0
        %1645 = vadd.xlane.f32.xlu0 %v1644
        %v1646 = vpop.xlane.xlu0 %1645
        %v1647 = vsel %vm348, %v1637, 0.0
        %1648 = vadd.xlane.f32.xlu0 %v1647
        %v1649 = vpop.xlane.xlu0 %1648
        %v1650 = vmul.f32 %v1640, %v1458
        %v1651 = vmul.f32 %v1643, %v1458
        %v1652 = vmul.f32 %v1646, %v1458
        %v1653 = vmul.f32 %v1649, %v1458
        %v1654 = vsub.f32 %v1634, %v1650
        %v1655 = vsub.f32 %v1635, %v1651
        %v1656 = vsub.f32 %v1636, %v1652
        %v1657 = vsub.f32 %v1637, %v1653
        %v1658 = vmul.f32 %v1654, %v1654
        %v1659 = vmul.f32 %v1655, %v1655
        %v1660 = vmul.f32 %v1656, %v1656
        %v1661 = vmul.f32 %v1657, %v1657
        %v1662 = vsel %vm348, %v1658, 0.0
        %1663 = vadd.xlane.f32.xlu0 %v1662
        %v1664 = vpop.xlane.xlu0 %1663
        %v1665 = vsel %vm348, %v1659, 0.0
        %1666 = vadd.xlane.f32.xlu0 %v1665
        %v1667 = vpop.xlane.xlu0 %1666
        %v1668 = vsel %vm348, %v1660, 0.0
        %1669 = vadd.xlane.f32.xlu0 %v1668
        %v1670 = vpop.xlane.xlu0 %1669
        %v1671 = vsel %vm348, %v1661, 0.0
        %1672 = vadd.xlane.f32.xlu0 %v1671
        %v1673 = vpop.xlane.xlu0 %1672
        %v1674 = vmul.f32 %v1664, %v1458
        %v1675 = vmul.f32 %v1667, %v1458
        %v1676 = vmul.f32 %v1670, %v1458
        %v1677 = vmul.f32 %v1673, %v1458
        %v1678 = vadd.f32 %v1674, 1e-05
        %v1679 = vadd.f32 %v1675, 1e-05
        %v1680 = vadd.f32 %v1676, 1e-05
        %v1681 = vadd.f32 %v1677, 1e-05
        %v1682 = vrsqrt.pop %v1678
        %v1683 = vmul.f32 %v1682, %v1678
        %v1684 = vmul.f32 %v1683, %v1682
        %v1685 = vmul.f32 0.5, %v1684
        %v1686 = vsub.f32 1.5, %v1685
        %v1687 = vmul.f32 %v1682, %v1686
        %vm1688 = vweird.f32 %v1678
        %vm1689 = vweird.f32 %v1682
        %vm1690 = vmor %vm1688, %vm1689
        %v1691 = vsel %vm1690, %v1682, %v1687
        %v1692 = vrsqrt.pop %v1679
        %v1693 = vmul.f32 %v1692, %v1679
        %v1694 = vmul.f32 %v1693, %v1692
        %v1695 = vmul.f32 0.5, %v1694
        %v1696 = vsub.f32 1.5, %v1695
        %v1697 = vmul.f32 %v1692, %v1696
        %vm1698 = vweird.f32 %v1679
        %vm1699 = vweird.f32 %v1692
        %vm1700 = vmor %vm1698, %vm1699
        %v1701 = vsel %vm1700, %v1692, %v1697
        %v1702 = vrsqrt.pop %v1680
        %v1703 = vmul.f32 %v1702, %v1680
        %v1704 = vmul.f32 %v1703, %v1702
        %v1705 = vmul.f32 0.5, %v1704
        %v1706 = vsub.f32 1.5, %v1705
        %v1707 = vmul.f32 %v1702, %v1706
        %vm1708 = vweird.f32 %v1680
        %vm1709 = vweird.f32 %v1702
        %vm1710 = vmor %vm1708, %vm1709
        %v1711 = vsel %vm1710, %v1702, %v1707
        %v1712 = vrsqrt.pop %v1681
        %v1713 = vmul.f32 %v1712, %v1681
        %v1714 = vmul.f32 %v1713, %v1712
        %v1715 = vmul.f32 0.5, %v1714
        %v1716 = vsub.f32 1.5, %v1715
        %v1717 = vmul.f32 %v1712, %v1716
        %vm1718 = vweird.f32 %v1681
        %vm1719 = vweird.f32 %v1712
        %vm1720 = vmor %vm1718, %vm1719
        %v1721 = vsel %vm1720, %v1712, %v1717
        %v1722 = vmul.f32 %v1654, %v1691
        %v1723 = vmul.f32 %v1655, %v1701
        %v1724 = vmul.f32 %v1656, %v1711
        %v1725 = vmul.f32 %v1657, %v1721
        %v1726 = vperm.slane %v231, 1
        %v1727 = vmul.f32 %v1722, %v1726
        %v1728 = vmul.f32 %v1723, %v1726
        %v1729 = vmul.f32 %v1724, %v1726
        %v1730 = vmul.f32 %v1725, %v1726
        %v1731 = vperm.slane %v231, 2
        %v1732 = vadd.f32 %v1727, %v1731
        %v1733 = vadd.f32 %v1728, %v1731
        %v1734 = vadd.f32 %v1729, %v1731
        %v1735 = vadd.f32 %v1730, %v1731
        %s1736 = scalar_lea.vmem %s1, 32
        %v1737 = vld [vmem:[%s1736] sm:$0xff]
        %v1738 = vld [vmem:[%s1736 + $0x8] sm:$0xff]
        %v1739 = vld [vmem:[%s1736 + $0x10] sm:$0xff]
        %v1740 = vld [vmem:[%s1736 + $0x18] sm:$0xff]
        %v1741 = vperm.slane %v230, 1
        %v1743 = vsel %vm348, %v1732, 0
        %v1746 = vsel %vm348, %v1733, 0
        %v1749 = vsel %vm348, %v1734, 0
        %v1752 = vsel %vm348, %v1735, 0
        %1754 = vmatpush.msra.mxu0 0.0
        %1755 = vmatpush.msra.mxu0 0.0
        %1756 = vmatpush.msra.mxu0 0.0
        %1757 = vmatpush.msra.mxu0 0.0
        %1758 = vmatpush.msra.mxu0 0.0
        %1759 = vmatpush.msra.mxu0 0.0
        %1760 = vmatpush.msra.mxu0 0.0
        %1761 = vmatpush.msra.mxu0 0.0
        %1762 = vmatpush.msra.mxu0 0.0
        %1763 = vmatpush.msra.mxu0 0.0
        %1764 = vmatpush.msra.mxu0 0.0
        %1765 = vmatpush.msra.mxu0 0.0
        %1766 = vmatpush.msra.mxu0 %v1740
        %1767 = vmatpush.msra.mxu0 %v1739
        %1768 = vmatpush.msra.mxu0 %v1738
        %1769 = vmatpush.msra.mxu0 %v1737
        %1770 = vmatmul.f32.gmra.mxu0 %v1743
        %v1771 = vpop.f32.mrf.mxu0
        %v1772 = vadd.f32 %v1741, %v1771
        %1773 = vmatmul.f32.gmra.mxu0 %v1746
        %v1774 = vpop.f32.mrf.mxu0
        %v1775 = vadd.f32 %v1741, %v1774
        %1776 = vmatmul.f32.gmra.mxu0 %v1749
        %v1777 = vpop.f32.mrf.mxu0
        %v1778 = vadd.f32 %v1741, %v1777
        %1779 = vmatmul.f32.gmra.mxu0 %v1752
        %v1780 = vpop.f32.mrf.mxu0
        %v1781 = vadd.f32 %v1741, %v1780
        %1782 = vdwg.mxu0
        %v1783 = vperm.slane %v230, 5
        %1788 = vrot.lane.b32.xlu0 %v1772, 96
        %v1789 = vpop.permute.xlu0 %1788
        %1790 = vrot.lane.b32.xlu0 %v1775, 96
        %v1791 = vpop.permute.xlu0 %1790
        %1792 = vrot.lane.b32.xlu0 %v1778, 96
        %v1793 = vpop.permute.xlu0 %1792
        %1794 = vrot.lane.b32.xlu0 %v1781, 96
        %v1795 = vpop.permute.xlu0 %1794
        %v1796 = vsel %vm403, %v1772, 0
        %v1798 = vsel %vm403, %v1775, 0
        %v1800 = vsel %vm403, %v1778, 0
        %v1802 = vsel %vm403, %v1781, 0
        %v1804 = vsel %vm403, %v1789, 0
        %v1806 = vsel %vm403, %v1791, 0
        %v1808 = vsel %vm403, %v1793, 0
        %v1810 = vsel %vm403, %v1795, 0
        %1812 = vmatpush.xpose.msra.mxu0 0.0
        %1813 = vmatpush.xpose.msra.mxu0 0.0
        %1814 = vmatpush.xpose.msra.mxu0 0.0
        %1815 = vmatpush.xpose.msra.mxu0 0.0
        %1816 = vmatpush.xpose.msra.mxu0 0.0
        %1817 = vmatpush.xpose.msra.mxu0 0.0
        %1818 = vmatpush.xpose.msra.mxu0 0.0
        %1819 = vmatpush.xpose.msra.mxu0 0.0
        %1820 = vmatpush.xpose.msra.mxu0 0.0
        %1821 = vmatpush.xpose.msra.mxu0 0.0
        %1822 = vmatpush.xpose.msra.mxu0 0.0
        %1823 = vmatpush.xpose.msra.mxu0 0.0
        %1824 = vmatpush.xpose.msra.mxu0 %v1810
        %1825 = vmatpush.xpose.msra.mxu0 %v1808
        %1826 = vmatpush.xpose.msra.mxu0 %v1806
        %1827 = vmatpush.xpose.msra.mxu0 %v1804
        %1828 = vmatmul.f32.gmra.mxu0 %v1796
        %v1829 = vpop.f32.mrf.mxu0
        %v1830 = vadd.f32 %v339, %v1829
        %1831 = vmatmul.f32.gmra.mxu0 %v1798
        %v1832 = vpop.f32.mrf.mxu0
        %v1833 = vadd.f32 %v340, %v1832
        %1834 = vmatmul.f32.gmra.mxu0 %v1800
        %v1835 = vpop.f32.mrf.mxu0
        %v1836 = vadd.f32 %v341, %v1835
        %1837 = vmatmul.f32.gmra.mxu0 %v1802
        %v1838 = vpop.f32.mrf.mxu0
        %v1839 = vadd.f32 %v342, %v1838
        %1840 = vdwg.mxu0
        %v1841 = vsel %vm348, %v1830, -inf
        %1842 = vmax.xlane.f32.xlu0 %v1841
        %v1843 = vpop.xlane.xlu0 %1842
        %v1844 = vsel %vm348, %v1833, -inf
        %1845 = vmax.xlane.f32.xlu0 %v1844
        %v1846 = vpop.xlane.xlu0 %1845
        %v1847 = vsel %vm348, %v1836, -inf
        %1848 = vmax.xlane.f32.xlu0 %v1847
        %v1849 = vpop.xlane.xlu0 %1848
        %v1850 = vsel %vm348, %v1839, -inf
        %1851 = vmax.xlane.f32.xlu0 %v1850
        %v1852 = vpop.xlane.xlu0 %1851
        %v1853 = vsub.f32 %v1830, %v1843
        %v1854 = vsub.f32 %v1833, %v1846
        %v1855 = vsub.f32 %v1836, %v1849
        %v1856 = vsub.f32 %v1839, %v1852
        %v1857 = vmul.f32 %v1853, 1.442695
        %v1858 = vpow.pop %v1857
        %v1859 = vmul.f32 %v1854, 1.442695
        %v1860 = vpow.pop %v1859
        %v1861 = vmul.f32 %v1855, 1.442695
        %v1862 = vpow.pop %v1861
        %v1863 = vmul.f32 %v1856, 1.442695
        %v1864 = vpow.pop %v1863
        %v1865 = vsel %vm348, %v1858, 0.0
        %1866 = vadd.xlane.f32.xlu0 %v1865
        %v1867 = vpop.xlane.xlu0 %1866
        %v1868 = vsel %vm348, %v1860, 0.0
        %1869 = vadd.xlane.f32.xlu0 %v1868
        %v1870 = vpop.xlane.xlu0 %1869
        %v1871 = vsel %vm348, %v1862, 0.0
        %1872 = vadd.xlane.f32.xlu0 %v1871
        %v1873 = vpop.xlane.xlu0 %1872
        %v1874 = vsel %vm348, %v1864, 0.0
        %1875 = vadd.xlane.f32.xlu0 %v1874
        %v1876 = vpop.xlane.xlu0 %1875
        %v1877 = vrcp.pop %v1867
        %v1878 = vmul.f32 %v1867, %v1877
        %v1879 = vsub.f32 1.0, %v1878
        %v1880 = vmul.f32 %v1877, %v1879
        %v1881 = vadd.f32 %v1877, %v1880
        %vm1882 = vweird.f32 %v1867
        %vm1883 = vweird.f32 %v1877
        %vm1884 = vmor %vm1882, %vm1883
        %v1885 = vsel %vm1884, %v1877, %v1881
        %v1886 = vand.u32 2147483647, %v1867
        %vm1887 = vcmp.eq.f32.partialorder %v1886, 8.507059e+37
        %v1888 = vand.u32 %v1867, 2147483648
        %v1889 = vor.u32 1.1754944e-38, %v1888
        %v1890 = vsel %vm1887, %v1889, %v1885
        %v1891 = vmul.f32 %v1858, %v1890
        %v1892 = vrcp.pop %v1870
        %v1893 = vmul.f32 %v1870, %v1892
        %v1894 = vsub.f32 1.0, %v1893
        %v1895 = vmul.f32 %v1892, %v1894
        %v1896 = vadd.f32 %v1892, %v1895
        %vm1897 = vweird.f32 %v1870
        %vm1898 = vweird.f32 %v1892
        %vm1899 = vmor %vm1897, %vm1898
        %v1900 = vsel %vm1899, %v1892, %v1896
        %v1901 = vand.u32 2147483647, %v1870
        %vm1902 = vcmp.eq.f32.partialorder %v1901, 8.507059e+37
        %v1903 = vand.u32 %v1870, 2147483648
        %v1904 = vor.u32 1.1754944e-38, %v1903
        %v1905 = vsel %vm1902, %v1904, %v1900
        %v1906 = vmul.f32 %v1860, %v1905
        %v1907 = vrcp.pop %v1873
        %v1908 = vmul.f32 %v1873, %v1907
        %v1909 = vsub.f32 1.0, %v1908
        %v1910 = vmul.f32 %v1907, %v1909
        %v1911 = vadd.f32 %v1907, %v1910
        %vm1912 = vweird.f32 %v1873
        %vm1913 = vweird.f32 %v1907
        %vm1914 = vmor %vm1912, %vm1913
        %v1915 = vsel %vm1914, %v1907, %v1911
        %v1916 = vand.u32 2147483647, %v1873
        %vm1917 = vcmp.eq.f32.partialorder %v1916, 8.507059e+37
        %v1918 = vand.u32 %v1873, 2147483648
        %v1919 = vor.u32 1.1754944e-38, %v1918
        %v1920 = vsel %vm1917, %v1919, %v1915
        %v1921 = vmul.f32 %v1862, %v1920
        %v1922 = vrcp.pop %v1876
        %v1923 = vmul.f32 %v1876, %v1922
        %v1924 = vsub.f32 1.0, %v1923
        %v1925 = vmul.f32 %v1922, %v1924
        %v1926 = vadd.f32 %v1922, %v1925
        %vm1927 = vweird.f32 %v1876
        %vm1928 = vweird.f32 %v1922
        %vm1929 = vmor %vm1927, %vm1928
        %v1930 = vsel %vm1929, %v1922, %v1926
        %v1931 = vand.u32 2147483647, %v1876
        %vm1932 = vcmp.eq.f32.partialorder %v1931, 8.507059e+37
        %v1933 = vand.u32 %v1876, 2147483648
        %v1934 = vor.u32 1.1754944e-38, %v1933
        %v1935 = vsel %vm1932, %v1934, %v1930
        %v1936 = vmul.f32 %v1864, %v1935
        %1937 = vrot.lane.b32.xlu0 %v1772, 64
        %v1938 = vpop.permute.xlu0 %1937
        %1939 = vrot.lane.b32.xlu0 %v1775, 64
        %v1940 = vpop.permute.xlu0 %1939
        %1941 = vrot.lane.b32.xlu0 %v1778, 64
        %v1942 = vpop.permute.xlu0 %1941
        %1943 = vrot.lane.b32.xlu0 %v1781, 64
        %v1944 = vpop.permute.xlu0 %1943
        %v1950 = vsel %vm348, %v1891, 0
        %v1953 = vsel %vm348, %v1906, 0
        %v1956 = vsel %vm348, %v1921, 0
        %v1959 = vsel %vm348, %v1936, 0
        %1961 = vmatpush.msra.mxu0 0.0
        %1962 = vmatpush.msra.mxu0 0.0
        %1963 = vmatpush.msra.mxu0 0.0
        %1964 = vmatpush.msra.mxu0 0.0
        %1965 = vmatpush.msra.mxu0 0.0
        %1966 = vmatpush.msra.mxu0 0.0
        %1967 = vmatpush.msra.mxu0 0.0
        %1968 = vmatpush.msra.mxu0 0.0
        %1969 = vmatpush.msra.mxu0 0.0
        %1970 = vmatpush.msra.mxu0 0.0
        %1971 = vmatpush.msra.mxu0 0.0
        %1972 = vmatpush.msra.mxu0 0.0
        %1973 = vmatpush.msra.mxu0 %v1944
        %1974 = vmatpush.msra.mxu0 %v1942
        %1975 = vmatpush.msra.mxu0 %v1940
        %1976 = vmatpush.msra.mxu0 %v1938
        %1977 = vmatmul.f32.gmra.mxu0 %v1950
        %v1978 = vpop.f32.mrf.mxu0
        %v1979 = vadd.f32 0.0, %v1978
        %1980 = vmatmul.f32.gmra.mxu0 %v1953
        %v1981 = vpop.f32.mrf.mxu0
        %v1982 = vadd.f32 0.0, %v1981
        %1983 = vmatmul.f32.gmra.mxu0 %v1956
        %v1984 = vpop.f32.mrf.mxu0
        %v1985 = vadd.f32 0.0, %v1984
        %1986 = vmatmul.f32.gmra.mxu0 %v1959
        %v1987 = vpop.f32.mrf.mxu0
        %v1988 = vadd.f32 0.0, %v1987
        %1989 = vdwg.mxu0
        %1991 = vrot.lane.b32.xlu0 %v1737, 32
        %v1992 = vpop.permute.xlu0 %1991
        %v1995 = vsel %vm403, %v1979, 0
        %v1998 = vsel %vm403, %v1982, 0
        %v2001 = vsel %vm403, %v1985, 0
        %v2004 = vsel %vm403, %v1988, 0
        %2006 = vmatpush.msra.mxu0 0.0
        %2007 = vmatpush.msra.mxu0 0.0
        %2008 = vmatpush.msra.mxu0 0.0
        %2009 = vmatpush.msra.mxu0 0.0
        %2010 = vmatpush.msra.mxu0 0.0
        %2011 = vmatpush.msra.mxu0 0.0
        %2012 = vmatpush.msra.mxu0 0.0
        %2013 = vmatpush.msra.mxu0 0.0
        %2014 = vmatpush.msra.mxu0 0.0
        %2015 = vmatpush.msra.mxu0 0.0
        %2016 = vmatpush.msra.mxu0 0.0
        %2017 = vmatpush.msra.mxu0 0.0
        %2018 = vmatpush.msra.mxu0 0.0
        %2019 = vmatpush.msra.mxu0 0.0
        %2020 = vmatpush.msra.mxu0 0.0
        %2021 = vmatpush.msra.mxu0 %v1992
        %2022 = vmatmul.f32.gmra.mxu0 %v1995
        %v2023 = vpop.f32.mrf.mxu0
        %v2024 = vadd.f32 0.0, %v2023
        %2025 = vmatmul.f32.gmra.mxu0 %v1998
        %v2026 = vpop.f32.mrf.mxu0
        %v2027 = vadd.f32 0.0, %v2026
        %2028 = vmatmul.f32.gmra.mxu0 %v2001
        %v2029 = vpop.f32.mrf.mxu0
        %v2030 = vadd.f32 0.0, %v2029
        %2031 = vmatmul.f32.gmra.mxu0 %v2004
        %v2032 = vpop.f32.mrf.mxu0
        %v2033 = vadd.f32 0.0, %v2032
        %2034 = vdwg.mxu0
        %v2035 = vadd.f32 %v1783, %v2024
        %v2036 = vadd.f32 %v1783, %v2027
        %v2037 = vadd.f32 %v1783, %v2030
        %v2038 = vadd.f32 %v1783, %v2033
        %2039 = vrot.lane.b32.xlu0 %v1772, 120
        %v2040 = vpop.permute.xlu0 %2039
        %2041 = vrot.lane.b32.xlu0 %v1775, 120
        %v2042 = vpop.permute.xlu0 %2041
        %2043 = vrot.lane.b32.xlu0 %v1778, 120
        %v2044 = vpop.permute.xlu0 %2043
        %2045 = vrot.lane.b32.xlu0 %v1781, 120
        %v2046 = vpop.permute.xlu0 %2045
        %2047 = vrot.lane.b32.xlu0 %v1772, 88
        %v2048 = vpop.permute.xlu0 %2047
        %2049 = vrot.lane.b32.xlu0 %v1775, 88
        %v2050 = vpop.permute.xlu0 %2049
        %2051 = vrot.lane.b32.xlu0 %v1778, 88
        %v2052 = vpop.permute.xlu0 %2051
        %2053 = vrot.lane.b32.xlu0 %v1781, 88
        %v2054 = vpop.permute.xlu0 %2053
        %v2055 = vsel %vm403, %v2040, 0
        %v2057 = vsel %vm403, %v2042, 0
        %v2059 = vsel %vm403, %v2044, 0
        %v2061 = vsel %vm403, %v2046, 0
        %v2063 = vsel %vm403, %v2048, 0
        %v2065 = vsel %vm403, %v2050, 0
        %v2067 = vsel %vm403, %v2052, 0
        %v2069 = vsel %vm403, %v2054, 0
        %2071 = vmatpush.xpose.msra.mxu0 0.0
        %2072 = vmatpush.xpose.msra.mxu0 0.0
        %2073 = vmatpush.xpose.msra.mxu0 0.0
        %2074 = vmatpush.xpose.msra.mxu0 0.0
        %2075 = vmatpush.xpose.msra.mxu0 0.0
        %2076 = vmatpush.xpose.msra.mxu0 0.0
        %2077 = vmatpush.xpose.msra.mxu0 0.0
        %2078 = vmatpush.xpose.msra.mxu0 0.0
        %2079 = vmatpush.xpose.msra.mxu0 0.0
        %2080 = vmatpush.xpose.msra.mxu0 0.0
        %2081 = vmatpush.xpose.msra.mxu0 0.0
        %2082 = vmatpush.xpose.msra.mxu0 0.0
        %2083 = vmatpush.xpose.msra.mxu0 %v2069
        %2084 = vmatpush.xpose.msra.mxu0 %v2067
        %2085 = vmatpush.xpose.msra.mxu0 %v2065
        %2086 = vmatpush.xpose.msra.mxu0 %v2063
        %2087 = vmatmul.f32.gmra.mxu0 %v2055
        %v2088 = vpop.f32.mrf.mxu0
        %v2089 = vadd.f32 %v339, %v2088
        %2090 = vmatmul.f32.gmra.mxu0 %v2057
        %v2091 = vpop.f32.mrf.mxu0
        %v2092 = vadd.f32 %v340, %v2091
        %2093 = vmatmul.f32.gmra.mxu0 %v2059
        %v2094 = vpop.f32.mrf.mxu0
        %v2095 = vadd.f32 %v341, %v2094
        %2096 = vmatmul.f32.gmra.mxu0 %v2061
        %v2097 = vpop.f32.mrf.mxu0
        %v2098 = vadd.f32 %v342, %v2097
        %2099 = vdwg.mxu0
        %v2100 = vsel %vm348, %v2089, -inf
        %2101 = vmax.xlane.f32.xlu0 %v2100
        %v2102 = vpop.xlane.xlu0 %2101
        %v2103 = vsel %vm348, %v2092, -inf
        %2104 = vmax.xlane.f32.xlu0 %v2103
        %v2105 = vpop.xlane.xlu0 %2104
        %v2106 = vsel %vm348, %v2095, -inf
        %2107 = vmax.xlane.f32.xlu0 %v2106
        %v2108 = vpop.xlane.xlu0 %2107
        %v2109 = vsel %vm348, %v2098, -inf
        %2110 = vmax.xlane.f32.xlu0 %v2109
        %v2111 = vpop.xlane.xlu0 %2110
        %v2112 = vsub.f32 %v2089, %v2102
        %v2113 = vsub.f32 %v2092, %v2105
        %v2114 = vsub.f32 %v2095, %v2108
        %v2115 = vsub.f32 %v2098, %v2111
        %v2116 = vmul.f32 %v2112, 1.442695
        %v2117 = vpow.pop %v2116
        %v2118 = vmul.f32 %v2113, 1.442695
        %v2119 = vpow.pop %v2118
        %v2120 = vmul.f32 %v2114, 1.442695
        %v2121 = vpow.pop %v2120
        %v2122 = vmul.f32 %v2115, 1.442695
        %v2123 = vpow.pop %v2122
        %v2124 = vsel %vm348, %v2117, 0.0
        %2125 = vadd.xlane.f32.xlu0 %v2124
        %v2126 = vpop.xlane.xlu0 %2125
        %v2127 = vsel %vm348, %v2119, 0.0
        %2128 = vadd.xlane.f32.xlu0 %v2127
        %v2129 = vpop.xlane.xlu0 %2128
        %v2130 = vsel %vm348, %v2121, 0.0
        %2131 = vadd.xlane.f32.xlu0 %v2130
        %v2132 = vpop.xlane.xlu0 %2131
        %v2133 = vsel %vm348, %v2123, 0.0
        %2134 = vadd.xlane.f32.xlu0 %v2133
        %v2135 = vpop.xlane.xlu0 %2134
        %v2136 = vrcp.pop %v2126
        %v2137 = vmul.f32 %v2126, %v2136
        %v2138 = vsub.f32 1.0, %v2137
        %v2139 = vmul.f32 %v2136, %v2138
        %v2140 = vadd.f32 %v2136, %v2139
        %vm2141 = vweird.f32 %v2126
        %vm2142 = vweird.f32 %v2136
        %vm2143 = vmor %vm2141, %vm2142
        %v2144 = vsel %vm2143, %v2136, %v2140
        %v2145 = vand.u32 2147483647, %v2126
        %vm2146 = vcmp.eq.f32.partialorder %v2145, 8.507059e+37
        %v2147 = vand.u32 %v2126, 2147483648
        %v2148 = vor.u32 1.1754944e-38, %v2147
        %v2149 = vsel %vm2146, %v2148, %v2144
        %v2150 = vmul.f32 %v2117, %v2149
        %v2151 = vrcp.pop %v2129
        %v2152 = vmul.f32 %v2129, %v2151
        %v2153 = vsub.f32 1.0, %v2152
        %v2154 = vmul.f32 %v2151, %v2153
        %v2155 = vadd.f32 %v2151, %v2154
        %vm2156 = vweird.f32 %v2129
        %vm2157 = vweird.f32 %v2151
        %vm2158 = vmor %vm2156, %vm2157
        %v2159 = vsel %vm2158, %v2151, %v2155
        %v2160 = vand.u32 2147483647, %v2129
        %vm2161 = vcmp.eq.f32.partialorder %v2160, 8.507059e+37
        %v2162 = vand.u32 %v2129, 2147483648
        %v2163 = vor.u32 1.1754944e-38, %v2162
        %v2164 = vsel %vm2161, %v2163, %v2159
        %v2165 = vmul.f32 %v2119, %v2164
        %v2166 = vrcp.pop %v2132
        %v2167 = vmul.f32 %v2132, %v2166
        %v2168 = vsub.f32 1.0, %v2167
        %v2169 = vmul.f32 %v2166, %v2168
        %v2170 = vadd.f32 %v2166, %v2169
        %vm2171 = vweird.f32 %v2132
        %vm2172 = vweird.f32 %v2166
        %vm2173 = vmor %vm2171, %vm2172
        %v2174 = vsel %vm2173, %v2166, %v2170
        %v2175 = vand.u32 2147483647, %v2132
        %vm2176 = vcmp.eq.f32.partialorder %v2175, 8.507059e+37
        %v2177 = vand.u32 %v2132, 2147483648
        %v2178 = vor.u32 1.1754944e-38, %v2177
        %v2179 = vsel %vm2176, %v2178, %v2174
        %v2180 = vmul.f32 %v2121, %v2179
        %v2181 = vrcp.pop %v2135
        %v2182 = vmul.f32 %v2135, %v2181
        %v2183 = vsub.f32 1.0, %v2182
        %v2184 = vmul.f32 %v2181, %v2183
        %v2185 = vadd.f32 %v2181, %v2184
        %vm2186 = vweird.f32 %v2135
        %vm2187 = vweird.f32 %v2181
        %vm2188 = vmor %vm2186, %vm2187
        %v2189 = vsel %vm2188, %v2181, %v2185
        %v2190 = vand.u32 2147483647, %v2135
        %vm2191 = vcmp.eq.f32.partialorder %v2190, 8.507059e+37
        %v2192 = vand.u32 %v2135, 2147483648
        %v2193 = vor.u32 1.1754944e-38, %v2192
        %v2194 = vsel %vm2191, %v2193, %v2189
        %v2195 = vmul.f32 %v2123, %v2194
        %2196 = vrot.lane.b32.xlu0 %v1772, 56
        %v2197 = vpop.permute.xlu0 %2196
        %2198 = vrot.lane.b32.xlu0 %v1775, 56
        %v2199 = vpop.permute.xlu0 %2198
        %2200 = vrot.lane.b32.xlu0 %v1778, 56
        %v2201 = vpop.permute.xlu0 %2200
        %2202 = vrot.lane.b32.xlu0 %v1781, 56
        %v2203 = vpop.permute.xlu0 %2202
        %v2209 = vsel %vm348, %v2150, 0
        %v2212 = vsel %vm348, %v2165, 0
        %v2215 = vsel %vm348, %v2180, 0
        %v2218 = vsel %vm348, %v2195, 0
        %2220 = vmatpush.msra.mxu0 0.0
        %2221 = vmatpush.msra.mxu0 0.0
        %2222 = vmatpush.msra.mxu0 0.0
        %2223 = vmatpush.msra.mxu0 0.0
        %2224 = vmatpush.msra.mxu0 0.0
        %2225 = vmatpush.msra.mxu0 0.0
        %2226 = vmatpush.msra.mxu0 0.0
        %2227 = vmatpush.msra.mxu0 0.0
        %2228 = vmatpush.msra.mxu0 0.0
        %2229 = vmatpush.msra.mxu0 0.0
        %2230 = vmatpush.msra.mxu0 0.0
        %2231 = vmatpush.msra.mxu0 0.0
        %2232 = vmatpush.msra.mxu0 %v2203
        %2233 = vmatpush.msra.mxu0 %v2201
        %2234 = vmatpush.msra.mxu0 %v2199
        %2235 = vmatpush.msra.mxu0 %v2197
        %2236 = vmatmul.f32.gmra.mxu0 %v2209
        %v2237 = vpop.f32.mrf.mxu0
        %v2238 = vadd.f32 0.0, %v2237
        %2239 = vmatmul.f32.gmra.mxu0 %v2212
        %v2240 = vpop.f32.mrf.mxu0
        %v2241 = vadd.f32 0.0, %v2240
        %2242 = vmatmul.f32.gmra.mxu0 %v2215
        %v2243 = vpop.f32.mrf.mxu0
        %v2244 = vadd.f32 0.0, %v2243
        %2245 = vmatmul.f32.gmra.mxu0 %v2218
        %v2246 = vpop.f32.mrf.mxu0
        %v2247 = vadd.f32 0.0, %v2246
        %2248 = vdwg.mxu0
        %2250 = vrot.lane.b32.xlu0 %v1738, 32
        %v2251 = vpop.permute.xlu0 %2250
        %v2254 = vsel %vm403, %v2238, 0
        %v2257 = vsel %vm403, %v2241, 0
        %v2260 = vsel %vm403, %v2244, 0
        %v2263 = vsel %vm403, %v2247, 0
        %2265 = vmatpush.msra.mxu0 0.0
        %2266 = vmatpush.msra.mxu0 0.0
        %2267 = vmatpush.msra.mxu0 0.0
        %2268 = vmatpush.msra.mxu0 0.0
        %2269 = vmatpush.msra.mxu0 0.0
        %2270 = vmatpush.msra.mxu0 0.0
        %2271 = vmatpush.msra.mxu0 0.0
        %2272 = vmatpush.msra.mxu0 0.0
        %2273 = vmatpush.msra.mxu0 0.0
        %2274 = vmatpush.msra.mxu0 0.0
        %2275 = vmatpush.msra.mxu0 0.0
        %2276 = vmatpush.msra.mxu0 0.0
        %2277 = vmatpush.msra.mxu0 0.0
        %2278 = vmatpush.msra.mxu0 0.0
        %2279 = vmatpush.msra.mxu0 0.0
        %2280 = vmatpush.msra.mxu0 %v2251
        %2281 = vmatmul.f32.gmra.mxu0 %v2254
        %v2282 = vpop.f32.mrf.mxu0
        %v2283 = vadd.f32 0.0, %v2282
        %2284 = vmatmul.f32.gmra.mxu0 %v2257
        %v2285 = vpop.f32.mrf.mxu0
        %v2286 = vadd.f32 0.0, %v2285
        %2287 = vmatmul.f32.gmra.mxu0 %v2260
        %v2288 = vpop.f32.mrf.mxu0
        %v2289 = vadd.f32 0.0, %v2288
        %2290 = vmatmul.f32.gmra.mxu0 %v2263
        %v2291 = vpop.f32.mrf.mxu0
        %v2292 = vadd.f32 0.0, %v2291
        %2293 = vdwg.mxu0
        %v2294 = vadd.f32 %v2035, %v2283
        %v2295 = vadd.f32 %v2036, %v2286
        %v2296 = vadd.f32 %v2037, %v2289
        %v2297 = vadd.f32 %v2038, %v2292
        %2298 = vrot.lane.b32.xlu0 %v1772, 112
        %v2299 = vpop.permute.xlu0 %2298
        %2300 = vrot.lane.b32.xlu0 %v1775, 112
        %v2301 = vpop.permute.xlu0 %2300
        %2302 = vrot.lane.b32.xlu0 %v1778, 112
        %v2303 = vpop.permute.xlu0 %2302
        %2304 = vrot.lane.b32.xlu0 %v1781, 112
        %v2305 = vpop.permute.xlu0 %2304
        %2306 = vrot.lane.b32.xlu0 %v1772, 80
        %v2307 = vpop.permute.xlu0 %2306
        %2308 = vrot.lane.b32.xlu0 %v1775, 80
        %v2309 = vpop.permute.xlu0 %2308
        %2310 = vrot.lane.b32.xlu0 %v1778, 80
        %v2311 = vpop.permute.xlu0 %2310
        %2312 = vrot.lane.b32.xlu0 %v1781, 80
        %v2313 = vpop.permute.xlu0 %2312
        %v2314 = vsel %vm403, %v2299, 0
        %v2316 = vsel %vm403, %v2301, 0
        %v2318 = vsel %vm403, %v2303, 0
        %v2320 = vsel %vm403, %v2305, 0
        %v2322 = vsel %vm403, %v2307, 0
        %v2324 = vsel %vm403, %v2309, 0
        %v2326 = vsel %vm403, %v2311, 0
        %v2328 = vsel %vm403, %v2313, 0
        %2330 = vmatpush.xpose.msra.mxu0 0.0
        %2331 = vmatpush.xpose.msra.mxu0 0.0
        %2332 = vmatpush.xpose.msra.mxu0 0.0
        %2333 = vmatpush.xpose.msra.mxu0 0.0
        %2334 = vmatpush.xpose.msra.mxu0 0.0
        %2335 = vmatpush.xpose.msra.mxu0 0.0
        %2336 = vmatpush.xpose.msra.mxu0 0.0
        %2337 = vmatpush.xpose.msra.mxu0 0.0
        %2338 = vmatpush.xpose.msra.mxu0 0.0
        %2339 = vmatpush.xpose.msra.mxu0 0.0
        %2340 = vmatpush.xpose.msra.mxu0 0.0
        %2341 = vmatpush.xpose.msra.mxu0 0.0
        %2342 = vmatpush.xpose.msra.mxu0 %v2328
        %2343 = vmatpush.xpose.msra.mxu0 %v2326
        %2344 = vmatpush.xpose.msra.mxu0 %v2324
        %2345 = vmatpush.xpose.msra.mxu0 %v2322
        %2346 = vmatmul.f32.gmra.mxu0 %v2314
        %v2347 = vpop.f32.mrf.mxu0
        %v2348 = vadd.f32 %v339, %v2347
        %2349 = vmatmul.f32.gmra.mxu0 %v2316
        %v2350 = vpop.f32.mrf.mxu0
        %v2351 = vadd.f32 %v340, %v2350
        %2352 = vmatmul.f32.gmra.mxu0 %v2318
        %v2353 = vpop.f32.mrf.mxu0
        %v2354 = vadd.f32 %v341, %v2353
        %2355 = vmatmul.f32.gmra.mxu0 %v2320
        %v2356 = vpop.f32.mrf.mxu0
        %v2357 = vadd.f32 %v342, %v2356
        %2358 = vdwg.mxu0
        %v2359 = vsel %vm348, %v2348, -inf
        %2360 = vmax.xlane.f32.xlu0 %v2359
        %v2361 = vpop.xlane.xlu0 %2360
        %v2362 = vsel %vm348, %v2351, -inf
        %2363 = vmax.xlane.f32.xlu0 %v2362
        %v2364 = vpop.xlane.xlu0 %2363
        %v2365 = vsel %vm348, %v2354, -inf
        %2366 = vmax.xlane.f32.xlu0 %v2365
        %v2367 = vpop.xlane.xlu0 %2366
        %v2368 = vsel %vm348, %v2357, -inf
        %2369 = vmax.xlane.f32.xlu0 %v2368
        %v2370 = vpop.xlane.xlu0 %2369
        %v2371 = vsub.f32 %v2348, %v2361
        %v2372 = vsub.f32 %v2351, %v2364
        %v2373 = vsub.f32 %v2354, %v2367
        %v2374 = vsub.f32 %v2357, %v2370
        %v2375 = vmul.f32 %v2371, 1.442695
        %v2376 = vpow.pop %v2375
        %v2377 = vmul.f32 %v2372, 1.442695
        %v2378 = vpow.pop %v2377
        %v2379 = vmul.f32 %v2373, 1.442695
        %v2380 = vpow.pop %v2379
        %v2381 = vmul.f32 %v2374, 1.442695
        %v2382 = vpow.pop %v2381
        %v2383 = vsel %vm348, %v2376, 0.0
        %2384 = vadd.xlane.f32.xlu0 %v2383
        %v2385 = vpop.xlane.xlu0 %2384
        %v2386 = vsel %vm348, %v2378, 0.0
        %2387 = vadd.xlane.f32.xlu0 %v2386
        %v2388 = vpop.xlane.xlu0 %2387
        %v2389 = vsel %vm348, %v2380, 0.0
        %2390 = vadd.xlane.f32.xlu0 %v2389
        %v2391 = vpop.xlane.xlu0 %2390
        %v2392 = vsel %vm348, %v2382, 0.0
        %2393 = vadd.xlane.f32.xlu0 %v2392
        %v2394 = vpop.xlane.xlu0 %2393
        %v2395 = vrcp.pop %v2385
        %v2396 = vmul.f32 %v2385, %v2395
        %v2397 = vsub.f32 1.0, %v2396
        %v2398 = vmul.f32 %v2395, %v2397
        %v2399 = vadd.f32 %v2395, %v2398
        %vm2400 = vweird.f32 %v2385
        %vm2401 = vweird.f32 %v2395
        %vm2402 = vmor %vm2400, %vm2401
        %v2403 = vsel %vm2402, %v2395, %v2399
        %v2404 = vand.u32 2147483647, %v2385
        %vm2405 = vcmp.eq.f32.partialorder %v2404, 8.507059e+37
        %v2406 = vand.u32 %v2385, 2147483648
        %v2407 = vor.u32 1.1754944e-38, %v2406
        %v2408 = vsel %vm2405, %v2407, %v2403
        %v2409 = vmul.f32 %v2376, %v2408
        %v2410 = vrcp.pop %v2388
        %v2411 = vmul.f32 %v2388, %v2410
        %v2412 = vsub.f32 1.0, %v2411
        %v2413 = vmul.f32 %v2410, %v2412
        %v2414 = vadd.f32 %v2410, %v2413
        %vm2415 = vweird.f32 %v2388
        %vm2416 = vweird.f32 %v2410
        %vm2417 = vmor %vm2415, %vm2416
        %v2418 = vsel %vm2417, %v2410, %v2414
        %v2419 = vand.u32 2147483647, %v2388
        %vm2420 = vcmp.eq.f32.partialorder %v2419, 8.507059e+37
        %v2421 = vand.u32 %v2388, 2147483648
        %v2422 = vor.u32 1.1754944e-38, %v2421
        %v2423 = vsel %vm2420, %v2422, %v2418
        %v2424 = vmul.f32 %v2378, %v2423
        %v2425 = vrcp.pop %v2391
        %v2426 = vmul.f32 %v2391, %v2425
        %v2427 = vsub.f32 1.0, %v2426
        %v2428 = vmul.f32 %v2425, %v2427
        %v2429 = vadd.f32 %v2425, %v2428
        %vm2430 = vweird.f32 %v2391
        %vm2431 = vweird.f32 %v2425
        %vm2432 = vmor %vm2430, %vm2431
        %v2433 = vsel %vm2432, %v2425, %v2429
        %v2434 = vand.u32 2147483647, %v2391
        %vm2435 = vcmp.eq.f32.partialorder %v2434, 8.507059e+37
        %v2436 = vand.u32 %v2391, 2147483648
        %v2437 = vor.u32 1.1754944e-38, %v2436
        %v2438 = vsel %vm2435, %v2437, %v2433
        %v2439 = vmul.f32 %v2380, %v2438
        %v2440 = vrcp.pop %v2394
        %v2441 = vmul.f32 %v2394, %v2440
        %v2442 = vsub.f32 1.0, %v2441
        %v2443 = vmul.f32 %v2440, %v2442
        %v2444 = vadd.f32 %v2440, %v2443
        %vm2445 = vweird.f32 %v2394
        %vm2446 = vweird.f32 %v2440
        %vm2447 = vmor %vm2445, %vm2446
        %v2448 = vsel %vm2447, %v2440, %v2444
        %v2449 = vand.u32 2147483647, %v2394
        %vm2450 = vcmp.eq.f32.partialorder %v2449, 8.507059e+37
        %v2451 = vand.u32 %v2394, 2147483648
        %v2452 = vor.u32 1.1754944e-38, %v2451
        %v2453 = vsel %vm2450, %v2452, %v2448
        %v2454 = vmul.f32 %v2382, %v2453
        %2455 = vrot.lane.b32.xlu0 %v1772, 48
        %v2456 = vpop.permute.xlu0 %2455
        %2457 = vrot.lane.b32.xlu0 %v1775, 48
        %v2458 = vpop.permute.xlu0 %2457
        %2459 = vrot.lane.b32.xlu0 %v1778, 48
        %v2460 = vpop.permute.xlu0 %2459
        %2461 = vrot.lane.b32.xlu0 %v1781, 48
        %v2462 = vpop.permute.xlu0 %2461
        %v2468 = vsel %vm348, %v2409, 0
        %v2471 = vsel %vm348, %v2424, 0
        %v2474 = vsel %vm348, %v2439, 0
        %v2477 = vsel %vm348, %v2454, 0
        %2479 = vmatpush.msra.mxu0 0.0
        %2480 = vmatpush.msra.mxu0 0.0
        %2481 = vmatpush.msra.mxu0 0.0
        %2482 = vmatpush.msra.mxu0 0.0
        %2483 = vmatpush.msra.mxu0 0.0
        %2484 = vmatpush.msra.mxu0 0.0
        %2485 = vmatpush.msra.mxu0 0.0
        %2486 = vmatpush.msra.mxu0 0.0
        %2487 = vmatpush.msra.mxu0 0.0
        %2488 = vmatpush.msra.mxu0 0.0
        %2489 = vmatpush.msra.mxu0 0.0
        %2490 = vmatpush.msra.mxu0 0.0
        %2491 = vmatpush.msra.mxu0 %v2462
        %2492 = vmatpush.msra.mxu0 %v2460
        %2493 = vmatpush.msra.mxu0 %v2458
        %2494 = vmatpush.msra.mxu0 %v2456
        %2495 = vmatmul.f32.gmra.mxu0 %v2468
        %v2496 = vpop.f32.mrf.mxu0
        %v2497 = vadd.f32 0.0, %v2496
        %2498 = vmatmul.f32.gmra.mxu0 %v2471
        %v2499 = vpop.f32.mrf.mxu0
        %v2500 = vadd.f32 0.0, %v2499
        %2501 = vmatmul.f32.gmra.mxu0 %v2474
        %v2502 = vpop.f32.mrf.mxu0
        %v2503 = vadd.f32 0.0, %v2502
        %2504 = vmatmul.f32.gmra.mxu0 %v2477
        %v2505 = vpop.f32.mrf.mxu0
        %v2506 = vadd.f32 0.0, %v2505
        %2507 = vdwg.mxu0
        %2509 = vrot.lane.b32.xlu0 %v1739, 32
        %v2510 = vpop.permute.xlu0 %2509
        %v2513 = vsel %vm403, %v2497, 0
        %v2516 = vsel %vm403, %v2500, 0
        %v2519 = vsel %vm403, %v2503, 0
        %v2522 = vsel %vm403, %v2506, 0
        %2524 = vmatpush.msra.mxu0 0.0
        %2525 = vmatpush.msra.mxu0 0.0
        %2526 = vmatpush.msra.mxu0 0.0
        %2527 = vmatpush.msra.mxu0 0.0
        %2528 = vmatpush.msra.mxu0 0.0
        %2529 = vmatpush.msra.mxu0 0.0
        %2530 = vmatpush.msra.mxu0 0.0
        %2531 = vmatpush.msra.mxu0 0.0
        %2532 = vmatpush.msra.mxu0 0.0
        %2533 = vmatpush.msra.mxu0 0.0
        %2534 = vmatpush.msra.mxu0 0.0
        %2535 = vmatpush.msra.mxu0 0.0
        %2536 = vmatpush.msra.mxu0 0.0
        %2537 = vmatpush.msra.mxu0 0.0
        %2538 = vmatpush.msra.mxu0 0.0
        %2539 = vmatpush.msra.mxu0 %v2510
        %2540 = vmatmul.f32.gmra.mxu0 %v2513
        %v2541 = vpop.f32.mrf.mxu0
        %v2542 = vadd.f32 0.0, %v2541
        %2543 = vmatmul.f32.gmra.mxu0 %v2516
        %v2544 = vpop.f32.mrf.mxu0
        %v2545 = vadd.f32 0.0, %v2544
        %2546 = vmatmul.f32.gmra.mxu0 %v2519
        %v2547 = vpop.f32.mrf.mxu0
        %v2548 = vadd.f32 0.0, %v2547
        %2549 = vmatmul.f32.gmra.mxu0 %v2522
        %v2550 = vpop.f32.mrf.mxu0
        %v2551 = vadd.f32 0.0, %v2550
        %2552 = vdwg.mxu0
        %v2553 = vadd.f32 %v2294, %v2542
        %v2554 = vadd.f32 %v2295, %v2545
        %v2555 = vadd.f32 %v2296, %v2548
        %v2556 = vadd.f32 %v2297, %v2551
        %2557 = vrot.lane.b32.xlu0 %v1772, 104
        %v2558 = vpop.permute.xlu0 %2557
        %2559 = vrot.lane.b32.xlu0 %v1775, 104
        %v2560 = vpop.permute.xlu0 %2559
        %2561 = vrot.lane.b32.xlu0 %v1778, 104
        %v2562 = vpop.permute.xlu0 %2561
        %2563 = vrot.lane.b32.xlu0 %v1781, 104
        %v2564 = vpop.permute.xlu0 %2563
        %2565 = vrot.lane.b32.xlu0 %v1772, 72
        %v2566 = vpop.permute.xlu0 %2565
        %2567 = vrot.lane.b32.xlu0 %v1775, 72
        %v2568 = vpop.permute.xlu0 %2567
        %2569 = vrot.lane.b32.xlu0 %v1778, 72
        %v2570 = vpop.permute.xlu0 %2569
        %2571 = vrot.lane.b32.xlu0 %v1781, 72
        %v2572 = vpop.permute.xlu0 %2571
        %v2573 = vsel %vm403, %v2558, 0
        %v2575 = vsel %vm403, %v2560, 0
        %v2577 = vsel %vm403, %v2562, 0
        %v2579 = vsel %vm403, %v2564, 0
        %v2581 = vsel %vm403, %v2566, 0
        %v2583 = vsel %vm403, %v2568, 0
        %v2585 = vsel %vm403, %v2570, 0
        %v2587 = vsel %vm403, %v2572, 0
        %2589 = vmatpush.xpose.msra.mxu0 0.0
        %2590 = vmatpush.xpose.msra.mxu0 0.0
        %2591 = vmatpush.xpose.msra.mxu0 0.0
        %2592 = vmatpush.xpose.msra.mxu0 0.0
        %2593 = vmatpush.xpose.msra.mxu0 0.0
        %2594 = vmatpush.xpose.msra.mxu0 0.0
        %2595 = vmatpush.xpose.msra.mxu0 0.0
        %2596 = vmatpush.xpose.msra.mxu0 0.0
        %2597 = vmatpush.xpose.msra.mxu0 0.0
        %2598 = vmatpush.xpose.msra.mxu0 0.0
        %2599 = vmatpush.xpose.msra.mxu0 0.0
        %2600 = vmatpush.xpose.msra.mxu0 0.0
        %2601 = vmatpush.xpose.msra.mxu0 %v2587
        %2602 = vmatpush.xpose.msra.mxu0 %v2585
        %2603 = vmatpush.xpose.msra.mxu0 %v2583
        %2604 = vmatpush.xpose.msra.mxu0 %v2581
        %2605 = vmatmul.f32.gmra.mxu0 %v2573
        %v2606 = vpop.f32.mrf.mxu0
        %v2607 = vadd.f32 %v339, %v2606
        %2608 = vmatmul.f32.gmra.mxu0 %v2575
        %v2609 = vpop.f32.mrf.mxu0
        %v2610 = vadd.f32 %v340, %v2609
        %2611 = vmatmul.f32.gmra.mxu0 %v2577
        %v2612 = vpop.f32.mrf.mxu0
        %v2613 = vadd.f32 %v341, %v2612
        %2614 = vmatmul.f32.gmra.mxu0 %v2579
        %v2615 = vpop.f32.mrf.mxu0
        %v2616 = vadd.f32 %v342, %v2615
        %2617 = vdwg.mxu0
        %v2618 = vsel %vm348, %v2607, -inf
        %2619 = vmax.xlane.f32.xlu0 %v2618
        %v2620 = vpop.xlane.xlu0 %2619
        %v2621 = vsel %vm348, %v2610, -inf
        %2622 = vmax.xlane.f32.xlu0 %v2621
        %v2623 = vpop.xlane.xlu0 %2622
        %v2624 = vsel %vm348, %v2613, -inf
        %2625 = vmax.xlane.f32.xlu0 %v2624
        %v2626 = vpop.xlane.xlu0 %2625
        %v2627 = vsel %vm348, %v2616, -inf
        %2628 = vmax.xlane.f32.xlu0 %v2627
        %v2629 = vpop.xlane.xlu0 %2628
        %v2630 = vsub.f32 %v2607, %v2620
        %v2631 = vsub.f32 %v2610, %v2623
        %v2632 = vsub.f32 %v2613, %v2626
        %v2633 = vsub.f32 %v2616, %v2629
        %v2634 = vmul.f32 %v2630, 1.442695
        %v2635 = vpow.pop %v2634
        %v2636 = vmul.f32 %v2631, 1.442695
        %v2637 = vpow.pop %v2636
        %v2638 = vmul.f32 %v2632, 1.442695
        %v2639 = vpow.pop %v2638
        %v2640 = vmul.f32 %v2633, 1.442695
        %v2641 = vpow.pop %v2640
        %v2642 = vsel %vm348, %v2635, 0.0
        %2643 = vadd.xlane.f32.xlu0 %v2642
        %v2644 = vpop.xlane.xlu0 %2643
        %v2645 = vsel %vm348, %v2637, 0.0
        %2646 = vadd.xlane.f32.xlu0 %v2645
        %v2647 = vpop.xlane.xlu0 %2646
        %v2648 = vsel %vm348, %v2639, 0.0
        %2649 = vadd.xlane.f32.xlu0 %v2648
        %v2650 = vpop.xlane.xlu0 %2649
        %v2651 = vsel %vm348, %v2641, 0.0
        %2652 = vadd.xlane.f32.xlu0 %v2651
        %v2653 = vpop.xlane.xlu0 %2652
        %v2654 = vrcp.pop %v2644
        %v2655 = vmul.f32 %v2644, %v2654
        %v2656 = vsub.f32 1.0, %v2655
        %v2657 = vmul.f32 %v2654, %v2656
        %v2658 = vadd.f32 %v2654, %v2657
        %vm2659 = vweird.f32 %v2644
        %vm2660 = vweird.f32 %v2654
        %vm2661 = vmor %vm2659, %vm2660
        %v2662 = vsel %vm2661, %v2654, %v2658
        %v2663 = vand.u32 2147483647, %v2644
        %vm2664 = vcmp.eq.f32.partialorder %v2663, 8.507059e+37
        %v2665 = vand.u32 %v2644, 2147483648
        %v2666 = vor.u32 1.1754944e-38, %v2665
        %v2667 = vsel %vm2664, %v2666, %v2662
        %v2668 = vmul.f32 %v2635, %v2667
        %v2669 = vrcp.pop %v2647
        %v2670 = vmul.f32 %v2647, %v2669
        %v2671 = vsub.f32 1.0, %v2670
        %v2672 = vmul.f32 %v2669, %v2671
        %v2673 = vadd.f32 %v2669, %v2672
        %vm2674 = vweird.f32 %v2647
        %vm2675 = vweird.f32 %v2669
        %vm2676 = vmor %vm2674, %vm2675
        %v2677 = vsel %vm2676, %v2669, %v2673
        %v2678 = vand.u32 2147483647, %v2647
        %vm2679 = vcmp.eq.f32.partialorder %v2678, 8.507059e+37
        %v2680 = vand.u32 %v2647, 2147483648
        %v2681 = vor.u32 1.1754944e-38, %v2680
        %v2682 = vsel %vm2679, %v2681, %v2677
        %v2683 = vmul.f32 %v2637, %v2682
        %v2684 = vrcp.pop %v2650
        %v2685 = vmul.f32 %v2650, %v2684
        %v2686 = vsub.f32 1.0, %v2685
        %v2687 = vmul.f32 %v2684, %v2686
        %v2688 = vadd.f32 %v2684, %v2687
        %vm2689 = vweird.f32 %v2650
        %vm2690 = vweird.f32 %v2684
        %vm2691 = vmor %vm2689, %vm2690
        %v2692 = vsel %vm2691, %v2684, %v2688
        %v2693 = vand.u32 2147483647, %v2650
        %vm2694 = vcmp.eq.f32.partialorder %v2693, 8.507059e+37
        %v2695 = vand.u32 %v2650, 2147483648
        %v2696 = vor.u32 1.1754944e-38, %v2695
        %v2697 = vsel %vm2694, %v2696, %v2692
        %v2698 = vmul.f32 %v2639, %v2697
        %v2699 = vrcp.pop %v2653
        %v2700 = vmul.f32 %v2653, %v2699
        %v2701 = vsub.f32 1.0, %v2700
        %v2702 = vmul.f32 %v2699, %v2701
        %v2703 = vadd.f32 %v2699, %v2702
        %vm2704 = vweird.f32 %v2653
        %vm2705 = vweird.f32 %v2699
        %vm2706 = vmor %vm2704, %vm2705
        %v2707 = vsel %vm2706, %v2699, %v2703
        %v2708 = vand.u32 2147483647, %v2653
        %vm2709 = vcmp.eq.f32.partialorder %v2708, 8.507059e+37
        %v2710 = vand.u32 %v2653, 2147483648
        %v2711 = vor.u32 1.1754944e-38, %v2710
        %v2712 = vsel %vm2709, %v2711, %v2707
        %v2713 = vmul.f32 %v2641, %v2712
        %2714 = vrot.lane.b32.xlu0 %v1772, 40
        %v2715 = vpop.permute.xlu0 %2714
        %2716 = vrot.lane.b32.xlu0 %v1775, 40
        %v2717 = vpop.permute.xlu0 %2716
        %2718 = vrot.lane.b32.xlu0 %v1778, 40
        %v2719 = vpop.permute.xlu0 %2718
        %2720 = vrot.lane.b32.xlu0 %v1781, 40
        %v2721 = vpop.permute.xlu0 %2720
        %v2727 = vsel %vm348, %v2668, 0
        %v2730 = vsel %vm348, %v2683, 0
        %v2733 = vsel %vm348, %v2698, 0
        %v2736 = vsel %vm348, %v2713, 0
        %2738 = vmatpush.msra.mxu0 0.0
        %2739 = vmatpush.msra.mxu0 0.0
        %2740 = vmatpush.msra.mxu0 0.0
        %2741 = vmatpush.msra.mxu0 0.0
        %2742 = vmatpush.msra.mxu0 0.0
        %2743 = vmatpush.msra.mxu0 0.0
        %2744 = vmatpush.msra.mxu0 0.0
        %2745 = vmatpush.msra.mxu0 0.0
        %2746 = vmatpush.msra.mxu0 0.0
        %2747 = vmatpush.msra.mxu0 0.0
        %2748 = vmatpush.msra.mxu0 0.0
        %2749 = vmatpush.msra.mxu0 0.0
        %2750 = vmatpush.msra.mxu0 %v2721
        %2751 = vmatpush.msra.mxu0 %v2719
        %2752 = vmatpush.msra.mxu0 %v2717
        %2753 = vmatpush.msra.mxu0 %v2715
        %2754 = vmatmul.f32.gmra.mxu0 %v2727
        %v2755 = vpop.f32.mrf.mxu0
        %v2756 = vadd.f32 0.0, %v2755
        %2757 = vmatmul.f32.gmra.mxu0 %v2730
        %v2758 = vpop.f32.mrf.mxu0
        %v2759 = vadd.f32 0.0, %v2758
        %2760 = vmatmul.f32.gmra.mxu0 %v2733
        %v2761 = vpop.f32.mrf.mxu0
        %v2762 = vadd.f32 0.0, %v2761
        %2763 = vmatmul.f32.gmra.mxu0 %v2736
        %v2764 = vpop.f32.mrf.mxu0
        %v2765 = vadd.f32 0.0, %v2764
        %2766 = vdwg.mxu0
        %2768 = vrot.lane.b32.xlu0 %v1740, 32
        %v2769 = vpop.permute.xlu0 %2768
        %v2772 = vsel %vm403, %v2756, 0
        %v2775 = vsel %vm403, %v2759, 0
        %v2778 = vsel %vm403, %v2762, 0
        %v2781 = vsel %vm403, %v2765, 0
        %2783 = vmatpush.msra.mxu0 0.0
        %2784 = vmatpush.msra.mxu0 0.0
        %2785 = vmatpush.msra.mxu0 0.0
        %2786 = vmatpush.msra.mxu0 0.0
        %2787 = vmatpush.msra.mxu0 0.0
        %2788 = vmatpush.msra.mxu0 0.0
        %2789 = vmatpush.msra.mxu0 0.0
        %2790 = vmatpush.msra.mxu0 0.0
        %2791 = vmatpush.msra.mxu0 0.0
        %2792 = vmatpush.msra.mxu0 0.0
        %2793 = vmatpush.msra.mxu0 0.0
        %2794 = vmatpush.msra.mxu0 0.0
        %2795 = vmatpush.msra.mxu0 0.0
        %2796 = vmatpush.msra.mxu0 0.0
        %2797 = vmatpush.msra.mxu0 0.0
        %2798 = vmatpush.msra.mxu0 %v2769
        %2799 = vmatmul.f32.gmra.mxu0 %v2772
        %v2800 = vpop.f32.mrf.mxu0
        %v2801 = vadd.f32 0.0, %v2800
        %2802 = vmatmul.f32.gmra.mxu0 %v2775
        %v2803 = vpop.f32.mrf.mxu0
        %v2804 = vadd.f32 0.0, %v2803
        %2805 = vmatmul.f32.gmra.mxu0 %v2778
        %v2806 = vpop.f32.mrf.mxu0
        %v2807 = vadd.f32 0.0, %v2806
        %2808 = vmatmul.f32.gmra.mxu0 %v2781
        %v2809 = vpop.f32.mrf.mxu0
        %v2810 = vadd.f32 0.0, %v2809
        %2811 = vdwg.mxu0
        %v2812 = vadd.f32 %v2553, %v2801
        %v2813 = vadd.f32 %v2554, %v2804
        %v2814 = vadd.f32 %v2555, %v2807
        %v2815 = vadd.f32 %v2556, %v2810
        %s2816 = scalar_lea.vmem %s2, 32
        %v2817 = vld [vmem:[%s2816] sm:$0xff]
        %v2818 = vld [vmem:[%s2816 + $0x8] sm:$0xff]
        %v2819 = vld [vmem:[%s2816 + $0x10] sm:$0xff]
        %v2820 = vld [vmem:[%s2816 + $0x18] sm:$0xff]
        %s2821 = scalar_lea.vmem %s3, 64
        %v2822 = vld [vmem:[%s2821] sm:$0xff]
        %v2823 = vld [vmem:[%s2821 + $0x8] sm:$0xff]
        %v2824 = vld [vmem:[%s2821 + $0x10] sm:$0xff]
        %v2825 = vld [vmem:[%s2821 + $0x18] sm:$0xff]
        %v2826 = vld [vmem:[%s2821 + $0x20] sm:$0xff]
        %v2827 = vld [vmem:[%s2821 + $0x28] sm:$0xff]
        %v2828 = vld [vmem:[%s2821 + $0x30] sm:$0xff]
        %v2829 = vld [vmem:[%s2821 + $0x38] sm:$0xff]
        %v2830 = vadd.f32 %v1732, %v2812
        %v2831 = vadd.f32 %v1733, %v2813
        %v2832 = vadd.f32 %v1734, %v2814
        %v2833 = vadd.f32 %v1735, %v2815
        %v2834 = vsel %vm348, %v2830, 0.0
        %2835 = vadd.xlane.f32.xlu0 %v2834
        %v2836 = vpop.xlane.xlu0 %2835
        %v2837 = vsel %vm348, %v2831, 0.0
        %2838 = vadd.xlane.f32.xlu0 %v2837
        %v2839 = vpop.xlane.xlu0 %2838
        %v2840 = vsel %vm348, %v2832, 0.0
        %2841 = vadd.xlane.f32.xlu0 %v2840
        %v2842 = vpop.xlane.xlu0 %2841
        %v2843 = vsel %vm348, %v2833, 0.0
        %2844 = vadd.xlane.f32.xlu0 %v2843
        %v2845 = vpop.xlane.xlu0 %2844
        %v2846 = vmul.f32 %v2836, %v1458
        %v2847 = vmul.f32 %v2839, %v1458
        %v2848 = vmul.f32 %v2842, %v1458
        %v2849 = vmul.f32 %v2845, %v1458
        %v2850 = vsub.f32 %v2830, %v2846
        %v2851 = vsub.f32 %v2831, %v2847
        %v2852 = vsub.f32 %v2832, %v2848
        %v2853 = vsub.f32 %v2833, %v2849
        %v2854 = vmul.f32 %v2850, %v2850
        %v2855 = vmul.f32 %v2851, %v2851
        %v2856 = vmul.f32 %v2852, %v2852
        %v2857 = vmul.f32 %v2853, %v2853
        %v2858 = vsel %vm348, %v2854, 0.0
        %2859 = vadd.xlane.f32.xlu0 %v2858
        %v2860 = vpop.xlane.xlu0 %2859
        %v2861 = vsel %vm348, %v2855, 0.0
        %2862 = vadd.xlane.f32.xlu0 %v2861
        %v2863 = vpop.xlane.xlu0 %2862
        %v2864 = vsel %vm348, %v2856, 0.0
        %2865 = vadd.xlane.f32.xlu0 %v2864
        %v2866 = vpop.xlane.xlu0 %2865
        %v2867 = vsel %vm348, %v2857, 0.0
        %2868 = vadd.xlane.f32.xlu0 %v2867
        %v2869 = vpop.xlane.xlu0 %2868
        %v2870 = vmul.f32 %v2860, %v1458
        %v2871 = vmul.f32 %v2863, %v1458
        %v2872 = vmul.f32 %v2866, %v1458
        %v2873 = vmul.f32 %v2869, %v1458
        %v2874 = vadd.f32 %v2870, 1e-05
        %v2875 = vadd.f32 %v2871, 1e-05
        %v2876 = vadd.f32 %v2872, 1e-05
        %v2877 = vadd.f32 %v2873, 1e-05
        %v2878 = vrsqrt.pop %v2874
        %v2879 = vmul.f32 %v2878, %v2874
        %v2880 = vmul.f32 %v2879, %v2878
        %v2881 = vmul.f32 0.5, %v2880
        %v2882 = vsub.f32 1.5, %v2881
        %v2883 = vmul.f32 %v2878, %v2882
        %vm2884 = vweird.f32 %v2874
        %vm2885 = vweird.f32 %v2878
        %vm2886 = vmor %vm2884, %vm2885
        %v2887 = vsel %vm2886, %v2878, %v2883
        %v2888 = vrsqrt.pop %v2875
        %v2889 = vmul.f32 %v2888, %v2875
        %v2890 = vmul.f32 %v2889, %v2888
        %v2891 = vmul.f32 0.5, %v2890
        %v2892 = vsub.f32 1.5, %v2891
        %v2893 = vmul.f32 %v2888, %v2892
        %vm2894 = vweird.f32 %v2875
        %vm2895 = vweird.f32 %v2888
        %vm2896 = vmor %vm2894, %vm2895
        %v2897 = vsel %vm2896, %v2888, %v2893
        %v2898 = vrsqrt.pop %v2876
        %v2899 = vmul.f32 %v2898, %v2876
        %v2900 = vmul.f32 %v2899, %v2898
        %v2901 = vmul.f32 0.5, %v2900
        %v2902 = vsub.f32 1.5, %v2901
        %v2903 = vmul.f32 %v2898, %v2902
        %vm2904 = vweird.f32 %v2876
        %vm2905 = vweird.f32 %v2898
        %vm2906 = vmor %vm2904, %vm2905
        %v2907 = vsel %vm2906, %v2898, %v2903
        %v2908 = vrsqrt.pop %v2877
        %v2909 = vmul.f32 %v2908, %v2877
        %v2910 = vmul.f32 %v2909, %v2908
        %v2911 = vmul.f32 0.5, %v2910
        %v2912 = vsub.f32 1.5, %v2911
        %v2913 = vmul.f32 %v2908, %v2912
        %vm2914 = vweird.f32 %v2877
        %vm2915 = vweird.f32 %v2908
        %vm2916 = vmor %vm2914, %vm2915
        %v2917 = vsel %vm2916, %v2908, %v2913
        %v2918 = vmul.f32 %v2850, %v2887
        %v2919 = vmul.f32 %v2851, %v2897
        %v2920 = vmul.f32 %v2852, %v2907
        %v2921 = vmul.f32 %v2853, %v2917
        %v2922 = vperm.slane %v231, 4
        %v2923 = vmul.f32 %v2918, %v2922
        %v2924 = vmul.f32 %v2919, %v2922
        %v2925 = vmul.f32 %v2920, %v2922
        %v2926 = vmul.f32 %v2921, %v2922
        %v2927 = vperm.slane %v231, 5
        %v2928 = vadd.f32 %v2923, %v2927
        %v2929 = vadd.f32 %v2924, %v2927
        %v2930 = vadd.f32 %v2925, %v2927
        %v2931 = vadd.f32 %v2926, %v2927
        %v2932 = vperm.slane %v230, 3
        %v2934 = vsel %vm348, %v2928, 0
        %v2937 = vsel %vm348, %v2929, 0
        %v2940 = vsel %vm348, %v2930, 0
        %v2943 = vsel %vm348, %v2931, 0
        %2945 = vmatpush.msra.mxu0 0.0
        %2946 = vmatpush.msra.mxu0 0.0
        %2947 = vmatpush.msra.mxu0 0.0
        %2948 = vmatpush.msra.mxu0 0.0
        %2949 = vmatpush.msra.mxu0 0.0
        %2950 = vmatpush.msra.mxu0 0.0
        %2951 = vmatpush.msra.mxu0 0.0
        %2952 = vmatpush.msra.mxu0 0.0
        %2953 = vmatpush.msra.mxu0 0.0
        %2954 = vmatpush.msra.mxu0 0.0
        %2955 = vmatpush.msra.mxu0 0.0
        %2956 = vmatpush.msra.mxu0 0.0
        %2957 = vmatpush.msra.mxu0 %v2820
        %2958 = vmatpush.msra.mxu0 %v2819
        %2959 = vmatpush.msra.mxu0 %v2818
        %2960 = vmatpush.msra.mxu0 %v2817
        %2961 = vmatmul.f32.gmra.mxu0 %v2934
        %v2962 = vpop.f32.mrf.mxu0
        %v2963 = vadd.f32 %v2932, %v2962
        %2964 = vmatmul.f32.gmra.mxu0 %v2937
        %v2965 = vpop.f32.mrf.mxu0
        %v2966 = vadd.f32 %v2932, %v2965
        %2967 = vmatmul.f32.gmra.mxu0 %v2940
        %v2968 = vpop.f32.mrf.mxu0
        %v2969 = vadd.f32 %v2932, %v2968
        %2970 = vmatmul.f32.gmra.mxu0 %v2943
        %v2971 = vpop.f32.mrf.mxu0
        %v2972 = vadd.f32 %v2932, %v2971
        %2973 = vdwg.mxu0
        %v2974 = vmax.f32 %v2963, 0.0
        %v2975 = vmax.f32 %v2966, 0.0
        %v2976 = vmax.f32 %v2969, 0.0
        %v2977 = vmax.f32 %v2972, 0.0
        %v2978 = vperm.slane %v231, 3
        %v2980 = vsel %vm1592, %v2974, 0
        %v2983 = vsel %vm1592, %v2975, 0
        %v2986 = vsel %vm1592, %v2976, 0
        %v2989 = vsel %vm1592, %v2977, 0
        %2991 = vmatpush.msra.mxu0 0.0
        %2992 = vmatpush.msra.mxu0 0.0
        %2993 = vmatpush.msra.mxu0 0.0
        %2994 = vmatpush.msra.mxu0 0.0
        %2995 = vmatpush.msra.mxu0 0.0
        %2996 = vmatpush.msra.mxu0 0.0
        %2997 = vmatpush.msra.mxu0 0.0
        %2998 = vmatpush.msra.mxu0 0.0
        %2999 = vmatpush.msra.mxu0 %v2829
        %3000 = vmatpush.msra.mxu0 %v2828
        %3001 = vmatpush.msra.mxu0 %v2827
        %3002 = vmatpush.msra.mxu0 %v2826
        %3003 = vmatpush.msra.mxu0 %v2825
        %3004 = vmatpush.msra.mxu0 %v2824
        %3005 = vmatpush.msra.mxu0 %v2823
        %3006 = vmatpush.msra.mxu0 %v2822
        %3007 = vmatmul.f32.gmra.mxu0 %v2980
        %v3008 = vpop.f32.mrf.mxu0
        %v3009 = vadd.f32 %v2978, %v3008
        %3010 = vmatmul.f32.gmra.mxu0 %v2983
        %v3011 = vpop.f32.mrf.mxu0
        %v3012 = vadd.f32 %v2978, %v3011
        %3013 = vmatmul.f32.gmra.mxu0 %v2986
        %v3014 = vpop.f32.mrf.mxu0
        %v3015 = vadd.f32 %v2978, %v3014
        %3016 = vmatmul.f32.gmra.mxu0 %v2989
        %v3017 = vpop.f32.mrf.mxu0
        %v3018 = vadd.f32 %v2978, %v3017
        %3019 = vdwg.mxu0
        %v3020 = vadd.f32 %v2928, %v3009
        %v3021 = vadd.f32 %v2929, %v3012
        %v3022 = vadd.f32 %v2930, %v3015
        %v3023 = vadd.f32 %v2931, %v3018
        %v3024 = vsel %vm348, %v3020, 0.0
        %3025 = vadd.xlane.f32.xlu0 %v3024
        %v3026 = vpop.xlane.xlu0 %3025
        %v3027 = vsel %vm348, %v3021, 0.0
        %3028 = vadd.xlane.f32.xlu0 %v3027
        %v3029 = vpop.xlane.xlu0 %3028
        %v3030 = vsel %vm348, %v3022, 0.0
        %3031 = vadd.xlane.f32.xlu0 %v3030
        %v3032 = vpop.xlane.xlu0 %3031
        %v3033 = vsel %vm348, %v3023, 0.0
        %3034 = vadd.xlane.f32.xlu0 %v3033
        %v3035 = vpop.xlane.xlu0 %3034
        %v3036 = vmul.f32 %v3026, %v1458
        %v3037 = vmul.f32 %v3029, %v1458
        %v3038 = vmul.f32 %v3032, %v1458
        %v3039 = vmul.f32 %v3035, %v1458
        %v3040 = vsub.f32 %v3020, %v3036
        %v3041 = vsub.f32 %v3021, %v3037
        %v3042 = vsub.f32 %v3022, %v3038
        %v3043 = vsub.f32 %v3023, %v3039
        %v3044 = vmul.f32 %v3040, %v3040
        %v3045 = vmul.f32 %v3041, %v3041
        %v3046 = vmul.f32 %v3042, %v3042
        %v3047 = vmul.f32 %v3043, %v3043
        %v3048 = vsel %vm348, %v3044, 0.0
        %3049 = vadd.xlane.f32.xlu0 %v3048
        %v3050 = vpop.xlane.xlu0 %3049
        %v3051 = vsel %vm348, %v3045, 0.0
        %3052 = vadd.xlane.f32.xlu0 %v3051
        %v3053 = vpop.xlane.xlu0 %3052
        %v3054 = vsel %vm348, %v3046, 0.0
        %3055 = vadd.xlane.f32.xlu0 %v3054
        %v3056 = vpop.xlane.xlu0 %3055
        %v3057 = vsel %vm348, %v3047, 0.0
        %3058 = vadd.xlane.f32.xlu0 %v3057
        %v3059 = vpop.xlane.xlu0 %3058
        %v3060 = vmul.f32 %v3050, %v1458
        %v3061 = vmul.f32 %v3053, %v1458
        %v3062 = vmul.f32 %v3056, %v1458
        %v3063 = vmul.f32 %v3059, %v1458
        %v3064 = vadd.f32 %v3060, 1e-05
        %v3065 = vadd.f32 %v3061, 1e-05
        %v3066 = vadd.f32 %v3062, 1e-05
        %v3067 = vadd.f32 %v3063, 1e-05
        %v3068 = vrsqrt.pop %v3064
        %v3069 = vmul.f32 %v3068, %v3064
        %v3070 = vmul.f32 %v3069, %v3068
        %v3071 = vmul.f32 0.5, %v3070
        %v3072 = vsub.f32 1.5, %v3071
        %v3073 = vmul.f32 %v3068, %v3072
        %vm3074 = vweird.f32 %v3064
        %vm3075 = vweird.f32 %v3068
        %vm3076 = vmor %vm3074, %vm3075
        %v3077 = vsel %vm3076, %v3068, %v3073
        %v3078 = vrsqrt.pop %v3065
        %v3079 = vmul.f32 %v3078, %v3065
        %v3080 = vmul.f32 %v3079, %v3078
        %v3081 = vmul.f32 0.5, %v3080
        %v3082 = vsub.f32 1.5, %v3081
        %v3083 = vmul.f32 %v3078, %v3082
        %vm3084 = vweird.f32 %v3065
        %vm3085 = vweird.f32 %v3078
        %vm3086 = vmor %vm3084, %vm3085
        %v3087 = vsel %vm3086, %v3078, %v3083
        %v3088 = vrsqrt.pop %v3066
        %v3089 = vmul.f32 %v3088, %v3066
        %v3090 = vmul.f32 %v3089, %v3088
        %v3091 = vmul.f32 0.5, %v3090
        %v3092 = vsub.f32 1.5, %v3091
        %v3093 = vmul.f32 %v3088, %v3092
        %vm3094 = vweird.f32 %v3066
        %vm3095 = vweird.f32 %v3088
        %vm3096 = vmor %vm3094, %vm3095
        %v3097 = vsel %vm3096, %v3088, %v3093
        %v3098 = vrsqrt.pop %v3067
        %v3099 = vmul.f32 %v3098, %v3067
        %v3100 = vmul.f32 %v3099, %v3098
        %v3101 = vmul.f32 0.5, %v3100
        %v3102 = vsub.f32 1.5, %v3101
        %v3103 = vmul.f32 %v3098, %v3102
        %vm3104 = vweird.f32 %v3067
        %vm3105 = vweird.f32 %v3098
        %vm3106 = vmor %vm3104, %vm3105
        %v3107 = vsel %vm3106, %v3098, %v3103
        %v3108 = vmul.f32 %v3040, %v3077
        %v3109 = vmul.f32 %v3041, %v3087
        %v3110 = vmul.f32 %v3042, %v3097
        %v3111 = vmul.f32 %v3043, %v3107
        %v3112 = vperm.slane %v231, 6
        %v3113 = vmul.f32 %v3108, %v3112
        %v3114 = vmul.f32 %v3109, %v3112
        %v3115 = vmul.f32 %v3110, %v3112
        %v3116 = vmul.f32 %v3111, %v3112
        %v3117 = vperm.slane %v231, 7
        %v3118 = vadd.f32 %v3113, %v3117
        %v3119 = vadd.f32 %v3114, %v3117
        %v3120 = vadd.f32 %v3115, %v3117
        %v3121 = vadd.f32 %v3116, %v3117
        %3122 = vst.msk [vmem:[%s218] sm:$0xff] %vm348, %v3118
        %3123 = vst.msk [vmem:[%s218 + $0x8] sm:$0xff] %vm348, %v3119
        %3124 = vst.msk [vmem:[%s218 + $0x10] sm:$0xff] %vm348, %v3120
        %3125 = vst.msk [vmem:[%s218 + $0x18] sm:$0xff] %vm348, %v3121
        %s3126 = sand.u32 %s137, 1
        %s3127 = scalar_lea.sflag [#allocation3], %s3126
        %s3128 = sand.u32 %s137, 1
        %s3129 = smul.addr %s3128, 32
        %s3130 = scalar_lea.vmem [#allocation2], %s3129
        // Predicated region
        $region41: #{transformer_encoder_layer_global_local.1} parent=39 // pred_check
          %p3131 = pneg %p147
        $region42: #{transformer_encoder_layer_global_local.1} parent=39 // pred_check_branch
          %3133 = sbr.rel (%p3131) target = $region44
        $region43: #{transformer_encoder_layer_global_local.1} parent=39 // pred_region
          %s3134 = smul.u32 4, %s19
          %3136 = vsyncadd %s3127, 0
          %s3137 = smul.addr %s3134, 8
          %s3138 = scalar_lea.hbm %s5, %s3137
          %s3139 = sshll.u32 %s3130, 4
          %s3140 = int_to_ptr.vmem [resolvable:$true] %s3139
          %s3141 = sshll.u32 %s3138, 4
          %s3142 = int_to_ptr.hbm [resolvable:$true] %s3141
          %3147 = dma.vmem_to_hbm [thread:$0]  %s3140, 512, %s3142, %s3127, 128, 128, 8
        $region44: #{transformer_encoder_layer_global_local.1} parent=39 // pred_fallthru
          _
      $region40: #{transformer_encoder_layer_global_local.1} parent=5 // pred_fallthru
        _
      %p3148 = scmp.le.s32.totalorder 2, %s14
      // Predicated region
      $region45: #{transformer_encoder_layer_global_local.1} parent=5 // pred_check
        %p3149 = pneg %p3148
      $region46: #{transformer_encoder_layer_global_local.1} parent=5 // pred_check_branch
        %3151 = sbr.rel (%p3149) target = $region48
      $region47: #{transformer_encoder_layer_global_local.1} parent=5 // pred_region
        %s3152 = ssub.s32 %s14, 2
        // Predicated region
        $region49: #{transformer_encoder_layer_global_local.1} parent=47 // pred_check
          %p3153 = pneg %p153
        $region50: #{transformer_encoder_layer_global_local.1} parent=47 // pred_check_branch
          %3155 = sbr.rel (%p3153) target = $region52
        $region51: #{transformer_encoder_layer_global_local.1} parent=47 // pred_region
          %s3156 = sand.u32 %s138, 1
          %s3157 = scalar_lea.sflag [#allocation3], %s3156
          %s3158 = sand.u32 %s138, 1
          %s3159 = smul.addr %s3158, 32
          %s3160 = scalar_lea.vmem [#allocation2], %s3159
          %3162 = dma.done %s3157, 512
        $region52: #{transformer_encoder_layer_global_local.1} parent=47 // pred_fallthru
          _
      $region48: #{transformer_encoder_layer_global_local.1} parent=5 // pred_fallthru
        _
    $region6: #{transformer_encoder_layer_global_local.1} parent=1 // loop_footer
      %s18 = sadd.s32 1, %s14
    $region7: #{transformer_encoder_layer_global_local.1} parent=1 // loop_footer_branch
      %13 = sbr.rel target = $region3
    $region8: #{transformer_encoder_layer_global_local.1} parent=1 // loop_exit
      _
    %3163 = vsyncpa [#allocation3], 1
    %s3164 = scalar_lea.sflag [#allocation3], 1
    %3165 = vsyncpa %s3164, 1

</llo_original>
